<compile_context>
chip_gen: v7x
topology: tpu7x:2x2x1
jax: 0.10.0
libtpu: 0.0.40
codegen_flags: <defaults>
</compile_context>

<pallas_src>
import jax
import jax.numpy as jnp
from jax.experimental import pallas as pl
from jax.experimental.pallas import tpu as pltpu

_BT_MAX = 64  # batch tile (multiple of 8); per-step VMEM stays well under 32 MiB


# ----------------------------- fused kernel ---------------------------------

def _lenet_kernel(x_ref, t1_ref, b1_ref, t2_ref, b2_ref,
                  w1_ref, bf1_ref, w2_ref, bf2_ref, w3_ref, bf3_ref,
                  out_ref):
    f32 = jnp.float32
    bt = out_ref.shape[0]

    def dot(a, b):
        return jnp.dot(a, b, preferred_element_type=f32)

    # ---- in-kernel input repack: flat NCHW block (bt, 3*32*32) -> row stack
    #      s1[r*bt + b, ic*32 + w] = x[b, ic, r, w]
    rows = []
    for r in range(32):
        rows.append(jnp.concatenate(
            [x_ref[:, ic * 1024 + r * 32: ic * 1024 + r * 32 + 32]
             for ic in range(3)], axis=-1))                      # (bt, 96)
    s1 = jnp.concatenate(rows, axis=0)                           # (32*bt, 96)

    # ---- conv1 + bias + ReLU: 5 kh taps fused into one matmul (K = 480)
    lhs1 = jnp.concatenate([s1[kh * bt:(kh + 28) * bt, :] for kh in range(5)],
                           axis=-1)                              # (28*bt, 480)
    a1 = jnp.maximum(dot(lhs1, t1_ref[...]) + b1_ref[...], 0.0)  # (28*bt, 168)

    # ---- maxpool1 (2x2, stride 2): stride-1 W-max (stride-2 lane subsample is
    #      folded into the conv2 banded weights); H-max over aligned row blocks.
    m1w = jnp.maximum(a1[:, 0:167], a1[:, 1:168])                # (28*bt, 167)
    s2 = jnp.concatenate(
        [jnp.maximum(m1w[(2 * j) * bt:(2 * j + 1) * bt, :],
                     m1w[(2 * j + 1) * bt:(2 * j + 2) * bt, :])
         for j in range(14)], axis=0)                            # (14*bt, 167)

    # ---- conv2 + bias + ReLU: only the 10 needed rows, 5 taps fused (K = 835)
    lhs2 = jnp.concatenate([s2[kh * bt:(kh + 10) * bt, :] for kh in range(5)],
                           axis=-1)                              # (10*bt, 835)
    a2 = jnp.maximum(dot(lhs2, t2_ref[...]) + b2_ref[...], 0.0)  # (10*bt, 160)

    # ---- maxpool2 (2x2, stride 2) + torch-flatten: stride-2 lane subsample is
    #      folded into the fc1 weights; H-max over aligned row blocks.
    q2w = jnp.maximum(a2[:, 0:159], a2[:, 1:160])                # (10*bt, 159)
    lhs3 = jnp.concatenate(
        [jnp.maximum(q2w[(2 * ph) * bt:(2 * ph + 1) * bt, :],
                     q2w[(2 * ph + 1) * bt:(2 * ph + 2) * bt, :])
         for ph in range(5)], axis=-1)                           # (bt, 795)

    # ---- fc1 / fc2 / fc3 (fc3 padded to a lane-dense 128-wide output)
    h = jnp.maximum(dot(lhs3, w1_ref[...]) + bf1_ref[...], 0.0)  # (bt, 120)
    h = jnp.maximum(dot(h, w2_ref[...]) + bf2_ref[...], 0.0)     # (bt, 84)
    out_ref[...] = dot(h, w3_ref[...]) + bf3_ref[...]            # (bt, 128)


# ----------------------------- weight repacking ------------------------------

def prepare_kernel_params(p):
    """One-time repack of PyTorch-layout params into banded / lane-packed form."""
    f32 = jnp.float32
    w1 = p["conv1_w"].astype(f32)                      # (6, 3, 5, 5)
    w2 = p["conv2_w"].astype(f32)                      # (16, 6, 5, 5)
    kw = jnp.arange(5)

    # conv1 banded matrix: T1[kh*96 + ic*32 + w, oc*28 + ow] = w1[oc, ic, kh, w-ow]
    wi, ow = jnp.arange(32), jnp.arange(28)
    m1 = (wi[:, None, None] == ow[None, :, None] + kw[None, None, :]).astype(f32)
    t1 = jnp.einsum("wuk,oihk->hiwou", m1, w1).reshape(5, 96, 168).reshape(480, 168)
    b1 = jnp.repeat(p["conv1_b"].astype(f32), 28)[None, :]          # (1, 168)

    # conv2 banded matrix (stride-2 lane taps; rows stacked over kh):
    # T2[kh*167 + p, oc*10 + j] = sum_{ic,kw: p == ic*28 + 2j + 2kw} w2[oc, ic, kh, kw]
    pi, ji, ici = jnp.arange(167), jnp.arange(10), jnp.arange(6)
    tgt = ici[:, None, None] * 28 + 2 * ji[None, :, None] + 2 * kw[None, None, :]
    m2 = (pi[None, :, None, None] == tgt[:, None, :, :]).astype(f32)
    t2 = jnp.einsum("ipjk,oihk->hpoj", m2, w2).reshape(5, 167, 160).reshape(835, 160)
    b2 = jnp.repeat(p["conv2_b"].astype(f32), 10)[None, :]          # (1, 160)

    # fc1 folded over the 5 pooled rows (torch flatten order oc*25 + ph*5 + pw):
    # W1[ph*159 + p, n] = fc1_w[n, oc*25 + ph*5 + pw]  where  p == oc*10 + 2*pw
    f1 = p["fc1_w"].astype(f32).reshape(120, 16, 5, 5)
    qi, oci, pwi = jnp.arange(159), jnp.arange(16), jnp.arange(5)
    sel = (qi[:, None, None] == oci[None, :, None] * 10
           + 2 * pwi[None, None, :]).astype(f32)
    w1f = jnp.einsum("pow,nohw->hpn", sel, f1).reshape(795, 120)    # (795, 120)

    # fc3 padded to a lane-dense 128-wide output
    w3 = p["fc3_w"].astype(f32).T                                   # (84, 10)
    w3p = jnp.zeros((84, 128), f32).at[:, :10].set(w3)
    bf3p = jnp.zeros((1, 128), f32).at[:, :10].set(p["fc3_b"].astype(f32)[None, :])

    return dict(
        t1=t1, b1=b1, t2=t2, b2=b2,
        w1=w1f, bf1=p["fc1_b"].astype(f32)[None, :],
        w2=p["fc2_w"].astype(f32).T, bf2=p["fc2_b"].astype(f32)[None, :],
        w3=w3p, bf3=bf3p,
    )


# ----------------------------- forward pass ----------------------------------

@jax.jit
def net_forward(x_nchw, kp):
    """Net.forward on NCHW f32 input (B, 3, 32, 32) -> (B, 10)."""
    B = x_nchw.shape[0]
    bt = min(_BT_MAX, ((B + 7) // 8) * 8)
    bp = ((B + bt - 1) // bt) * bt

    # free reshape only -- the (ic, h, w) repack happens inside the kernel
    x_flat = x_nchw.astype(jnp.float32).reshape(B, 3 * 32 * 32)
    if bp != B:
        x_flat = jnp.pad(x_flat, ((0, bp - B), (0, 0)))

    def wspec(shape):
        return pl.BlockSpec(shape, lambda i: (0, 0))

    out = pl.pallas_call(
        _lenet_kernel,
        out_shape=jax.ShapeDtypeStruct((bp, 128), jnp.float32),
        grid=(bp // bt,),
        in_specs=[
            pl.BlockSpec((bt, 3072), lambda i: (i, 0)),
            wspec(kp["t1"].shape), wspec(kp["b1"].shape),
            wspec(kp["t2"].shape), wspec(kp["b2"].shape),
            wspec(kp["w1"].shape), wspec(kp["bf1"].shape),
            wspec(kp["w2"].shape), wspec(kp["bf2"].shape),
            wspec(kp["w3"].shape), wspec(kp["bf3"].shape),
        ],
        out_specs=pl.BlockSpec((bt, 128), lambda i: (i, 0)),
        compiler_params=pltpu.CompilerParams(
            dimension_semantics=("parallel",),
            vmem_limit_bytes=48 * 1024 * 1024),
    )(x_flat, kp["t1"], kp["b1"], kp["t2"], kp["b2"],
      kp["w1"], kp["bf1"], kp["w2"], kp["bf2"], kp["w3"], kp["bf3"])
    return out[:B, :10]


# ----------------------------- parameters & reference ------------------------

def _uniform(key, shape, bound):
    return jax.random.uniform(key, shape, jnp.float32, -bound, bound)


def init_params(seed=0):
    """Deterministic PyTorch-style U(-1/sqrt(fan_in), +) init, PyTorch layouts."""
    keys = jax.random.split(jax.random.PRNGKey(seed), 10)
    p = {}
    fan = 3 * 5 * 5
    p["conv1_w"] = _uniform(keys[0], (6, 3, 5, 5), fan ** -0.5)
    p["conv1_b"] = _uniform(keys[1], (6,), fan ** -0.5)
    fan = 6 * 5 * 5
    p["conv2_w"] = _uniform(keys[2], (16, 6, 5, 5), fan ** -0.5)
    p["conv2_b"] = _uniform(keys[3], (16,), fan ** -0.5)
    fan = 400
    p["fc1_w"] = _uniform(keys[4], (120, 400), fan ** -0.5)
    p["fc1_b"] = _uniform(keys[5], (120,), fan ** -0.5)
    fan = 120
    p["fc2_w"] = _uniform(keys[6], (84, 120), fan ** -0.5)
    p["fc2_b"] = _uniform(keys[7], (84,), fan ** -0.5)
    fan = 84
    p["fc3_w"] = _uniform(keys[8], (10, 84), fan ** -0.5)
    p["fc3_b"] = _uniform(keys[9], (10,), fan ** -0.5)
    return p


@jax.jit
def reference_forward(x, p):
    """Pure-JAX/XLA reference of Net.forward (for correctness checking)."""
    dn = ("NCHW", "OIHW", "NCHW")
    y = jax.lax.conv_general_dilated(x, p["conv1_w"], (1, 1), "VALID",
                                     dimension_numbers=dn)
    y = jnp.maximum(y + p["conv1_b"][None, :, None, None], 0.0)
    y = jax.lax.reduce_window(y, -jnp.inf, jax.lax.max,
                              (1, 1, 2, 2), (1, 1, 2, 2), "VALID")
    y = jax.lax.conv_general_dilated(y, p["conv2_w"], (1, 1), "VALID",
                                     dimension_numbers=dn)
    y = jnp.maximum(y + p["conv2_b"][None, :, None, None], 0.0)
    y = jax.lax.reduce_window(y, -jnp.inf, jax.lax.max,
                              (1, 1, 2, 2), (1, 1, 2, 2), "VALID")
    y = y.reshape(y.shape[0], 400)
    y = jnp.maximum(y @ p["fc1_w"].T + p["fc1_b"], 0.0)
    y = jnp.maximum(y @ p["fc2_w"].T + p["fc2_b"], 0.0)
    return y @ p["fc3_w"].T + p["fc3_b"]


if __name__ == "__main__":
    key = jax.random.PRNGKey(0)
    x = jax.random.normal(key, (2, 3, 32, 32), dtype=jnp.float32)
    params = init_params(seed=0)
    kparams = prepare_kernel_params(params)          # one-time weight repack

    out = net_forward(x, kparams)
    out = jax.block_until_ready(out)
    assert out.shape == (2, 10) and out.dtype == jnp.float32

    ref = jax.block_until_ready(reference_forward(x, params))
    max_err = float(jnp.max(jnp.abs(out - ref)))
    assert max_err < 2e-3, f"kernel/reference mismatch: {max_err}"
    print("KERNEL_OK")
</pallas_src>

<mosaic_0001>
module attributes {stable_mosaic.version = 11 : i64} {
  func.func @_lenet_kernel(%arg0: i32, %arg1: memref<8x3072xf32, #tpu.memory_space<vmem>>, %arg2: memref<480x168xf32, #tpu.memory_space<vmem>>, %arg3: memref<1x168xf32, #tpu.memory_space<vmem>>, %arg4: memref<835x160xf32, #tpu.memory_space<vmem>>, %arg5: memref<1x160xf32, #tpu.memory_space<vmem>>, %arg6: memref<795x120xf32, #tpu.memory_space<vmem>>, %arg7: memref<1x120xf32, #tpu.memory_space<vmem>>, %arg8: memref<120x84xf32, #tpu.memory_space<vmem>>, %arg9: memref<1x84xf32, #tpu.memory_space<vmem>>, %arg10: memref<84x128xf32, #tpu.memory_space<vmem>>, %arg11: memref<1x128xf32, #tpu.memory_space<vmem>>, %arg12: memref<8x128xf32, #tpu.memory_space<vmem>>) attributes {dimension_semantics = [#tpu.dimension_semantics<parallel>], iteration_bounds = array<i64: 1>, scalar_prefetch = 0 : i64, scratch_operands = 0 : i64, tpu.core_type = #tpu.core_type<tc>, window_params = [{transform_indices = @transform_0, window_bounds = array<i64: 8, 3072>}, {pipeline_mode = #tpu.pipeline_mode<synchronous>, transform_indices = @transform_1, window_bounds = array<i64: 480, 168>}, {pipeline_mode = #tpu.pipeline_mode<synchronous>, transform_indices = @transform_2, window_bounds = array<i64: 1, 168>}, {pipeline_mode = #tpu.pipeline_mode<synchronous>, transform_indices = @transform_3, window_bounds = array<i64: 835, 160>}, {pipeline_mode = #tpu.pipeline_mode<synchronous>, transform_indices = @transform_4, window_bounds = array<i64: 1, 160>}, {pipeline_mode = #tpu.pipeline_mode<synchronous>, transform_indices = @transform_5, window_bounds = array<i64: 795, 120>}, {pipeline_mode = #tpu.pipeline_mode<synchronous>, transform_indices = @transform_6, window_bounds = array<i64: 1, 120>}, {pipeline_mode = #tpu.pipeline_mode<synchronous>, transform_indices = @transform_7, window_bounds = array<i64: 120, 84>}, {pipeline_mode = #tpu.pipeline_mode<synchronous>, transform_indices = @transform_8, window_bounds = array<i64: 1, 84>}, {pipeline_mode = #tpu.pipeline_mode<synchronous>, transform_indices = @transform_9, window_bounds = array<i64: 84, 128>}, {pipeline_mode = #tpu.pipeline_mode<synchronous>, transform_indices = @transform_10, window_bounds = array<i64: 1, 128>}, {transform_indices = @transform_11, window_bounds = array<i64: 8, 128>}]} {
    %c0 = arith.constant 0 : index
    %c0_0 = arith.constant 0 : index
    %0 = vector.load %arg1[%c0, %c0_0] : memref<8x3072xf32, #tpu.memory_space<vmem>>, vector<8x32xf32>
    %c0_1 = arith.constant 0 : index
    %c1024 = arith.constant 1024 : index
    %1 = vector.load %arg1[%c0_1, %c1024] : memref<8x3072xf32, #tpu.memory_space<vmem>>, vector<8x32xf32>
    %c0_2 = arith.constant 0 : index
    %c2048 = arith.constant 2048 : index
    %2 = vector.load %arg1[%c0_2, %c2048] : memref<8x3072xf32, #tpu.memory_space<vmem>>, vector<8x32xf32>
    %3 = tpu.concatenate %0, %1, %2 in 1 : vector<8x32xf32>, vector<8x32xf32>, vector<8x32xf32> -> vector<8x96xf32>
    %c0_3 = arith.constant 0 : index
    %c32 = arith.constant 32 : index
    %4 = vector.load %arg1[%c0_3, %c32] : memref<8x3072xf32, #tpu.memory_space<vmem>>, vector<8x32xf32>
    %c0_4 = arith.constant 0 : index
    %c1056 = arith.constant 1056 : index
    %5 = vector.load %arg1[%c0_4, %c1056] : memref<8x3072xf32, #tpu.memory_space<vmem>>, vector<8x32xf32>
    %c0_5 = arith.constant 0 : index
    %c2080 = arith.constant 2080 : index
    %6 = vector.load %arg1[%c0_5, %c2080] : memref<8x3072xf32, #tpu.memory_space<vmem>>, vector<8x32xf32>
    %7 = tpu.concatenate %4, %5, %6 in 1 : vector<8x32xf32>, vector<8x32xf32>, vector<8x32xf32> -> vector<8x96xf32>
    %c0_6 = arith.constant 0 : index
    %c64 = arith.constant 64 : index
    %8 = vector.load %arg1[%c0_6, %c64] : memref<8x3072xf32, #tpu.memory_space<vmem>>, vector<8x32xf32>
    %c0_7 = arith.constant 0 : index
    %c1088 = arith.constant 1088 : index
    %9 = vector.load %arg1[%c0_7, %c1088] : memref<8x3072xf32, #tpu.memory_space<vmem>>, vector<8x32xf32>
    %c0_8 = arith.constant 0 : index
    %c2112 = arith.constant 2112 : index
    %10 = vector.load %arg1[%c0_8, %c2112] : memref<8x3072xf32, #tpu.memory_space<vmem>>, vector<8x32xf32>
    %11 = tpu.concatenate %8, %9, %10 in 1 : vector<8x32xf32>, vector<8x32xf32>, vector<8x32xf32> -> vector<8x96xf32>
    %c0_9 = arith.constant 0 : index
    %c96 = arith.constant 96 : index
    %12 = vector.load %arg1[%c0_9, %c96] : memref<8x3072xf32, #tpu.memory_space<vmem>>, vector<8x32xf32>
    %c0_10 = arith.constant 0 : index
    %c1120 = arith.constant 1120 : index
    %13 = vector.load %arg1[%c0_10, %c1120] : memref<8x3072xf32, #tpu.memory_space<vmem>>, vector<8x32xf32>
    %c0_11 = arith.constant 0 : index
    %c2144 = arith.constant 2144 : index
    %14 = vector.load %arg1[%c0_11, %c2144] : memref<8x3072xf32, #tpu.memory_space<vmem>>, vector<8x32xf32>
    %15 = tpu.concatenate %12, %13, %14 in 1 : vector<8x32xf32>, vector<8x32xf32>, vector<8x32xf32> -> vector<8x96xf32>
    %c0_12 = arith.constant 0 : index
    %c128 = arith.constant 128 : index
    %16 = vector.load %arg1[%c0_12, %c128] : memref<8x3072xf32, #tpu.memory_space<vmem>>, vector<8x32xf32>
    %c0_13 = arith.constant 0 : index
    %c1152 = arith.constant 1152 : index
    %17 = vector.load %arg1[%c0_13, %c1152] : memref<8x3072xf32, #tpu.memory_space<vmem>>, vector<8x32xf32>
    %c0_14 = arith.constant 0 : index
    %c2176 = arith.constant 2176 : index
    %18 = vector.load %arg1[%c0_14, %c2176] : memref<8x3072xf32, #tpu.memory_space<vmem>>, vector<8x32xf32>
    %19 = tpu.concatenate %16, %17, %18 in 1 : vector<8x32xf32>, vector<8x32xf32>, vector<8x32xf32> -> vector<8x96xf32>
    %c0_15 = arith.constant 0 : index
    %c160 = arith.constant 160 : index
    %20 = vector.load %arg1[%c0_15, %c160] : memref<8x3072xf32, #tpu.memory_space<vmem>>, vector<8x32xf32>
    %c0_16 = arith.constant 0 : index
    %c1184 = arith.constant 1184 : index
    %21 = vector.load %arg1[%c0_16, %c1184] : memref<8x3072xf32, #tpu.memory_space<vmem>>, vector<8x32xf32>
    %c0_17 = arith.constant 0 : index
    %c2208 = arith.constant 2208 : index
    %22 = vector.load %arg1[%c0_17, %c2208] : memref<8x3072xf32, #tpu.memory_space<vmem>>, vector<8x32xf32>
    %23 = tpu.concatenate %20, %21, %22 in 1 : vector<8x32xf32>, vector<8x32xf32>, vector<8x32xf32> -> vector<8x96xf32>
    %c0_18 = arith.constant 0 : index
    %c192 = arith.constant 192 : index
    %24 = vector.load %arg1[%c0_18, %c192] : memref<8x3072xf32, #tpu.memory_space<vmem>>, vector<8x32xf32>
    %c0_19 = arith.constant 0 : index
    %c1216 = arith.constant 1216 : index
    %25 = vector.load %arg1[%c0_19, %c1216] : memref<8x3072xf32, #tpu.memory_space<vmem>>, vector<8x32xf32>
    %c0_20 = arith.constant 0 : index
    %c2240 = arith.constant 2240 : index
    %26 = vector.load %arg1[%c0_20, %c2240] : memref<8x3072xf32, #tpu.memory_space<vmem>>, vector<8x32xf32>
    %27 = tpu.concatenate %24, %25, %26 in 1 : vector<8x32xf32>, vector<8x32xf32>, vector<8x32xf32> -> vector<8x96xf32>
    %c0_21 = arith.constant 0 : index
    %c224 = arith.constant 224 : index
    %28 = vector.load %arg1[%c0_21, %c224] : memref<8x3072xf32, #tpu.memory_space<vmem>>, vector<8x32xf32>
    %c0_22 = arith.constant 0 : index
    %c1248 = arith.constant 1248 : index
    %29 = vector.load %arg1[%c0_22, %c1248] : memref<8x3072xf32, #tpu.memory_space<vmem>>, vector<8x32xf32>
    %c0_23 = arith.constant 0 : index
    %c2272 = arith.constant 2272 : index
    %30 = vector.load %arg1[%c0_23, %c2272] : memref<8x3072xf32, #tpu.memory_space<vmem>>, vector<8x32xf32>
    %31 = tpu.concatenate %28, %29, %30 in 1 : vector<8x32xf32>, vector<8x32xf32>, vector<8x32xf32> -> vector<8x96xf32>
    %c0_24 = arith.constant 0 : index
    %c256 = arith.constant 256 : index
    %32 = vector.load %arg1[%c0_24, %c256] : memref<8x3072xf32, #tpu.memory_space<vmem>>, vector<8x32xf32>
    %c0_25 = arith.constant 0 : index
    %c1280 = arith.constant 1280 : index
    %33 = vector.load %arg1[%c0_25, %c1280] : memref<8x3072xf32, #tpu.memory_space<vmem>>, vector<8x32xf32>
    %c0_26 = arith.constant 0 : index
    %c2304 = arith.constant 2304 : index
    %34 = vector.load %arg1[%c0_26, %c2304] : memref<8x3072xf32, #tpu.memory_space<vmem>>, vector<8x32xf32>
    %35 = tpu.concatenate %32, %33, %34 in 1 : vector<8x32xf32>, vector<8x32xf32>, vector<8x32xf32> -> vector<8x96xf32>
    %c0_27 = arith.constant 0 : index
    %c288 = arith.constant 288 : index
    %36 = vector.load %arg1[%c0_27, %c288] : memref<8x3072xf32, #tpu.memory_space<vmem>>, vector<8x32xf32>
    %c0_28 = arith.constant 0 : index
    %c1312 = arith.constant 1312 : index
    %37 = vector.load %arg1[%c0_28, %c1312] : memref<8x3072xf32, #tpu.memory_space<vmem>>, vector<8x32xf32>
    %c0_29 = arith.constant 0 : index
    %c2336 = arith.constant 2336 : index
    %38 = vector.load %arg1[%c0_29, %c2336] : memref<8x3072xf32, #tpu.memory_space<vmem>>, vector<8x32xf32>
    %39 = tpu.concatenate %36, %37, %38 in 1 : vector<8x32xf32>, vector<8x32xf32>, vector<8x32xf32> -> vector<8x96xf32>
    %c0_30 = arith.constant 0 : index
    %c320 = arith.constant 320 : index
    %40 = vector.load %arg1[%c0_30, %c320] : memref<8x3072xf32, #tpu.memory_space<vmem>>, vector<8x32xf32>
    %c0_31 = arith.constant 0 : index
    %c1344 = arith.constant 1344 : index
    %41 = vector.load %arg1[%c0_31, %c1344] : memref<8x3072xf32, #tpu.memory_space<vmem>>, vector<8x32xf32>
    %c0_32 = arith.constant 0 : index
    %c2368 = arith.constant 2368 : index
    %42 = vector.load %arg1[%c0_32, %c2368] : memref<8x3072xf32, #tpu.memory_space<vmem>>, vector<8x32xf32>
    %43 = tpu.concatenate %40, %41, %42 in 1 : vector<8x32xf32>, vector<8x32xf32>, vector<8x32xf32> -> vector<8x96xf32>
    %c0_33 = arith.constant 0 : index
    %c352 = arith.constant 352 : index
    %44 = vector.load %arg1[%c0_33, %c352] : memref<8x3072xf32, #tpu.memory_space<vmem>>, vector<8x32xf32>
    %c0_34 = arith.constant 0 : index
    %c1376 = arith.constant 1376 : index
    %45 = vector.load %arg1[%c0_34, %c1376] : memref<8x3072xf32, #tpu.memory_space<vmem>>, vector<8x32xf32>
    %c0_35 = arith.constant 0 : index
    %c2400 = arith.constant 2400 : index
    %46 = vector.load %arg1[%c0_35, %c2400] : memref<8x3072xf32, #tpu.memory_space<vmem>>, vector<8x32xf32>
    %47 = tpu.concatenate %44, %45, %46 in 1 : vector<8x32xf32>, vector<8x32xf32>, vector<8x32xf32> -> vector<8x96xf32>
    %c0_36 = arith.constant 0 : index
    %c384 = arith.constant 384 : index
    %48 = vector.load %arg1[%c0_36, %c384] : memref<8x3072xf32, #tpu.memory_space<vmem>>, vector<8x32xf32>
    %c0_37 = arith.constant 0 : index
    %c1408 = arith.constant 1408 : index
    %49 = vector.load %arg1[%c0_37, %c1408] : memref<8x3072xf32, #tpu.memory_space<vmem>>, vector<8x32xf32>
    %c0_38 = arith.constant 0 : index
    %c2432 = arith.constant 2432 : index
    %50 = vector.load %arg1[%c0_38, %c2432] : memref<8x3072xf32, #tpu.memory_space<vmem>>, vector<8x32xf32>
    %51 = tpu.concatenate %48, %49, %50 in 1 : vector<8x32xf32>, vector<8x32xf32>, vector<8x32xf32> -> vector<8x96xf32>
    %c0_39 = arith.constant 0 : index
    %c416 = arith.constant 416 : index
    %52 = vector.load %arg1[%c0_39, %c416] : memref<8x3072xf32, #tpu.memory_space<vmem>>, vector<8x32xf32>
    %c0_40 = arith.constant 0 : index
    %c1440 = arith.constant 1440 : index
    %53 = vector.load %arg1[%c0_40, %c1440] : memref<8x3072xf32, #tpu.memory_space<vmem>>, vector<8x32xf32>
    %c0_41 = arith.constant 0 : index
    %c2464 = arith.constant 2464 : index
    %54 = vector.load %arg1[%c0_41, %c2464] : memref<8x3072xf32, #tpu.memory_space<vmem>>, vector<8x32xf32>
    %55 = tpu.concatenate %52, %53, %54 in 1 : vector<8x32xf32>, vector<8x32xf32>, vector<8x32xf32> -> vector<8x96xf32>
    %c0_42 = arith.constant 0 : index
    %c448 = arith.constant 448 : index
    %56 = vector.load %arg1[%c0_42, %c448] : memref<8x3072xf32, #tpu.memory_space<vmem>>, vector<8x32xf32>
    %c0_43 = arith.constant 0 : index
    %c1472 = arith.constant 1472 : index
    %57 = vector.load %arg1[%c0_43, %c1472] : memref<8x3072xf32, #tpu.memory_space<vmem>>, vector<8x32xf32>
    %c0_44 = arith.constant 0 : index
    %c2496 = arith.constant 2496 : index
    %58 = vector.load %arg1[%c0_44, %c2496] : memref<8x3072xf32, #tpu.memory_space<vmem>>, vector<8x32xf32>
    %59 = tpu.concatenate %56, %57, %58 in 1 : vector<8x32xf32>, vector<8x32xf32>, vector<8x32xf32> -> vector<8x96xf32>
    %c0_45 = arith.constant 0 : index
    %c480 = arith.constant 480 : index
    %60 = vector.load %arg1[%c0_45, %c480] : memref<8x3072xf32, #tpu.memory_space<vmem>>, vector<8x32xf32>
    %c0_46 = arith.constant 0 : index
    %c1504 = arith.constant 1504 : index
    %61 = vector.load %arg1[%c0_46, %c1504] : memref<8x3072xf32, #tpu.memory_space<vmem>>, vector<8x32xf32>
    %c0_47 = arith.constant 0 : index
    %c2528 = arith.constant 2528 : index
    %62 = vector.load %arg1[%c0_47, %c2528] : memref<8x3072xf32, #tpu.memory_space<vmem>>, vector<8x32xf32>
    %63 = tpu.concatenate %60, %61, %62 in 1 : vector<8x32xf32>, vector<8x32xf32>, vector<8x32xf32> -> vector<8x96xf32>
    %c0_48 = arith.constant 0 : index
    %c512 = arith.constant 512 : index
    %64 = vector.load %arg1[%c0_48, %c512] : memref<8x3072xf32, #tpu.memory_space<vmem>>, vector<8x32xf32>
    %c0_49 = arith.constant 0 : index
    %c1536 = arith.constant 1536 : index
    %65 = vector.load %arg1[%c0_49, %c1536] : memref<8x3072xf32, #tpu.memory_space<vmem>>, vector<8x32xf32>
    %c0_50 = arith.constant 0 : index
    %c2560 = arith.constant 2560 : index
    %66 = vector.load %arg1[%c0_50, %c2560] : memref<8x3072xf32, #tpu.memory_space<vmem>>, vector<8x32xf32>
    %67 = tpu.concatenate %64, %65, %66 in 1 : vector<8x32xf32>, vector<8x32xf32>, vector<8x32xf32> -> vector<8x96xf32>
    %c0_51 = arith.constant 0 : index
    %c544 = arith.constant 544 : index
    %68 = vector.load %arg1[%c0_51, %c544] : memref<8x3072xf32, #tpu.memory_space<vmem>>, vector<8x32xf32>
    %c0_52 = arith.constant 0 : index
    %c1568 = arith.constant 1568 : index
    %69 = vector.load %arg1[%c0_52, %c1568] : memref<8x3072xf32, #tpu.memory_space<vmem>>, vector<8x32xf32>
    %c0_53 = arith.constant 0 : index
    %c2592 = arith.constant 2592 : index
    %70 = vector.load %arg1[%c0_53, %c2592] : memref<8x3072xf32, #tpu.memory_space<vmem>>, vector<8x32xf32>
    %71 = tpu.concatenate %68, %69, %70 in 1 : vector<8x32xf32>, vector<8x32xf32>, vector<8x32xf32> -> vector<8x96xf32>
    %c0_54 = arith.constant 0 : index
    %c576 = arith.constant 576 : index
    %72 = vector.load %arg1[%c0_54, %c576] : memref<8x3072xf32, #tpu.memory_space<vmem>>, vector<8x32xf32>
    %c0_55 = arith.constant 0 : index
    %c1600 = arith.constant 1600 : index
    %73 = vector.load %arg1[%c0_55, %c1600] : memref<8x3072xf32, #tpu.memory_space<vmem>>, vector<8x32xf32>
    %c0_56 = arith.constant 0 : index
    %c2624 = arith.constant 2624 : index
    %74 = vector.load %arg1[%c0_56, %c2624] : memref<8x3072xf32, #tpu.memory_space<vmem>>, vector<8x32xf32>
    %75 = tpu.concatenate %72, %73, %74 in 1 : vector<8x32xf32>, vector<8x32xf32>, vector<8x32xf32> -> vector<8x96xf32>
    %c0_57 = arith.constant 0 : index
    %c608 = arith.constant 608 : index
    %76 = vector.load %arg1[%c0_57, %c608] : memref<8x3072xf32, #tpu.memory_space<vmem>>, vector<8x32xf32>
    %c0_58 = arith.constant 0 : index
    %c1632 = arith.constant 1632 : index
    %77 = vector.load %arg1[%c0_58, %c1632] : memref<8x3072xf32, #tpu.memory_space<vmem>>, vector<8x32xf32>
    %c0_59 = arith.constant 0 : index
    %c2656 = arith.constant 2656 : index
    %78 = vector.load %arg1[%c0_59, %c2656] : memref<8x3072xf32, #tpu.memory_space<vmem>>, vector<8x32xf32>
    %79 = tpu.concatenate %76, %77, %78 in 1 : vector<8x32xf32>, vector<8x32xf32>, vector<8x32xf32> -> vector<8x96xf32>
    %c0_60 = arith.constant 0 : index
    %c640 = arith.constant 640 : index
    %80 = vector.load %arg1[%c0_60, %c640] : memref<8x3072xf32, #tpu.memory_space<vmem>>, vector<8x32xf32>
    %c0_61 = arith.constant 0 : index
    %c1664 = arith.constant 1664 : index
    %81 = vector.load %arg1[%c0_61, %c1664] : memref<8x3072xf32, #tpu.memory_space<vmem>>, vector<8x32xf32>
    %c0_62 = arith.constant 0 : index
    %c2688 = arith.constant 2688 : index
    %82 = vector.load %arg1[%c0_62, %c2688] : memref<8x3072xf32, #tpu.memory_space<vmem>>, vector<8x32xf32>
    %83 = tpu.concatenate %80, %81, %82 in 1 : vector<8x32xf32>, vector<8x32xf32>, vector<8x32xf32> -> vector<8x96xf32>
    %c0_63 = arith.constant 0 : index
    %c672 = arith.constant 672 : index
    %84 = vector.load %arg1[%c0_63, %c672] : memref<8x3072xf32, #tpu.memory_space<vmem>>, vector<8x32xf32>
    %c0_64 = arith.constant 0 : index
    %c1696 = arith.constant 1696 : index
    %85 = vector.load %arg1[%c0_64, %c1696] : memref<8x3072xf32, #tpu.memory_space<vmem>>, vector<8x32xf32>
    %c0_65 = arith.constant 0 : index
    %c2720 = arith.constant 2720 : index
    %86 = vector.load %arg1[%c0_65, %c2720] : memref<8x3072xf32, #tpu.memory_space<vmem>>, vector<8x32xf32>
    %87 = tpu.concatenate %84, %85, %86 in 1 : vector<8x32xf32>, vector<8x32xf32>, vector<8x32xf32> -> vector<8x96xf32>
    %c0_66 = arith.constant 0 : index
    %c704 = arith.constant 704 : index
    %88 = vector.load %arg1[%c0_66, %c704] : memref<8x3072xf32, #tpu.memory_space<vmem>>, vector<8x32xf32>
    %c0_67 = arith.constant 0 : index
    %c1728 = arith.constant 1728 : index
    %89 = vector.load %arg1[%c0_67, %c1728] : memref<8x3072xf32, #tpu.memory_space<vmem>>, vector<8x32xf32>
    %c0_68 = arith.constant 0 : index
    %c2752 = arith.constant 2752 : index
    %90 = vector.load %arg1[%c0_68, %c2752] : memref<8x3072xf32, #tpu.memory_space<vmem>>, vector<8x32xf32>
    %91 = tpu.concatenate %88, %89, %90 in 1 : vector<8x32xf32>, vector<8x32xf32>, vector<8x32xf32> -> vector<8x96xf32>
    %c0_69 = arith.constant 0 : index
    %c736 = arith.constant 736 : index
    %92 = vector.load %arg1[%c0_69, %c736] : memref<8x3072xf32, #tpu.memory_space<vmem>>, vector<8x32xf32>
    %c0_70 = arith.constant 0 : index
    %c1760 = arith.constant 1760 : index
    %93 = vector.load %arg1[%c0_70, %c1760] : memref<8x3072xf32, #tpu.memory_space<vmem>>, vector<8x32xf32>
    %c0_71 = arith.constant 0 : index
    %c2784 = arith.constant 2784 : index
    %94 = vector.load %arg1[%c0_71, %c2784] : memref<8x3072xf32, #tpu.memory_space<vmem>>, vector<8x32xf32>
    %95 = tpu.concatenate %92, %93, %94 in 1 : vector<8x32xf32>, vector<8x32xf32>, vector<8x32xf32> -> vector<8x96xf32>
    %c0_72 = arith.constant 0 : index
    %c768 = arith.constant 768 : index
    %96 = vector.load %arg1[%c0_72, %c768] : memref<8x3072xf32, #tpu.memory_space<vmem>>, vector<8x32xf32>
    %c0_73 = arith.constant 0 : index
    %c1792 = arith.constant 1792 : index
    %97 = vector.load %arg1[%c0_73, %c1792] : memref<8x3072xf32, #tpu.memory_space<vmem>>, vector<8x32xf32>
    %c0_74 = arith.constant 0 : index
    %c2816 = arith.constant 2816 : index
    %98 = vector.load %arg1[%c0_74, %c2816] : memref<8x3072xf32, #tpu.memory_space<vmem>>, vector<8x32xf32>
    %99 = tpu.concatenate %96, %97, %98 in 1 : vector<8x32xf32>, vector<8x32xf32>, vector<8x32xf32> -> vector<8x96xf32>
    %c0_75 = arith.constant 0 : index
    %c800 = arith.constant 800 : index
    %100 = vector.load %arg1[%c0_75, %c800] : memref<8x3072xf32, #tpu.memory_space<vmem>>, vector<8x32xf32>
    %c0_76 = arith.constant 0 : index
    %c1824 = arith.constant 1824 : index
    %101 = vector.load %arg1[%c0_76, %c1824] : memref<8x3072xf32, #tpu.memory_space<vmem>>, vector<8x32xf32>
    %c0_77 = arith.constant 0 : index
    %c2848 = arith.constant 2848 : index
    %102 = vector.load %arg1[%c0_77, %c2848] : memref<8x3072xf32, #tpu.memory_space<vmem>>, vector<8x32xf32>
    %103 = tpu.concatenate %100, %101, %102 in 1 : vector<8x32xf32>, vector<8x32xf32>, vector<8x32xf32> -> vector<8x96xf32>
    %c0_78 = arith.constant 0 : index
    %c832 = arith.constant 832 : index
    %104 = vector.load %arg1[%c0_78, %c832] : memref<8x3072xf32, #tpu.memory_space<vmem>>, vector<8x32xf32>
    %c0_79 = arith.constant 0 : index
    %c1856 = arith.constant 1856 : index
    %105 = vector.load %arg1[%c0_79, %c1856] : memref<8x3072xf32, #tpu.memory_space<vmem>>, vector<8x32xf32>
    %c0_80 = arith.constant 0 : index
    %c2880 = arith.constant 2880 : index
    %106 = vector.load %arg1[%c0_80, %c2880] : memref<8x3072xf32, #tpu.memory_space<vmem>>, vector<8x32xf32>
    %107 = tpu.concatenate %104, %105, %106 in 1 : vector<8x32xf32>, vector<8x32xf32>, vector<8x32xf32> -> vector<8x96xf32>
    %c0_81 = arith.constant 0 : index
    %c864 = arith.constant 864 : index
    %108 = vector.load %arg1[%c0_81, %c864] : memref<8x3072xf32, #tpu.memory_space<vmem>>, vector<8x32xf32>
    %c0_82 = arith.constant 0 : index
    %c1888 = arith.constant 1888 : index
    %109 = vector.load %arg1[%c0_82, %c1888] : memref<8x3072xf32, #tpu.memory_space<vmem>>, vector<8x32xf32>
    %c0_83 = arith.constant 0 : index
    %c2912 = arith.constant 2912 : index
    %110 = vector.load %arg1[%c0_83, %c2912] : memref<8x3072xf32, #tpu.memory_space<vmem>>, vector<8x32xf32>
    %111 = tpu.concatenate %108, %109, %110 in 1 : vector<8x32xf32>, vector<8x32xf32>, vector<8x32xf32> -> vector<8x96xf32>
    %c0_84 = arith.constant 0 : index
    %c896 = arith.constant 896 : index
    %112 = vector.load %arg1[%c0_84, %c896] : memref<8x3072xf32, #tpu.memory_space<vmem>>, vector<8x32xf32>
    %c0_85 = arith.constant 0 : index
    %c1920 = arith.constant 1920 : index
    %113 = vector.load %arg1[%c0_85, %c1920] : memref<8x3072xf32, #tpu.memory_space<vmem>>, vector<8x32xf32>
    %c0_86 = arith.constant 0 : index
    %c2944 = arith.constant 2944 : index
    %114 = vector.load %arg1[%c0_86, %c2944] : memref<8x3072xf32, #tpu.memory_space<vmem>>, vector<8x32xf32>
    %115 = tpu.concatenate %112, %113, %114 in 1 : vector<8x32xf32>, vector<8x32xf32>, vector<8x32xf32> -> vector<8x96xf32>
    %c0_87 = arith.constant 0 : index
    %c928 = arith.constant 928 : index
    %116 = vector.load %arg1[%c0_87, %c928] : memref<8x3072xf32, #tpu.memory_space<vmem>>, vector<8x32xf32>
    %c0_88 = arith.constant 0 : index
    %c1952 = arith.constant 1952 : index
    %117 = vector.load %arg1[%c0_88, %c1952] : memref<8x3072xf32, #tpu.memory_space<vmem>>, vector<8x32xf32>
    %c0_89 = arith.constant 0 : index
    %c2976 = arith.constant 2976 : index
    %118 = vector.load %arg1[%c0_89, %c2976] : memref<8x3072xf32, #tpu.memory_space<vmem>>, vector<8x32xf32>
    %119 = tpu.concatenate %116, %117, %118 in 1 : vector<8x32xf32>, vector<8x32xf32>, vector<8x32xf32> -> vector<8x96xf32>
    %c0_90 = arith.constant 0 : index
    %c960 = arith.constant 960 : index
    %120 = vector.load %arg1[%c0_90, %c960] : memref<8x3072xf32, #tpu.memory_space<vmem>>, vector<8x32xf32>
    %c0_91 = arith.constant 0 : index
    %c1984 = arith.constant 1984 : index
    %121 = vector.load %arg1[%c0_91, %c1984] : memref<8x3072xf32, #tpu.memory_space<vmem>>, vector<8x32xf32>
    %c0_92 = arith.constant 0 : index
    %c3008 = arith.constant 3008 : index
    %122 = vector.load %arg1[%c0_92, %c3008] : memref<8x3072xf32, #tpu.memory_space<vmem>>, vector<8x32xf32>
    %123 = tpu.concatenate %120, %121, %122 in 1 : vector<8x32xf32>, vector<8x32xf32>, vector<8x32xf32> -> vector<8x96xf32>
    %c0_93 = arith.constant 0 : index
    %c992 = arith.constant 992 : index
    %124 = vector.load %arg1[%c0_93, %c992] : memref<8x3072xf32, #tpu.memory_space<vmem>>, vector<8x32xf32>
    %c0_94 = arith.constant 0 : index
    %c2016 = arith.constant 2016 : index
    %125 = vector.load %arg1[%c0_94, %c2016] : memref<8x3072xf32, #tpu.memory_space<vmem>>, vector<8x32xf32>
    %c0_95 = arith.constant 0 : index
    %c3040 = arith.constant 3040 : index
    %126 = vector.load %arg1[%c0_95, %c3040] : memref<8x3072xf32, #tpu.memory_space<vmem>>, vector<8x32xf32>
    %127 = tpu.concatenate %124, %125, %126 in 1 : vector<8x32xf32>, vector<8x32xf32>, vector<8x32xf32> -> vector<8x96xf32>
    %128 = tpu.concatenate %3, %7, %11, %15, %19, %23, %27, %31, %35, %39, %43, %47, %51, %55, %59, %63 in 0 : vector<8x96xf32>, vector<8x96xf32>, vector<8x96xf32>, vector<8x96xf32>, vector<8x96xf32>, vector<8x96xf32>, vector<8x96xf32>, vector<8x96xf32>, vector<8x96xf32>, vector<8x96xf32>, vector<8x96xf32>, vector<8x96xf32>, vector<8x96xf32>, vector<8x96xf32>, vector<8x96xf32>, vector<8x96xf32> -> vector<128x96xf32>
    %129 = tpu.concatenate %67, %71, %75, %79, %83, %87, %91, %95, %99, %103, %107, %111, %115, %119, %123, %127 in 0 : vector<8x96xf32>, vector<8x96xf32>, vector<8x96xf32>, vector<8x96xf32>, vector<8x96xf32>, vector<8x96xf32>, vector<8x96xf32>, vector<8x96xf32>, vector<8x96xf32>, vector<8x96xf32>, vector<8x96xf32>, vector<8x96xf32>, vector<8x96xf32>, vector<8x96xf32>, vector<8x96xf32>, vector<8x96xf32> -> vector<128x96xf32>
    %130 = tpu.concatenate %128, %129 in 0 : vector<128x96xf32>, vector<128x96xf32> -> vector<256x96xf32>
    %131 = vector.extract_strided_slice %130 {offsets = [0, 0], sizes = [224, 96], strides = [1, 1]} : vector<256x96xf32> to vector<224x96xf32>
    %132 = vector.extract_strided_slice %130 {offsets = [8, 0], sizes = [224, 96], strides = [1, 1]} : vector<256x96xf32> to vector<224x96xf32>
    %133 = vector.extract_strided_slice %130 {offsets = [16, 0], sizes = [224, 96], strides = [1, 1]} : vector<256x96xf32> to vector<224x96xf32>
    %134 = vector.extract_strided_slice %130 {offsets = [24, 0], sizes = [224, 96], strides = [1, 1]} : vector<256x96xf32> to vector<224x96xf32>
    %135 = vector.extract_strided_slice %130 {offsets = [32, 0], sizes = [224, 96], strides = [1, 1]} : vector<256x96xf32> to vector<224x96xf32>
    %136 = tpu.concatenate %131, %132, %133, %134, %135 in 1 : vector<224x96xf32>, vector<224x96xf32>, vector<224x96xf32>, vector<224x96xf32>, vector<224x96xf32> -> vector<224x480xf32>
    %c0_96 = arith.constant 0 : index
    %c0_97 = arith.constant 0 : index
    %137 = vector.load %arg2[%c0_96, %c0_97] : memref<480x168xf32, #tpu.memory_space<vmem>>, vector<480x168xf32>
    %cst = arith.constant dense<0.000000e+00> : vector<224x168xf32>
    %138 = tpu.matmul %136, %137, %cst {dimension_numbers = #tpu.dot_dimension_numbers<[1], [0], [0], [1], [0, 0, 1, 1], [], []>} : vector<224x480xf32>, vector<480x168xf32>, vector<224x168xf32> -> vector<224x168xf32>
    %c0_98 = arith.constant 0 : index
    %c0_99 = arith.constant 0 : index
    %139 = vector.load %arg3[%c0_98, %c0_99] : memref<1x168xf32, #tpu.memory_space<vmem>>, vector<1x168xf32>
    %140 = vector.broadcast %139 : vector<1x168xf32> to vector<224x168xf32>
    %141 = arith.addf %138, %140 : vector<224x168xf32>
    %cst_100 = arith.constant 0.000000e+00 : f32
    %142 = vector.broadcast %cst_100 : f32 to vector<224x168xf32>
    %143 = arith.maximumf %141, %142 : vector<224x168xf32>
    %144 = vector.extract_strided_slice %143 {offsets = [0, 0], sizes = [224, 167], strides = [1, 1]} : vector<224x168xf32> to vector<224x167xf32>
    %145 = vector.extract_strided_slice %143 {offsets = [0, 1], sizes = [224, 167], strides = [1, 1]} : vector<224x168xf32> to vector<224x167xf32>
    %146 = arith.maximumf %144, %145 : vector<224x167xf32>
    %147 = vector.extract_strided_slice %146 {offsets = [0, 0], sizes = [8, 167], strides = [1, 1]} : vector<224x167xf32> to vector<8x167xf32>
    %148 = vector.extract_strided_slice %146 {offsets = [8, 0], sizes = [8, 167], strides = [1, 1]} : vector<224x167xf32> to vector<8x167xf32>
    %149 = arith.maximumf %147, %148 : vector<8x167xf32>
    %150 = vector.extract_strided_slice %146 {offsets = [16, 0], sizes = [8, 167], strides = [1, 1]} : vector<224x167xf32> to vector<8x167xf32>
    %151 = vector.extract_strided_slice %146 {offsets = [24, 0], sizes = [8, 167], strides = [1, 1]} : vector<224x167xf32> to vector<8x167xf32>
    %152 = arith.maximumf %150, %151 : vector<8x167xf32>
    %153 = vector.extract_strided_slice %146 {offsets = [32, 0], sizes = [8, 167], strides = [1, 1]} : vector<224x167xf32> to vector<8x167xf32>
    %154 = vector.extract_strided_slice %146 {offsets = [40, 0], sizes = [8, 167], strides = [1, 1]} : vector<224x167xf32> to vector<8x167xf32>
    %155 = arith.maximumf %153, %154 : vector<8x167xf32>
    %156 = vector.extract_strided_slice %146 {offsets = [48, 0], sizes = [8, 167], strides = [1, 1]} : vector<224x167xf32> to vector<8x167xf32>
    %157 = vector.extract_strided_slice %146 {offsets = [56, 0], sizes = [8, 167], strides = [1, 1]} : vector<224x167xf32> to vector<8x167xf32>
    %158 = arith.maximumf %156, %157 : vector<8x167xf32>
    %159 = vector.extract_strided_slice %146 {offsets = [64, 0], sizes = [8, 167], strides = [1, 1]} : vector<224x167xf32> to vector<8x167xf32>
    %160 = vector.extract_strided_slice %146 {offsets = [72, 0], sizes = [8, 167], strides = [1, 1]} : vector<224x167xf32> to vector<8x167xf32>
    %161 = arith.maximumf %159, %160 : vector<8x167xf32>
    %162 = vector.extract_strided_slice %146 {offsets = [80, 0], sizes = [8, 167], strides = [1, 1]} : vector<224x167xf32> to vector<8x167xf32>
    %163 = vector.extract_strided_slice %146 {offsets = [88, 0], sizes = [8, 167], strides = [1, 1]} : vector<224x167xf32> to vector<8x167xf32>
    %164 = arith.maximumf %162, %163 : vector<8x167xf32>
    %165 = vector.extract_strided_slice %146 {offsets = [96, 0], sizes = [8, 167], strides = [1, 1]} : vector<224x167xf32> to vector<8x167xf32>
    %166 = vector.extract_strided_slice %146 {offsets = [104, 0], sizes = [8, 167], strides = [1, 1]} : vector<224x167xf32> to vector<8x167xf32>
    %167 = arith.maximumf %165, %166 : vector<8x167xf32>
    %168 = vector.extract_strided_slice %146 {offsets = [112, 0], sizes = [8, 167], strides = [1, 1]} : vector<224x167xf32> to vector<8x167xf32>
    %169 = vector.extract_strided_slice %146 {offsets = [120, 0], sizes = [8, 167], strides = [1, 1]} : vector<224x167xf32> to vector<8x167xf32>
    %170 = arith.maximumf %168, %169 : vector<8x167xf32>
    %171 = vector.extract_strided_slice %146 {offsets = [128, 0], sizes = [8, 167], strides = [1, 1]} : vector<224x167xf32> to vector<8x167xf32>
    %172 = vector.extract_strided_slice %146 {offsets = [136, 0], sizes = [8, 167], strides = [1, 1]} : vector<224x167xf32> to vector<8x167xf32>
    %173 = arith.maximumf %171, %172 : vector<8x167xf32>
    %174 = vector.extract_strided_slice %146 {offsets = [144, 0], sizes = [8, 167], strides = [1, 1]} : vector<224x167xf32> to vector<8x167xf32>
    %175 = vector.extract_strided_slice %146 {offsets = [152, 0], sizes = [8, 167], strides = [1, 1]} : vector<224x167xf32> to vector<8x167xf32>
    %176 = arith.maximumf %174, %175 : vector<8x167xf32>
    %177 = vector.extract_strided_slice %146 {offsets = [160, 0], sizes = [8, 167], strides = [1, 1]} : vector<224x167xf32> to vector<8x167xf32>
    %178 = vector.extract_strided_slice %146 {offsets = [168, 0], sizes = [8, 167], strides = [1, 1]} : vector<224x167xf32> to vector<8x167xf32>
    %179 = arith.maximumf %177, %178 : vector<8x167xf32>
    %180 = vector.extract_strided_slice %146 {offsets = [176, 0], sizes = [8, 167], strides = [1, 1]} : vector<224x167xf32> to vector<8x167xf32>
    %181 = vector.extract_strided_slice %146 {offsets = [184, 0], sizes = [8, 167], strides = [1, 1]} : vector<224x167xf32> to vector<8x167xf32>
    %182 = arith.maximumf %180, %181 : vector<8x167xf32>
    %183 = vector.extract_strided_slice %146 {offsets = [192, 0], sizes = [8, 167], strides = [1, 1]} : vector<224x167xf32> to vector<8x167xf32>
    %184 = vector.extract_strided_slice %146 {offsets = [200, 0], sizes = [8, 167], strides = [1, 1]} : vector<224x167xf32> to vector<8x167xf32>
    %185 = arith.maximumf %183, %184 : vector<8x167xf32>
    %186 = vector.extract_strided_slice %146 {offsets = [208, 0], sizes = [8, 167], strides = [1, 1]} : vector<224x167xf32> to vector<8x167xf32>
    %187 = vector.extract_strided_slice %146 {offsets = [216, 0], sizes = [8, 167], strides = [1, 1]} : vector<224x167xf32> to vector<8x167xf32>
    %188 = arith.maximumf %186, %187 : vector<8x167xf32>
    %189 = tpu.concatenate %149, %152, %155, %158, %161, %164, %167, %170, %173, %176, %179, %182, %185, %188 in 0 : vector<8x167xf32>, vector<8x167xf32>, vector<8x167xf32>, vector<8x167xf32>, vector<8x167xf32>, vector<8x167xf32>, vector<8x167xf32>, vector<8x167xf32>, vector<8x167xf32>, vector<8x167xf32>, vector<8x167xf32>, vector<8x167xf32>, vector<8x167xf32>, vector<8x167xf32> -> vector<112x167xf32>
    %190 = vector.extract_strided_slice %189 {offsets = [0, 0], sizes = [80, 167], strides = [1, 1]} : vector<112x167xf32> to vector<80x167xf32>
    %191 = vector.extract_strided_slice %189 {offsets = [8, 0], sizes = [80, 167], strides = [1, 1]} : vector<112x167xf32> to vector<80x167xf32>
    %192 = vector.extract_strided_slice %189 {offsets = [16, 0], sizes = [80, 167], strides = [1, 1]} : vector<112x167xf32> to vector<80x167xf32>
    %193 = vector.extract_strided_slice %189 {offsets = [24, 0], sizes = [80, 167], strides = [1, 1]} : vector<112x167xf32> to vector<80x167xf32>
    %194 = vector.extract_strided_slice %189 {offsets = [32, 0], sizes = [80, 167], strides = [1, 1]} : vector<112x167xf32> to vector<80x167xf32>
    %195 = tpu.concatenate %190, %191, %192, %193, %194 in 1 : vector<80x167xf32>, vector<80x167xf32>, vector<80x167xf32>, vector<80x167xf32>, vector<80x167xf32> -> vector<80x835xf32>
    %c0_101 = arith.constant 0 : index
    %c0_102 = arith.constant 0 : index
    %196 = vector.load %arg4[%c0_101, %c0_102] : memref<835x160xf32, #tpu.memory_space<vmem>>, vector<835x160xf32>
    %cst_103 = arith.constant dense<0.000000e+00> : vector<80x160xf32>
    %197 = tpu.matmul %195, %196, %cst_103 {dimension_numbers = #tpu.dot_dimension_numbers<[1], [0], [0], [1], [0, 0, 1, 1], [], []>} : vector<80x835xf32>, vector<835x160xf32>, vector<80x160xf32> -> vector<80x160xf32>
    %c0_104 = arith.constant 0 : index
    %c0_105 = arith.constant 0 : index
    %198 = vector.load %arg5[%c0_104, %c0_105] : memref<1x160xf32, #tpu.memory_space<vmem>>, vector<1x160xf32>
    %199 = vector.broadcast %198 : vector<1x160xf32> to vector<80x160xf32>
    %200 = arith.addf %197, %199 : vector<80x160xf32>
    %cst_106 = arith.constant 0.000000e+00 : f32
    %201 = vector.broadcast %cst_106 : f32 to vector<80x160xf32>
    %202 = arith.maximumf %200, %201 : vector<80x160xf32>
    %203 = vector.extract_strided_slice %202 {offsets = [0, 0], sizes = [80, 159], strides = [1, 1]} : vector<80x160xf32> to vector<80x159xf32>
    %204 = vector.extract_strided_slice %202 {offsets = [0, 1], sizes = [80, 159], strides = [1, 1]} : vector<80x160xf32> to vector<80x159xf32>
    %205 = arith.maximumf %203, %204 : vector<80x159xf32>
    %206 = vector.extract_strided_slice %205 {offsets = [0, 0], sizes = [8, 159], strides = [1, 1]} : vector<80x159xf32> to vector<8x159xf32>
    %207 = vector.extract_strided_slice %205 {offsets = [8, 0], sizes = [8, 159], strides = [1, 1]} : vector<80x159xf32> to vector<8x159xf32>
    %208 = arith.maximumf %206, %207 : vector<8x159xf32>
    %209 = vector.extract_strided_slice %205 {offsets = [16, 0], sizes = [8, 159], strides = [1, 1]} : vector<80x159xf32> to vector<8x159xf32>
    %210 = vector.extract_strided_slice %205 {offsets = [24, 0], sizes = [8, 159], strides = [1, 1]} : vector<80x159xf32> to vector<8x159xf32>
    %211 = arith.maximumf %209, %210 : vector<8x159xf32>
    %212 = vector.extract_strided_slice %205 {offsets = [32, 0], sizes = [8, 159], strides = [1, 1]} : vector<80x159xf32> to vector<8x159xf32>
    %213 = vector.extract_strided_slice %205 {offsets = [40, 0], sizes = [8, 159], strides = [1, 1]} : vector<80x159xf32> to vector<8x159xf32>
    %214 = arith.maximumf %212, %213 : vector<8x159xf32>
    %215 = vector.extract_strided_slice %205 {offsets = [48, 0], sizes = [8, 159], strides = [1, 1]} : vector<80x159xf32> to vector<8x159xf32>
    %216 = vector.extract_strided_slice %205 {offsets = [56, 0], sizes = [8, 159], strides = [1, 1]} : vector<80x159xf32> to vector<8x159xf32>
    %217 = arith.maximumf %215, %216 : vector<8x159xf32>
    %218 = vector.extract_strided_slice %205 {offsets = [64, 0], sizes = [8, 159], strides = [1, 1]} : vector<80x159xf32> to vector<8x159xf32>
    %219 = vector.extract_strided_slice %205 {offsets = [72, 0], sizes = [8, 159], strides = [1, 1]} : vector<80x159xf32> to vector<8x159xf32>
    %220 = arith.maximumf %218, %219 : vector<8x159xf32>
    %221 = tpu.concatenate %208, %211, %214, %217, %220 in 1 : vector<8x159xf32>, vector<8x159xf32>, vector<8x159xf32>, vector<8x159xf32>, vector<8x159xf32> -> vector<8x795xf32>
    %c0_107 = arith.constant 0 : index
    %c0_108 = arith.constant 0 : index
    %222 = vector.load %arg6[%c0_107, %c0_108] : memref<795x120xf32, #tpu.memory_space<vmem>>, vector<795x120xf32>
    %cst_109 = arith.constant dense<0.000000e+00> : vector<8x120xf32>
    %223 = tpu.matmul %221, %222, %cst_109 {dimension_numbers = #tpu.dot_dimension_numbers<[1], [0], [0], [1], [0, 0, 1, 1], [], []>} : vector<8x795xf32>, vector<795x120xf32>, vector<8x120xf32> -> vector<8x120xf32>
    %c0_110 = arith.constant 0 : index
    %c0_111 = arith.constant 0 : index
    %224 = vector.load %arg7[%c0_110, %c0_111] : memref<1x120xf32, #tpu.memory_space<vmem>>, vector<1x120xf32>
    %225 = vector.broadcast %224 : vector<1x120xf32> to vector<8x120xf32>
    %226 = arith.addf %223, %225 : vector<8x120xf32>
    %cst_112 = arith.constant 0.000000e+00 : f32
    %227 = vector.broadcast %cst_112 : f32 to vector<8x120xf32>
    %228 = arith.maximumf %226, %227 : vector<8x120xf32>
    %c0_113 = arith.constant 0 : index
    %c0_114 = arith.constant 0 : index
    %229 = vector.load %arg8[%c0_113, %c0_114] : memref<120x84xf32, #tpu.memory_space<vmem>>, vector<120x84xf32>
    %cst_115 = arith.constant dense<0.000000e+00> : vector<8x84xf32>
    %230 = tpu.matmul %228, %229, %cst_115 {dimension_numbers = #tpu.dot_dimension_numbers<[1], [0], [0], [1], [0, 0, 1, 1], [], []>} : vector<8x120xf32>, vector<120x84xf32>, vector<8x84xf32> -> vector<8x84xf32>
    %c0_116 = arith.constant 0 : index
    %c0_117 = arith.constant 0 : index
    %231 = vector.load %arg9[%c0_116, %c0_117] : memref<1x84xf32, #tpu.memory_space<vmem>>, vector<1x84xf32>
    %232 = vector.broadcast %231 : vector<1x84xf32> to vector<8x84xf32>
    %233 = arith.addf %230, %232 : vector<8x84xf32>
    %cst_118 = arith.constant 0.000000e+00 : f32
    %234 = vector.broadcast %cst_118 : f32 to vector<8x84xf32>
    %235 = arith.maximumf %233, %234 : vector<8x84xf32>
    %c0_119 = arith.constant 0 : index
    %c0_120 = arith.constant 0 : index
    %236 = vector.load %arg10[%c0_119, %c0_120] : memref<84x128xf32, #tpu.memory_space<vmem>>, vector<84x128xf32>
    %cst_121 = arith.constant dense<0.000000e+00> : vector<8x128xf32>
    %237 = tpu.matmul %235, %236, %cst_121 {dimension_numbers = #tpu.dot_dimension_numbers<[1], [0], [0], [1], [0, 0, 1, 1], [], []>} : vector<8x84xf32>, vector<84x128xf32>, vector<8x128xf32> -> vector<8x128xf32>
    %c0_122 = arith.constant 0 : index
    %c0_123 = arith.constant 0 : index
    %238 = vector.load %arg11[%c0_122, %c0_123] : memref<1x128xf32, #tpu.memory_space<vmem>>, vector<1x128xf32>
    %239 = vector.broadcast %238 : vector<1x128xf32> to vector<8x128xf32>
    %240 = arith.addf %237, %239 : vector<8x128xf32>
    %c0_124 = arith.constant 0 : index
    %c0_125 = arith.constant 0 : index
    %241 = vector.load %arg12[%c0_124, %c0_125] : memref<8x128xf32, #tpu.memory_space<vmem>>, vector<8x128xf32>
    tpu.vector_store %arg12[%c0_124, %c0_125], %240 {strides = array<i32>} : memref<8x128xf32, #tpu.memory_space<vmem>>, vector<8x128xf32>,
    return
  }
  func.func @transform_0(%arg0: i32) -> (i32, i32) {
    %c0_i32 = arith.constant 0 : i32
    %c0_i32_0 = arith.constant 0 : i32
    return %arg0, %c0_i32 : i32, i32
  }
  func.func @transform_1(%arg0: i32) -> (i32, i32) {
    %c0_i32 = arith.constant 0 : i32
    %c0_i32_0 = arith.constant 0 : i32
    %c0_i32_1 = arith.constant 0 : i32
    return %c0_i32, %c0_i32_0 : i32, i32
  }
  func.func @transform_2(%arg0: i32) -> (i32, i32) {
    %c0_i32 = arith.constant 0 : i32
    %c0_i32_0 = arith.constant 0 : i32
    %c0_i32_1 = arith.constant 0 : i32
    return %c0_i32, %c0_i32_0 : i32, i32
  }
  func.func @transform_3(%arg0: i32) -> (i32, i32) {
    %c0_i32 = arith.constant 0 : i32
    %c0_i32_0 = arith.constant 0 : i32
    %c0_i32_1 = arith.constant 0 : i32
    return %c0_i32, %c0_i32_0 : i32, i32
  }
  func.func @transform_4(%arg0: i32) -> (i32, i32) {
    %c0_i32 = arith.constant 0 : i32
    %c0_i32_0 = arith.constant 0 : i32
    %c0_i32_1 = arith.constant 0 : i32
    return %c0_i32, %c0_i32_0 : i32, i32
  }
  func.func @transform_5(%arg0: i32) -> (i32, i32) {
    %c0_i32 = arith.constant 0 : i32
    %c0_i32_0 = arith.constant 0 : i32
    %c0_i32_1 = arith.constant 0 : i32
    return %c0_i32, %c0_i32_0 : i32, i32
  }
  func.func @transform_6(%arg0: i32) -> (i32, i32) {
    %c0_i32 = arith.constant 0 : i32
    %c0_i32_0 = arith.constant 0 : i32
    %c0_i32_1 = arith.constant 0 : i32
    return %c0_i32, %c0_i32_0 : i32, i32
  }
  func.func @transform_7(%arg0: i32) -> (i32, i32) {
    %c0_i32 = arith.constant 0 : i32
    %c0_i32_0 = arith.constant 0 : i32
    %c0_i32_1 = arith.constant 0 : i32
    return %c0_i32, %c0_i32_0 : i32, i32
  }
  func.func @transform_8(%arg0: i32) -> (i32, i32) {
    %c0_i32 = arith.constant 0 : i32
    %c0_i32_0 = arith.constant 0 : i32
    %c0_i32_1 = arith.constant 0 : i32
    return %c0_i32, %c0_i32_0 : i32, i32
  }
  func.func @transform_9(%arg0: i32) -> (i32, i32) {
    %c0_i32 = arith.constant 0 : i32
    %c0_i32_0 = arith.constant 0 : i32
    %c0_i32_1 = arith.constant 0 : i32
    return %c0_i32, %c0_i32_0 : i32, i32
  }
  func.func @transform_10(%arg0: i32) -> (i32, i32) {
    %c0_i32 = arith.constant 0 : i32
    %c0_i32_0 = arith.constant 0 : i32
    %c0_i32_1 = arith.constant 0 : i32
    return %c0_i32, %c0_i32_0 : i32, i32
  }
  func.func @transform_11(%arg0: i32) -> (i32, i32) {
    %c0_i32 = arith.constant 0 : i32
    %c0_i32_0 = arith.constant 0 : i32
    return %arg0, %c0_i32 : i32, i32
  }
}

</mosaic_0001>

<llo_original>
// kernel: net_forward.1
$region0: #{net_forward.1}
  #allocation0 [shape = 'u32[]', space=smem, size = 0x4, offset = 0x4, fixed_abs, tag = 'smem constant byte address 0x4 - core index']
  #allocation1 [shape = 'u32[144,128]{1,0:T(1,128)}', space=vmem, size = 0x12000, scoped, tag = 'internal scratch']
  %s0 = inlined_call_operand.vmem [shape: f32[8,3072], index: 0, kind: input, shape index: {}]
  %s1 = inlined_call_operand.vmem [shape: f32[480,168], index: 1, kind: input, shape index: {}]
  %s2 = inlined_call_operand.vmem [shape: f32[1,168], index: 2, kind: input, shape index: {}]
  %s3 = inlined_call_operand.vmem [shape: f32[835,160], index: 3, kind: input, shape index: {}]
  %s4 = inlined_call_operand.vmem [shape: f32[1,160], index: 4, kind: input, shape index: {}]
  %s5 = inlined_call_operand.vmem [shape: f32[795,120], index: 5, kind: input, shape index: {}]
  %s6 = inlined_call_operand.vmem [shape: f32[1,120], index: 6, kind: input, shape index: {}]
  %s7 = inlined_call_operand.vmem [shape: f32[120,84], index: 7, kind: input, shape index: {}]
  %s8 = inlined_call_operand.vmem [shape: f32[1,84], index: 8, kind: input, shape index: {}]
  %s9 = inlined_call_operand.vmem [shape: f32[84,128], index: 9, kind: input, shape index: {}]
  %s10 = inlined_call_operand.vmem [shape: f32[1,128], index: 10, kind: input, shape index: {}]
  %s11 = inlined_call_operand.vmem [shape: f32[8,128], index: 11, kind: output, shape index: {}]
  %s12 = sld [smem:[#allocation0]]
  $region54: #{net_forward.1} parent=0
    _
  %s14 = ssub.s32 1, %s12
  %s15 = scalar_select 0, %s14, %s12
  // Predicated region
  $region2: #{net_forward.1} parent=0 // pred_check
    _
  $region3: #{net_forward.1} parent=0 // pred_check_branch
    %17 = sbr.rel (0) target = $region5
  $region4: #{net_forward.1} parent=0 // pred_region
    _
  $region5: #{net_forward.1} parent=0 // pred_fallthru
    _
  // Predicated region
  $region6: #{net_forward.1} parent=0 // pred_check
    _
  $region7: #{net_forward.1} parent=0 // pred_check_branch
    %19 = sbr.rel (0) target = $region9
  $region8: #{net_forward.1} parent=0 // pred_region
    _
  $region9: #{net_forward.1} parent=0 // pred_fallthru
    _
  // Predicated region
  $region10: #{net_forward.1} parent=0 // pred_check
    _
  $region11: #{net_forward.1} parent=0 // pred_check_branch
    %21 = sbr.rel (0) target = $region13
  $region12: #{net_forward.1} parent=0 // pred_region
    _
  $region13: #{net_forward.1} parent=0 // pred_fallthru
    _
  // Predicated region
  $region14: #{net_forward.1} parent=0 // pred_check
    _
  $region15: #{net_forward.1} parent=0 // pred_check_branch
    %23 = sbr.rel (0) target = $region17
  $region16: #{net_forward.1} parent=0 // pred_region
    _
  $region17: #{net_forward.1} parent=0 // pred_fallthru
    _
  // Predicated region
  $region18: #{net_forward.1} parent=0 // pred_check
    _
  $region19: #{net_forward.1} parent=0 // pred_check_branch
    %25 = sbr.rel (0) target = $region21
  $region20: #{net_forward.1} parent=0 // pred_region
    _
  $region21: #{net_forward.1} parent=0 // pred_fallthru
    _
  // Predicated region
  $region22: #{net_forward.1} parent=0 // pred_check
    _
  $region23: #{net_forward.1} parent=0 // pred_check_branch
    %27 = sbr.rel (0) target = $region25
  $region24: #{net_forward.1} parent=0 // pred_region
    _
  $region25: #{net_forward.1} parent=0 // pred_fallthru
    _
  // Predicated region
  $region26: #{net_forward.1} parent=0 // pred_check
    _
  $region27: #{net_forward.1} parent=0 // pred_check_branch
    %29 = sbr.rel (0) target = $region29
  $region28: #{net_forward.1} parent=0 // pred_region
    _
  $region29: #{net_forward.1} parent=0 // pred_fallthru
    _
  // Predicated region
  $region30: #{net_forward.1} parent=0 // pred_check
    _
  $region31: #{net_forward.1} parent=0 // pred_check_branch
    %31 = sbr.rel (0) target = $region33
  $region32: #{net_forward.1} parent=0 // pred_region
    _
  $region33: #{net_forward.1} parent=0 // pred_fallthru
    _
  // Predicated region
  $region34: #{net_forward.1} parent=0 // pred_check
    _
  $region35: #{net_forward.1} parent=0 // pred_check_branch
    %33 = sbr.rel (0) target = $region37
  $region36: #{net_forward.1} parent=0 // pred_region
    _
  $region37: #{net_forward.1} parent=0 // pred_fallthru
    _
  // Predicated region
  $region38: #{net_forward.1} parent=0 // pred_check
    _
  $region39: #{net_forward.1} parent=0 // pred_check_branch
    %35 = sbr.rel (0) target = $region41
  $region40: #{net_forward.1} parent=0 // pred_region
    _
  $region41: #{net_forward.1} parent=0 // pred_fallthru
    _
  // Predicated region
  $region42: #{net_forward.1} parent=0 // pred_check
    _
  $region43: #{net_forward.1} parent=0 // pred_check_branch
    %37 = sbr.rel (0) target = $region45
  $region44: #{net_forward.1} parent=0 // pred_region
    _
  $region45: #{net_forward.1} parent=0 // pred_fallthru
    _
  %v38 = vld [vmem:[%s0] sm:$0xff]
  %v39 = vld [vmem:[%s0 + $0x40] sm:$0xff]
  %v40 = vld [vmem:[%s0 + $0x80] sm:$0xff]
  %42 = vrot.lane.b32.xlu0 %v39, 32
  %v43 = vpop.permute.xlu0 %42
  %46 = vrot.lane.b32.xlu0 %v40, 64
  %v47 = vpop.permute.xlu0 %46
  %vm49 = vcmask 261120
  %v50 = vsel %vm49, %v38, %v43
  %vm51 = vcmask 523264
  %v52 = vsel %vm51, %v50, %v47
  %54 = vrot.lane.b32.xlu0 %v38, 96
  %v55 = vpop.permute.xlu0 %54
  %57 = vrot.lane.b32.xlu0 %v40, 32
  %v58 = vpop.permute.xlu0 %57
  %v60 = vsel %vm49, %v55, %v39
  %v61 = vsel %vm51, %v60, %v58
  %62 = vrot.lane.b32.xlu0 %v38, 64
  %v63 = vpop.permute.xlu0 %62
  %65 = vrot.lane.b32.xlu0 %v39, 96
  %v66 = vpop.permute.xlu0 %65
  %v68 = vsel %vm49, %v63, %v66
  %v69 = vsel %vm51, %v68, %v40
  %70 = vrot.lane.b32.xlu0 %v38, 32
  %v71 = vpop.permute.xlu0 %70
  %73 = vrot.lane.b32.xlu0 %v39, 64
  %v74 = vpop.permute.xlu0 %73
  %76 = vrot.lane.b32.xlu0 %v40, 96
  %v77 = vpop.permute.xlu0 %76
  %v79 = vsel %vm49, %v71, %v74
  %v80 = vsel %vm51, %v79, %v77
  %v81 = vld [vmem:[%s0 + $0x8] sm:$0xff]
  %v82 = vld [vmem:[%s0 + $0x48] sm:$0xff]
  %v83 = vld [vmem:[%s0 + $0x88] sm:$0xff]
  %85 = vrot.lane.b32.xlu0 %v82, 32
  %v86 = vpop.permute.xlu0 %85
  %89 = vrot.lane.b32.xlu0 %v83, 64
  %v90 = vpop.permute.xlu0 %89
  %v92 = vsel %vm49, %v81, %v86
  %v93 = vsel %vm51, %v92, %v90
  %95 = vrot.lane.b32.xlu0 %v81, 96
  %v96 = vpop.permute.xlu0 %95
  %98 = vrot.lane.b32.xlu0 %v83, 32
  %v99 = vpop.permute.xlu0 %98
  %v101 = vsel %vm49, %v96, %v82
  %v102 = vsel %vm51, %v101, %v99
  %103 = vrot.lane.b32.xlu0 %v81, 64
  %v104 = vpop.permute.xlu0 %103
  %106 = vrot.lane.b32.xlu0 %v82, 96
  %v107 = vpop.permute.xlu0 %106
  %v109 = vsel %vm49, %v104, %v107
  %v110 = vsel %vm51, %v109, %v83
  %111 = vrot.lane.b32.xlu0 %v81, 32
  %v112 = vpop.permute.xlu0 %111
  %114 = vrot.lane.b32.xlu0 %v82, 64
  %v115 = vpop.permute.xlu0 %114
  %117 = vrot.lane.b32.xlu0 %v83, 96
  %v118 = vpop.permute.xlu0 %117
  %v120 = vsel %vm49, %v112, %v115
  %v121 = vsel %vm51, %v120, %v118
  %v122 = vld [vmem:[%s0 + $0x10] sm:$0xff]
  %v123 = vld [vmem:[%s0 + $0x50] sm:$0xff]
  %v124 = vld [vmem:[%s0 + $0x90] sm:$0xff]
  %126 = vrot.lane.b32.xlu0 %v123, 32
  %v127 = vpop.permute.xlu0 %126
  %130 = vrot.lane.b32.xlu0 %v124, 64
  %v131 = vpop.permute.xlu0 %130
  %v133 = vsel %vm49, %v122, %v127
  %v134 = vsel %vm51, %v133, %v131
  %136 = vrot.lane.b32.xlu0 %v122, 96
  %v137 = vpop.permute.xlu0 %136
  %139 = vrot.lane.b32.xlu0 %v124, 32
  %v140 = vpop.permute.xlu0 %139
  %v142 = vsel %vm49, %v137, %v123
  %v143 = vsel %vm51, %v142, %v140
  %144 = vrot.lane.b32.xlu0 %v122, 64
  %v145 = vpop.permute.xlu0 %144
  %147 = vrot.lane.b32.xlu0 %v123, 96
  %v148 = vpop.permute.xlu0 %147
  %v150 = vsel %vm49, %v145, %v148
  %v151 = vsel %vm51, %v150, %v124
  %152 = vrot.lane.b32.xlu0 %v122, 32
  %v153 = vpop.permute.xlu0 %152
  %155 = vrot.lane.b32.xlu0 %v123, 64
  %v156 = vpop.permute.xlu0 %155
  %158 = vrot.lane.b32.xlu0 %v124, 96
  %v159 = vpop.permute.xlu0 %158
  %v161 = vsel %vm49, %v153, %v156
  %v162 = vsel %vm51, %v161, %v159
  %v163 = vld [vmem:[%s0 + $0x18] sm:$0xff]
  %v164 = vld [vmem:[%s0 + $0x58] sm:$0xff]
  %v165 = vld [vmem:[%s0 + $0x98] sm:$0xff]
  %167 = vrot.lane.b32.xlu0 %v164, 32
  %v168 = vpop.permute.xlu0 %167
  %171 = vrot.lane.b32.xlu0 %v165, 64
  %v172 = vpop.permute.xlu0 %171
  %v174 = vsel %vm49, %v163, %v168
  %v175 = vsel %vm51, %v174, %v172
  %177 = vrot.lane.b32.xlu0 %v163, 96
  %v178 = vpop.permute.xlu0 %177
  %180 = vrot.lane.b32.xlu0 %v165, 32
  %v181 = vpop.permute.xlu0 %180
  %v183 = vsel %vm49, %v178, %v164
  %v184 = vsel %vm51, %v183, %v181
  %185 = vrot.lane.b32.xlu0 %v163, 64
  %v186 = vpop.permute.xlu0 %185
  %188 = vrot.lane.b32.xlu0 %v164, 96
  %v189 = vpop.permute.xlu0 %188
  %v191 = vsel %vm49, %v186, %v189
  %v192 = vsel %vm51, %v191, %v165
  %193 = vrot.lane.b32.xlu0 %v163, 32
  %v194 = vpop.permute.xlu0 %193
  %196 = vrot.lane.b32.xlu0 %v164, 64
  %v197 = vpop.permute.xlu0 %196
  %199 = vrot.lane.b32.xlu0 %v165, 96
  %v200 = vpop.permute.xlu0 %199
  %v202 = vsel %vm49, %v194, %v197
  %v203 = vsel %vm51, %v202, %v200
  %v204 = vld [vmem:[%s0 + $0x20] sm:$0xff]
  %v205 = vld [vmem:[%s0 + $0x60] sm:$0xff]
  %v206 = vld [vmem:[%s0 + $0xa0] sm:$0xff]
  %208 = vrot.lane.b32.xlu0 %v205, 32
  %v209 = vpop.permute.xlu0 %208
  %212 = vrot.lane.b32.xlu0 %v206, 64
  %v213 = vpop.permute.xlu0 %212
  %v215 = vsel %vm49, %v204, %v209
  %v216 = vsel %vm51, %v215, %v213
  %218 = vrot.lane.b32.xlu0 %v204, 96
  %v219 = vpop.permute.xlu0 %218
  %221 = vrot.lane.b32.xlu0 %v206, 32
  %v222 = vpop.permute.xlu0 %221
  %v224 = vsel %vm49, %v219, %v205
  %v225 = vsel %vm51, %v224, %v222
  %226 = vrot.lane.b32.xlu0 %v204, 64
  %v227 = vpop.permute.xlu0 %226
  %229 = vrot.lane.b32.xlu0 %v205, 96
  %v230 = vpop.permute.xlu0 %229
  %v232 = vsel %vm49, %v227, %v230
  %v233 = vsel %vm51, %v232, %v206
  %234 = vrot.lane.b32.xlu0 %v204, 32
  %v235 = vpop.permute.xlu0 %234
  %237 = vrot.lane.b32.xlu0 %v205, 64
  %v238 = vpop.permute.xlu0 %237
  %240 = vrot.lane.b32.xlu0 %v206, 96
  %v241 = vpop.permute.xlu0 %240
  %v243 = vsel %vm49, %v235, %v238
  %v244 = vsel %vm51, %v243, %v241
  %v245 = vld [vmem:[%s0 + $0x28] sm:$0xff]
  %v246 = vld [vmem:[%s0 + $0x68] sm:$0xff]
  %v247 = vld [vmem:[%s0 + $0xa8] sm:$0xff]
  %249 = vrot.lane.b32.xlu0 %v246, 32
  %v250 = vpop.permute.xlu0 %249
  %253 = vrot.lane.b32.xlu0 %v247, 64
  %v254 = vpop.permute.xlu0 %253
  %v256 = vsel %vm49, %v245, %v250
  %v257 = vsel %vm51, %v256, %v254
  %259 = vrot.lane.b32.xlu0 %v245, 96
  %v260 = vpop.permute.xlu0 %259
  %262 = vrot.lane.b32.xlu0 %v247, 32
  %v263 = vpop.permute.xlu0 %262
  %v265 = vsel %vm49, %v260, %v246
  %v266 = vsel %vm51, %v265, %v263
  %267 = vrot.lane.b32.xlu0 %v245, 64
  %v268 = vpop.permute.xlu0 %267
  %270 = vrot.lane.b32.xlu0 %v246, 96
  %v271 = vpop.permute.xlu0 %270
  %v273 = vsel %vm49, %v268, %v271
  %v274 = vsel %vm51, %v273, %v247
  %275 = vrot.lane.b32.xlu0 %v245, 32
  %v276 = vpop.permute.xlu0 %275
  %278 = vrot.lane.b32.xlu0 %v246, 64
  %v279 = vpop.permute.xlu0 %278
  %281 = vrot.lane.b32.xlu0 %v247, 96
  %v282 = vpop.permute.xlu0 %281
  %v284 = vsel %vm49, %v276, %v279
  %v285 = vsel %vm51, %v284, %v282
  %v286 = vld [vmem:[%s0 + $0x30] sm:$0xff]
  %v287 = vld [vmem:[%s0 + $0x70] sm:$0xff]
  %v288 = vld [vmem:[%s0 + $0xb0] sm:$0xff]
  %290 = vrot.lane.b32.xlu0 %v287, 32
  %v291 = vpop.permute.xlu0 %290
  %294 = vrot.lane.b32.xlu0 %v288, 64
  %v295 = vpop.permute.xlu0 %294
  %v297 = vsel %vm49, %v286, %v291
  %v298 = vsel %vm51, %v297, %v295
  %300 = vrot.lane.b32.xlu0 %v286, 96
  %v301 = vpop.permute.xlu0 %300
  %303 = vrot.lane.b32.xlu0 %v288, 32
  %v304 = vpop.permute.xlu0 %303
  %v306 = vsel %vm49, %v301, %v287
  %v307 = vsel %vm51, %v306, %v304
  %308 = vrot.lane.b32.xlu0 %v286, 64
  %v309 = vpop.permute.xlu0 %308
  %311 = vrot.lane.b32.xlu0 %v287, 96
  %v312 = vpop.permute.xlu0 %311
  %v314 = vsel %vm49, %v309, %v312
  %v315 = vsel %vm51, %v314, %v288
  %316 = vrot.lane.b32.xlu0 %v286, 32
  %v317 = vpop.permute.xlu0 %316
  %319 = vrot.lane.b32.xlu0 %v287, 64
  %v320 = vpop.permute.xlu0 %319
  %322 = vrot.lane.b32.xlu0 %v288, 96
  %v323 = vpop.permute.xlu0 %322
  %v325 = vsel %vm49, %v317, %v320
  %v326 = vsel %vm51, %v325, %v323
  %v327 = vld [vmem:[%s0 + $0x38] sm:$0xff]
  %v328 = vld [vmem:[%s0 + $0x78] sm:$0xff]
  %v329 = vld [vmem:[%s0 + $0xb8] sm:$0xff]
  %331 = vrot.lane.b32.xlu0 %v328, 32
  %v332 = vpop.permute.xlu0 %331
  %335 = vrot.lane.b32.xlu0 %v329, 64
  %v336 = vpop.permute.xlu0 %335
  %v338 = vsel %vm49, %v327, %v332
  %v339 = vsel %vm51, %v338, %v336
  %341 = vrot.lane.b32.xlu0 %v327, 96
  %v342 = vpop.permute.xlu0 %341
  %344 = vrot.lane.b32.xlu0 %v329, 32
  %v345 = vpop.permute.xlu0 %344
  %v347 = vsel %vm49, %v342, %v328
  %v348 = vsel %vm51, %v347, %v345
  %349 = vrot.lane.b32.xlu0 %v327, 64
  %v350 = vpop.permute.xlu0 %349
  %352 = vrot.lane.b32.xlu0 %v328, 96
  %v353 = vpop.permute.xlu0 %352
  %v355 = vsel %vm49, %v350, %v353
  %v356 = vsel %vm51, %v355, %v329
  %357 = vrot.lane.b32.xlu0 %v327, 32
  %v358 = vpop.permute.xlu0 %357
  %360 = vrot.lane.b32.xlu0 %v328, 64
  %v361 = vpop.permute.xlu0 %360
  %363 = vrot.lane.b32.xlu0 %v329, 96
  %v364 = vpop.permute.xlu0 %363
  %v366 = vsel %vm49, %v358, %v361
  %v367 = vsel %vm51, %v366, %v364
  %396 = vrot.lane.b32.xlu0 %v61, 96
  %v397 = vpop.permute.xlu0 %396
  %398 = vrot.lane.b32.xlu0 %v69, 96
  %v399 = vpop.permute.xlu0 %398
  %400 = vrot.lane.b32.xlu0 %v80, 96
  %v401 = vpop.permute.xlu0 %400
  %402 = vrot.lane.b32.xlu0 %v93, 96
  %v403 = vpop.permute.xlu0 %402
  %404 = vrot.lane.b32.xlu0 %v102, 96
  %v405 = vpop.permute.xlu0 %404
  %406 = vrot.lane.b32.xlu0 %v110, 96
  %v407 = vpop.permute.xlu0 %406
  %408 = vrot.lane.b32.xlu0 %v121, 96
  %v409 = vpop.permute.xlu0 %408
  %410 = vrot.lane.b32.xlu0 %v134, 96
  %v411 = vpop.permute.xlu0 %410
  %412 = vrot.lane.b32.xlu0 %v143, 96
  %v413 = vpop.permute.xlu0 %412
  %414 = vrot.lane.b32.xlu0 %v151, 96
  %v415 = vpop.permute.xlu0 %414
  %416 = vrot.lane.b32.xlu0 %v162, 96
  %v417 = vpop.permute.xlu0 %416
  %418 = vrot.lane.b32.xlu0 %v175, 96
  %v419 = vpop.permute.xlu0 %418
  %420 = vrot.lane.b32.xlu0 %v184, 96
  %v421 = vpop.permute.xlu0 %420
  %422 = vrot.lane.b32.xlu0 %v192, 96
  %v423 = vpop.permute.xlu0 %422
  %424 = vrot.lane.b32.xlu0 %v203, 96
  %v425 = vpop.permute.xlu0 %424
  %426 = vrot.lane.b32.xlu0 %v216, 96
  %v427 = vpop.permute.xlu0 %426
  %428 = vrot.lane.b32.xlu0 %v225, 96
  %v429 = vpop.permute.xlu0 %428
  %430 = vrot.lane.b32.xlu0 %v233, 96
  %v431 = vpop.permute.xlu0 %430
  %432 = vrot.lane.b32.xlu0 %v244, 96
  %v433 = vpop.permute.xlu0 %432
  %434 = vrot.lane.b32.xlu0 %v257, 96
  %v435 = vpop.permute.xlu0 %434
  %436 = vrot.lane.b32.xlu0 %v266, 96
  %v437 = vpop.permute.xlu0 %436
  %438 = vrot.lane.b32.xlu0 %v274, 96
  %v439 = vpop.permute.xlu0 %438
  %440 = vrot.lane.b32.xlu0 %v285, 96
  %v441 = vpop.permute.xlu0 %440
  %442 = vrot.lane.b32.xlu0 %v298, 96
  %v443 = vpop.permute.xlu0 %442
  %444 = vrot.lane.b32.xlu0 %v307, 96
  %v445 = vpop.permute.xlu0 %444
  %446 = vrot.lane.b32.xlu0 %v315, 96
  %v447 = vpop.permute.xlu0 %446
  %448 = vrot.lane.b32.xlu0 %v326, 96
  %v449 = vpop.permute.xlu0 %448
  %450 = vrot.lane.b32.xlu0 %v339, 96
  %v451 = vpop.permute.xlu0 %450
  %481 = vrot.lane.b32.xlu0 %v69, 64
  %v482 = vpop.permute.xlu0 %481
  %483 = vrot.lane.b32.xlu0 %v80, 64
  %v484 = vpop.permute.xlu0 %483
  %485 = vrot.lane.b32.xlu0 %v93, 64
  %v486 = vpop.permute.xlu0 %485
  %487 = vrot.lane.b32.xlu0 %v102, 64
  %v488 = vpop.permute.xlu0 %487
  %489 = vrot.lane.b32.xlu0 %v110, 64
  %v490 = vpop.permute.xlu0 %489
  %491 = vrot.lane.b32.xlu0 %v121, 64
  %v492 = vpop.permute.xlu0 %491
  %493 = vrot.lane.b32.xlu0 %v134, 64
  %v494 = vpop.permute.xlu0 %493
  %495 = vrot.lane.b32.xlu0 %v143, 64
  %v496 = vpop.permute.xlu0 %495
  %497 = vrot.lane.b32.xlu0 %v151, 64
  %v498 = vpop.permute.xlu0 %497
  %499 = vrot.lane.b32.xlu0 %v162, 64
  %v500 = vpop.permute.xlu0 %499
  %501 = vrot.lane.b32.xlu0 %v175, 64
  %v502 = vpop.permute.xlu0 %501
  %503 = vrot.lane.b32.xlu0 %v184, 64
  %v504 = vpop.permute.xlu0 %503
  %505 = vrot.lane.b32.xlu0 %v192, 64
  %v506 = vpop.permute.xlu0 %505
  %507 = vrot.lane.b32.xlu0 %v203, 64
  %v508 = vpop.permute.xlu0 %507
  %509 = vrot.lane.b32.xlu0 %v216, 64
  %v510 = vpop.permute.xlu0 %509
  %511 = vrot.lane.b32.xlu0 %v225, 64
  %v512 = vpop.permute.xlu0 %511
  %513 = vrot.lane.b32.xlu0 %v233, 64
  %v514 = vpop.permute.xlu0 %513
  %515 = vrot.lane.b32.xlu0 %v244, 64
  %v516 = vpop.permute.xlu0 %515
  %517 = vrot.lane.b32.xlu0 %v257, 64
  %v518 = vpop.permute.xlu0 %517
  %519 = vrot.lane.b32.xlu0 %v266, 64
  %v520 = vpop.permute.xlu0 %519
  %521 = vrot.lane.b32.xlu0 %v274, 64
  %v522 = vpop.permute.xlu0 %521
  %523 = vrot.lane.b32.xlu0 %v285, 64
  %v524 = vpop.permute.xlu0 %523
  %525 = vrot.lane.b32.xlu0 %v298, 64
  %v526 = vpop.permute.xlu0 %525
  %527 = vrot.lane.b32.xlu0 %v307, 64
  %v528 = vpop.permute.xlu0 %527
  %529 = vrot.lane.b32.xlu0 %v315, 64
  %v530 = vpop.permute.xlu0 %529
  %531 = vrot.lane.b32.xlu0 %v326, 64
  %v532 = vpop.permute.xlu0 %531
  %533 = vrot.lane.b32.xlu0 %v339, 64
  %v534 = vpop.permute.xlu0 %533
  %535 = vrot.lane.b32.xlu0 %v348, 64
  %v536 = vpop.permute.xlu0 %535
  %566 = vrot.lane.b32.xlu0 %v80, 32
  %v567 = vpop.permute.xlu0 %566
  %568 = vrot.lane.b32.xlu0 %v93, 32
  %v569 = vpop.permute.xlu0 %568
  %570 = vrot.lane.b32.xlu0 %v102, 32
  %v571 = vpop.permute.xlu0 %570
  %572 = vrot.lane.b32.xlu0 %v110, 32
  %v573 = vpop.permute.xlu0 %572
  %574 = vrot.lane.b32.xlu0 %v121, 32
  %v575 = vpop.permute.xlu0 %574
  %576 = vrot.lane.b32.xlu0 %v134, 32
  %v577 = vpop.permute.xlu0 %576
  %578 = vrot.lane.b32.xlu0 %v143, 32
  %v579 = vpop.permute.xlu0 %578
  %580 = vrot.lane.b32.xlu0 %v151, 32
  %v581 = vpop.permute.xlu0 %580
  %582 = vrot.lane.b32.xlu0 %v162, 32
  %v583 = vpop.permute.xlu0 %582
  %584 = vrot.lane.b32.xlu0 %v175, 32
  %v585 = vpop.permute.xlu0 %584
  %586 = vrot.lane.b32.xlu0 %v184, 32
  %v587 = vpop.permute.xlu0 %586
  %588 = vrot.lane.b32.xlu0 %v192, 32
  %v589 = vpop.permute.xlu0 %588
  %590 = vrot.lane.b32.xlu0 %v203, 32
  %v591 = vpop.permute.xlu0 %590
  %592 = vrot.lane.b32.xlu0 %v216, 32
  %v593 = vpop.permute.xlu0 %592
  %594 = vrot.lane.b32.xlu0 %v225, 32
  %v595 = vpop.permute.xlu0 %594
  %596 = vrot.lane.b32.xlu0 %v233, 32
  %v597 = vpop.permute.xlu0 %596
  %598 = vrot.lane.b32.xlu0 %v244, 32
  %v599 = vpop.permute.xlu0 %598
  %600 = vrot.lane.b32.xlu0 %v257, 32
  %v601 = vpop.permute.xlu0 %600
  %602 = vrot.lane.b32.xlu0 %v266, 32
  %v603 = vpop.permute.xlu0 %602
  %604 = vrot.lane.b32.xlu0 %v274, 32
  %v605 = vpop.permute.xlu0 %604
  %606 = vrot.lane.b32.xlu0 %v285, 32
  %v607 = vpop.permute.xlu0 %606
  %608 = vrot.lane.b32.xlu0 %v298, 32
  %v609 = vpop.permute.xlu0 %608
  %610 = vrot.lane.b32.xlu0 %v307, 32
  %v611 = vpop.permute.xlu0 %610
  %612 = vrot.lane.b32.xlu0 %v315, 32
  %v613 = vpop.permute.xlu0 %612
  %614 = vrot.lane.b32.xlu0 %v326, 32
  %v615 = vpop.permute.xlu0 %614
  %616 = vrot.lane.b32.xlu0 %v339, 32
  %v617 = vpop.permute.xlu0 %616
  %618 = vrot.lane.b32.xlu0 %v348, 32
  %v619 = vpop.permute.xlu0 %618
  %620 = vrot.lane.b32.xlu0 %v356, 32
  %v621 = vpop.permute.xlu0 %620
  %vm650 = vcmask 785408
  %v651 = vsel %vm650, %v52, %v397
  %v652 = vsel %vm650, %v61, %v399
  %v653 = vsel %vm650, %v69, %v401
  %v654 = vsel %vm650, %v80, %v403
  %v655 = vsel %vm650, %v93, %v405
  %v656 = vsel %vm650, %v102, %v407
  %v657 = vsel %vm650, %v110, %v409
  %v658 = vsel %vm650, %v121, %v411
  %v659 = vsel %vm650, %v134, %v413
  %v660 = vsel %vm650, %v143, %v415
  %v661 = vsel %vm650, %v151, %v417
  %v662 = vsel %vm650, %v162, %v419
  %v663 = vsel %vm650, %v175, %v421
  %v664 = vsel %vm650, %v184, %v423
  %v665 = vsel %vm650, %v192, %v425
  %v666 = vsel %vm650, %v203, %v427
  %v667 = vsel %vm650, %v216, %v429
  %v668 = vsel %vm650, %v225, %v431
  %v669 = vsel %vm650, %v233, %v433
  %v670 = vsel %vm650, %v244, %v435
  %v671 = vsel %vm650, %v257, %v437
  %v672 = vsel %vm650, %v266, %v439
  %v673 = vsel %vm650, %v274, %v441
  %v674 = vsel %vm650, %v285, %v443
  %v675 = vsel %vm650, %v298, %v445
  %v676 = vsel %vm650, %v307, %v447
  %v677 = vsel %vm650, %v315, %v449
  %v678 = vsel %vm650, %v326, %v451
  %v679 = vsel %vm51, %v397, %v482
  %v680 = vsel %vm51, %v399, %v484
  %v681 = vsel %vm51, %v401, %v486
  %v682 = vsel %vm51, %v403, %v488
  %v683 = vsel %vm51, %v405, %v490
  %v684 = vsel %vm51, %v407, %v492
  %v685 = vsel %vm51, %v409, %v494
  %v686 = vsel %vm51, %v411, %v496
  %v687 = vsel %vm51, %v413, %v498
  %v688 = vsel %vm51, %v415, %v500
  %v689 = vsel %vm51, %v417, %v502
  %v690 = vsel %vm51, %v419, %v504
  %v691 = vsel %vm51, %v421, %v506
  %v692 = vsel %vm51, %v423, %v508
  %v693 = vsel %vm51, %v425, %v510
  %v694 = vsel %vm51, %v427, %v512
  %v695 = vsel %vm51, %v429, %v514
  %v696 = vsel %vm51, %v431, %v516
  %v697 = vsel %vm51, %v433, %v518
  %v698 = vsel %vm51, %v435, %v520
  %v699 = vsel %vm51, %v437, %v522
  %v700 = vsel %vm51, %v439, %v524
  %v701 = vsel %vm51, %v441, %v526
  %v702 = vsel %vm51, %v443, %v528
  %v703 = vsel %vm51, %v445, %v530
  %v704 = vsel %vm51, %v447, %v532
  %v705 = vsel %vm51, %v449, %v534
  %v706 = vsel %vm51, %v451, %v536
  %v707 = vsel %vm49, %v482, %v567
  %v708 = vsel %vm49, %v484, %v569
  %v709 = vsel %vm49, %v486, %v571
  %v710 = vsel %vm49, %v488, %v573
  %v711 = vsel %vm49, %v490, %v575
  %v712 = vsel %vm49, %v492, %v577
  %v713 = vsel %vm49, %v494, %v579
  %v714 = vsel %vm49, %v496, %v581
  %v715 = vsel %vm49, %v498, %v583
  %v716 = vsel %vm49, %v500, %v585
  %v717 = vsel %vm49, %v502, %v587
  %v718 = vsel %vm49, %v504, %v589
  %v719 = vsel %vm49, %v506, %v591
  %v720 = vsel %vm49, %v508, %v593
  %v721 = vsel %vm49, %v510, %v595
  %v722 = vsel %vm49, %v512, %v597
  %v723 = vsel %vm49, %v514, %v599
  %v724 = vsel %vm49, %v516, %v601
  %v725 = vsel %vm49, %v518, %v603
  %v726 = vsel %vm49, %v520, %v605
  %v727 = vsel %vm49, %v522, %v607
  %v728 = vsel %vm49, %v524, %v609
  %v729 = vsel %vm49, %v526, %v611
  %v730 = vsel %vm49, %v528, %v613
  %v731 = vsel %vm49, %v530, %v615
  %v732 = vsel %vm49, %v532, %v617
  %v733 = vsel %vm49, %v534, %v619
  %v734 = vsel %vm49, %v536, %v621
  %v735 = vld [vmem:[%s1] sm:$0xff]
  %v736 = vld [vmem:[%s1 + $0x8] sm:$0xff]
  %v737 = vld [vmem:[%s1 + $0x10] sm:$0xff]
  %v738 = vld [vmem:[%s1 + $0x18] sm:$0xff]
  %v739 = vld [vmem:[%s1 + $0x20] sm:$0xff]
  %v740 = vld [vmem:[%s1 + $0x28] sm:$0xff]
  %v741 = vld [vmem:[%s1 + $0x30] sm:$0xff]
  %v742 = vld [vmem:[%s1 + $0x38] sm:$0xff]
  %v743 = vld [vmem:[%s1 + $0x40] sm:$0xff]
  %v744 = vld [vmem:[%s1 + $0x48] sm:$0xff]
  %v745 = vld [vmem:[%s1 + $0x50] sm:$0xff]
  %v746 = vld [vmem:[%s1 + $0x58] sm:$0xff]
  %v747 = vld [vmem:[%s1 + $0x60] sm:$0xff]
  %v748 = vld [vmem:[%s1 + $0x68] sm:$0xff]
  %v749 = vld [vmem:[%s1 + $0x70] sm:$0xff]
  %v750 = vld [vmem:[%s1 + $0x78] sm:$0xff]
  %v751 = vld [vmem:[%s1 + $0x80] sm:$0xff]
  %v752 = vld [vmem:[%s1 + $0x88] sm:$0xff]
  %v753 = vld [vmem:[%s1 + $0x90] sm:$0xff]
  %v754 = vld [vmem:[%s1 + $0x98] sm:$0xff]
  %v755 = vld [vmem:[%s1 + $0xa0] sm:$0xff]
  %v756 = vld [vmem:[%s1 + $0xa8] sm:$0xff]
  %v757 = vld [vmem:[%s1 + $0xb0] sm:$0xff]
  %v758 = vld [vmem:[%s1 + $0xb8] sm:$0xff]
  %v759 = vld [vmem:[%s1 + $0xc0] sm:$0xff]
  %v760 = vld [vmem:[%s1 + $0xc8] sm:$0xff]
  %v761 = vld [vmem:[%s1 + $0xd0] sm:$0xff]
  %v762 = vld [vmem:[%s1 + $0xd8] sm:$0xff]
  %v763 = vld [vmem:[%s1 + $0xe0] sm:$0xff]
  %v764 = vld [vmem:[%s1 + $0xe8] sm:$0xff]
  %v765 = vld [vmem:[%s1 + $0xf0] sm:$0xff]
  %v766 = vld [vmem:[%s1 + $0xf8] sm:$0xff]
  %v767 = vld [vmem:[%s1 + $0x100] sm:$0xff]
  %v768 = vld [vmem:[%s1 + $0x108] sm:$0xff]
  %v769 = vld [vmem:[%s1 + $0x110] sm:$0xff]
  %v770 = vld [vmem:[%s1 + $0x118] sm:$0xff]
  %v771 = vld [vmem:[%s1 + $0x120] sm:$0xff]
  %v772 = vld [vmem:[%s1 + $0x128] sm:$0xff]
  %v773 = vld [vmem:[%s1 + $0x130] sm:$0xff]
  %v774 = vld [vmem:[%s1 + $0x138] sm:$0xff]
  %v775 = vld [vmem:[%s1 + $0x140] sm:$0xff]
  %v776 = vld [vmem:[%s1 + $0x148] sm:$0xff]
  %v777 = vld [vmem:[%s1 + $0x150] sm:$0xff]
  %v778 = vld [vmem:[%s1 + $0x158] sm:$0xff]
  %v779 = vld [vmem:[%s1 + $0x160] sm:$0xff]
  %v780 = vld [vmem:[%s1 + $0x168] sm:$0xff]
  %v781 = vld [vmem:[%s1 + $0x170] sm:$0xff]
  %v782 = vld [vmem:[%s1 + $0x178] sm:$0xff]
  %v783 = vld [vmem:[%s1 + $0x180] sm:$0xff]
  %v784 = vld [vmem:[%s1 + $0x188] sm:$0xff]
  %v785 = vld [vmem:[%s1 + $0x190] sm:$0xff]
  %v786 = vld [vmem:[%s1 + $0x198] sm:$0xff]
  %v787 = vld [vmem:[%s1 + $0x1a0] sm:$0xff]
  %v788 = vld [vmem:[%s1 + $0x1a8] sm:$0xff]
  %v789 = vld [vmem:[%s1 + $0x1b0] sm:$0xff]
  %v790 = vld [vmem:[%s1 + $0x1b8] sm:$0xff]
  %v791 = vld [vmem:[%s1 + $0x1c0] sm:$0xff]
  %v792 = vld [vmem:[%s1 + $0x1c8] sm:$0xff]
  %v793 = vld [vmem:[%s1 + $0x1d0] sm:$0xff]
  %v794 = vld [vmem:[%s1 + $0x1d8] sm:$0xff]
  %v795 = vld [vmem:[%s1 + $0x1e0] sm:$0xff]
  %v796 = vld [vmem:[%s1 + $0x1e8] sm:$0xff]
  %v797 = vld [vmem:[%s1 + $0x1f0] sm:$0xff]
  %v798 = vld [vmem:[%s1 + $0x1f8] sm:$0xff]
  %v799 = vld [vmem:[%s1 + $0x200] sm:$0xff]
  %v800 = vld [vmem:[%s1 + $0x208] sm:$0xff]
  %v801 = vld [vmem:[%s1 + $0x210] sm:$0xff]
  %v802 = vld [vmem:[%s1 + $0x218] sm:$0xff]
  %v803 = vld [vmem:[%s1 + $0x220] sm:$0xff]
  %v804 = vld [vmem:[%s1 + $0x228] sm:$0xff]
  %v805 = vld [vmem:[%s1 + $0x230] sm:$0xff]
  %v806 = vld [vmem:[%s1 + $0x238] sm:$0xff]
  %v807 = vld [vmem:[%s1 + $0x240] sm:$0xff]
  %v808 = vld [vmem:[%s1 + $0x248] sm:$0xff]
  %v809 = vld [vmem:[%s1 + $0x250] sm:$0xff]
  %v810 = vld [vmem:[%s1 + $0x258] sm:$0xff]
  %v811 = vld [vmem:[%s1 + $0x260] sm:$0xff]
  %v812 = vld [vmem:[%s1 + $0x268] sm:$0xff]
  %v813 = vld [vmem:[%s1 + $0x270] sm:$0xff]
  %v814 = vld [vmem:[%s1 + $0x278] sm:$0xff]
  %v815 = vld [vmem:[%s1 + $0x280] sm:$0xff]
  %v816 = vld [vmem:[%s1 + $0x288] sm:$0xff]
  %v817 = vld [vmem:[%s1 + $0x290] sm:$0xff]
  %v818 = vld [vmem:[%s1 + $0x298] sm:$0xff]
  %v819 = vld [vmem:[%s1 + $0x2a0] sm:$0xff]
  %v820 = vld [vmem:[%s1 + $0x2a8] sm:$0xff]
  %v821 = vld [vmem:[%s1 + $0x2b0] sm:$0xff]
  %v822 = vld [vmem:[%s1 + $0x2b8] sm:$0xff]
  %v823 = vld [vmem:[%s1 + $0x2c0] sm:$0xff]
  %v824 = vld [vmem:[%s1 + $0x2c8] sm:$0xff]
  %v825 = vld [vmem:[%s1 + $0x2d0] sm:$0xff]
  %v826 = vld [vmem:[%s1 + $0x2d8] sm:$0xff]
  %v827 = vld [vmem:[%s1 + $0x2e0] sm:$0xff]
  %v828 = vld [vmem:[%s1 + $0x2e8] sm:$0xff]
  %v829 = vld [vmem:[%s1 + $0x2f0] sm:$0xff]
  %v830 = vld [vmem:[%s1 + $0x2f8] sm:$0xff]
  %v831 = vld [vmem:[%s1 + $0x300] sm:$0xff]
  %v832 = vld [vmem:[%s1 + $0x308] sm:$0xff]
  %v833 = vld [vmem:[%s1 + $0x310] sm:$0xff]
  %v834 = vld [vmem:[%s1 + $0x318] sm:$0xff]
  %v835 = vld [vmem:[%s1 + $0x320] sm:$0xff]
  %v836 = vld [vmem:[%s1 + $0x328] sm:$0xff]
  %v837 = vld [vmem:[%s1 + $0x330] sm:$0xff]
  %v838 = vld [vmem:[%s1 + $0x338] sm:$0xff]
  %v839 = vld [vmem:[%s1 + $0x340] sm:$0xff]
  %v840 = vld [vmem:[%s1 + $0x348] sm:$0xff]
  %v841 = vld [vmem:[%s1 + $0x350] sm:$0xff]
  %v842 = vld [vmem:[%s1 + $0x358] sm:$0xff]
  %v843 = vld [vmem:[%s1 + $0x360] sm:$0xff]
  %v844 = vld [vmem:[%s1 + $0x368] sm:$0xff]
  %v845 = vld [vmem:[%s1 + $0x370] sm:$0xff]
  %v846 = vld [vmem:[%s1 + $0x378] sm:$0xff]
  %v847 = vld [vmem:[%s1 + $0x380] sm:$0xff]
  %v848 = vld [vmem:[%s1 + $0x388] sm:$0xff]
  %v849 = vld [vmem:[%s1 + $0x390] sm:$0xff]
  %v850 = vld [vmem:[%s1 + $0x398] sm:$0xff]
  %v851 = vld [vmem:[%s1 + $0x3a0] sm:$0xff]
  %v852 = vld [vmem:[%s1 + $0x3a8] sm:$0xff]
  %v853 = vld [vmem:[%s1 + $0x3b0] sm:$0xff]
  %v854 = vld [vmem:[%s1 + $0x3b8] sm:$0xff]
  %v855 = vld [vmem:[%s2] sm:$0x3]
  %v857 = vlaneseq
  %v858 = vshrl.u32 %v857, 7
  %v859 = vsub.s32 0, %v858
  %v860 = vrot.slane %v855, %v859
  %v861 = vlaneseq
  %v862 = vshrl.u32 %v861, 7
  %v863 = vsub.s32 1, %v862
  %v864 = vrot.slane %v855, %v863
  %v867 = vsel %vm650, %v93, 0
  %v869 = vsel %vm650, %v102, 0
  %v871 = vsel %vm650, %v110, 0
  %v873 = vsel %vm650, %v121, 0
  %v875 = vsel %vm650, %v134, 0
  %v877 = vsel %vm650, %v143, 0
  %v879 = vsel %vm650, %v151, 0
  %v881 = vsel %vm650, %v162, 0
  %v883 = vsel %vm650, %v175, 0
  %v885 = vsel %vm650, %v184, 0
  %v887 = vsel %vm650, %v192, 0
  %v889 = vsel %vm650, %v203, 0
  %v891 = vsel %vm650, %v216, 0
  %v893 = vsel %vm650, %v225, 0
  %v895 = vsel %vm650, %v233, 0
  %v897 = vsel %vm650, %v244, 0
  %v899 = vsel %vm650, %v257, 0
  %v901 = vsel %vm650, %v266, 0
  %v903 = vsel %vm650, %v274, 0
  %v905 = vsel %vm650, %v285, 0
  %v907 = vsel %vm650, %v298, 0
  %v909 = vsel %vm650, %v307, 0
  %v911 = vsel %vm650, %v315, 0
  %v913 = vsel %vm650, %v326, 0
  %v915 = vsel %vm650, %v339, 0
  %v917 = vsel %vm650, %v348, 0
  %v919 = vsel %vm650, %v356, 0
  %v922 = vsel %vm650, %v367, 0
  %924 = vmatprep.subr.mxu0 %v736
  %925 = vmatpush1.msra.mxu0 %v735
  %926 = vmatprep.subr.mxu0 %v738
  %927 = vmatpush1.msra.mxu0 %v737
  %928 = vmatprep.subr.mxu0 %v740
  %929 = vmatpush1.msra.mxu0 %v739
  %930 = vmatprep.subr.mxu0 %v742
  %931 = vmatpush1.msra.mxu0 %v741
  %932 = vmatprep.subr.mxu0 %v744
  %933 = vmatpush1.msra.mxu0 %v743
  %934 = vmatprep.subr.mxu0 %v746
  %935 = vmatpush1.msra.mxu0 %v745
  %936 = vmatprep.subr.mxu0 %v748
  %937 = vmatpush1.msra.mxu0 %v747
  %938 = vmatprep.subr.mxu0 %v750
  %939 = vmatpush1.msra.mxu0 %v749
  %940 = vmatprep.subr.mxu0 %v752
  %941 = vmatpush1.msra.mxu0 %v751
  %942 = vmatprep.subr.mxu0 %v754
  %943 = vmatpush1.msra.mxu0 %v753
  %944 = vmatprep.subr.mxu0 %v756
  %945 = vmatpush1.msra.mxu0 %v755
  %946 = vmatprep.subr.mxu0 %v758
  %947 = vmatpush1.msra.mxu0 %v757
  %948 = vmatprep.subr.mxu0 %v760
  %949 = vmatpush1.msra.mxu0 %v759
  %950 = vmatprep.subr.mxu0 %v762
  %951 = vmatpush1.msra.mxu0 %v761
  %952 = vmatprep.subr.mxu0 %v764
  %953 = vmatpush1.msra.mxu0 %v763
  %954 = vmatprep.subr.mxu0 %v766
  %955 = vmatpush1.msra.mxu0 %v765
  %956 = vmatprep.subr.mxu0 %v768
  %957 = vmatpush1.msra.mxu0 %v767
  %958 = vmatprep.subr.mxu0 %v770
  %959 = vmatpush1.msra.mxu0 %v769
  %960 = vmatprep.subr.mxu0 %v772
  %961 = vmatpush1.msra.mxu0 %v771
  %962 = vmatprep.subr.mxu0 %v774
  %963 = vmatpush1.msra.mxu0 %v773
  %964 = vmatprep.subr.mxu0 %v776
  %965 = vmatpush1.msra.mxu0 %v775
  %966 = vmatprep.subr.mxu0 %v778
  %967 = vmatpush1.msra.mxu0 %v777
  %968 = vmatprep.subr.mxu0 %v780
  %969 = vmatpush1.msra.mxu0 %v779
  %970 = vmatprep.subr.mxu0 %v782
  %971 = vmatpush1.msra.mxu0 %v781
  %972 = vmatprep.subr.mxu0 %v784
  %973 = vmatpush1.msra.mxu0 %v783
  %974 = vmatprep.subr.mxu0 %v786
  %975 = vmatpush1.msra.mxu0 %v785
  %976 = vmatprep.subr.mxu0 %v788
  %977 = vmatpush1.msra.mxu0 %v787
  %978 = vmatprep.subr.mxu0 %v790
  %979 = vmatpush1.msra.mxu0 %v789
  %980 = vmatprep.subr.mxu0 %v792
  %981 = vmatpush1.msra.mxu0 %v791
  %982 = vmatprep.subr.mxu0 %v794
  %983 = vmatpush1.msra.mxu0 %v793
  %984 = vmatprep.subr.mxu0 %v796
  %985 = vmatpush1.msra.mxu0 %v795
  %986 = vmatprep.subr.mxu0 %v798
  %987 = vmatpush1.msra.mxu0 %v797
  %988 = vmatprep.mubr.f32.mxu0 %v679
  %989 = vmatmul.mubr.f32.gmra.mrb[0].mxu0 %v651
  %v990 = vpop.f32.mrb[0].mxu0
  %v991 = vadd.f32 %v860, %v990
  %v992 = vpop.f32.mrb[0].mxu0
  %v993 = vadd.f32 %v864, %v992
  %994 = vmatprep.mubr.f32.mxu0 %v680
  %995 = vmatmul.mubr.f32.gmra.mrb[0].mxu0 %v652
  %v996 = vpop.f32.mrb[0].mxu0
  %v997 = vadd.f32 %v860, %v996
  %v998 = vpop.f32.mrb[0].mxu0
  %v999 = vadd.f32 %v864, %v998
  %1000 = vmatprep.mubr.f32.mxu0 %v681
  %1001 = vmatmul.mubr.f32.gmra.mrb[0].mxu0 %v653
  %v1002 = vpop.f32.mrb[0].mxu0
  %v1003 = vadd.f32 %v860, %v1002
  %v1004 = vpop.f32.mrb[0].mxu0
  %v1005 = vadd.f32 %v864, %v1004
  %1006 = vmatprep.mubr.f32.mxu0 %v682
  %1007 = vmatmul.mubr.f32.gmra.mrb[0].mxu0 %v654
  %v1008 = vpop.f32.mrb[0].mxu0
  %v1009 = vadd.f32 %v860, %v1008
  %v1010 = vpop.f32.mrb[0].mxu0
  %v1011 = vadd.f32 %v864, %v1010
  %1012 = vmatprep.mubr.f32.mxu0 %v683
  %1013 = vmatmul.mubr.f32.gmra.mrb[0].mxu0 %v655
  %v1014 = vpop.f32.mrb[0].mxu0
  %v1015 = vadd.f32 %v860, %v1014
  %v1016 = vpop.f32.mrb[0].mxu0
  %v1017 = vadd.f32 %v864, %v1016
  %1018 = vmatprep.mubr.f32.mxu0 %v684
  %1019 = vmatmul.mubr.f32.gmra.mrb[0].mxu0 %v656
  %v1020 = vpop.f32.mrb[0].mxu0
  %v1021 = vadd.f32 %v860, %v1020
  %v1022 = vpop.f32.mrb[0].mxu0
  %v1023 = vadd.f32 %v864, %v1022
  %1024 = vmatprep.mubr.f32.mxu0 %v685
  %1025 = vmatmul.mubr.f32.gmra.mrb[0].mxu0 %v657
  %v1026 = vpop.f32.mrb[0].mxu0
  %v1027 = vadd.f32 %v860, %v1026
  %v1028 = vpop.f32.mrb[0].mxu0
  %v1029 = vadd.f32 %v864, %v1028
  %1030 = vmatprep.mubr.f32.mxu0 %v686
  %1031 = vmatmul.mubr.f32.gmra.mrb[0].mxu0 %v658
  %v1032 = vpop.f32.mrb[0].mxu0
  %v1033 = vadd.f32 %v860, %v1032
  %v1034 = vpop.f32.mrb[0].mxu0
  %v1035 = vadd.f32 %v864, %v1034
  %1036 = vmatprep.mubr.f32.mxu0 %v687
  %1037 = vmatmul.mubr.f32.gmra.mrb[0].mxu0 %v659
  %v1038 = vpop.f32.mrb[0].mxu0
  %v1039 = vadd.f32 %v860, %v1038
  %v1040 = vpop.f32.mrb[0].mxu0
  %v1041 = vadd.f32 %v864, %v1040
  %1042 = vmatprep.mubr.f32.mxu0 %v688
  %1043 = vmatmul.mubr.f32.gmra.mrb[0].mxu0 %v660
  %v1044 = vpop.f32.mrb[0].mxu0
  %v1045 = vadd.f32 %v860, %v1044
  %v1046 = vpop.f32.mrb[0].mxu0
  %v1047 = vadd.f32 %v864, %v1046
  %1048 = vmatprep.mubr.f32.mxu0 %v689
  %1049 = vmatmul.mubr.f32.gmra.mrb[0].mxu0 %v661
  %v1050 = vpop.f32.mrb[0].mxu0
  %v1051 = vadd.f32 %v860, %v1050
  %v1052 = vpop.f32.mrb[0].mxu0
  %v1053 = vadd.f32 %v864, %v1052
  %1054 = vmatprep.mubr.f32.mxu0 %v690
  %1055 = vmatmul.mubr.f32.gmra.mrb[0].mxu0 %v662
  %v1056 = vpop.f32.mrb[0].mxu0
  %v1057 = vadd.f32 %v860, %v1056
  %v1058 = vpop.f32.mrb[0].mxu0
  %v1059 = vadd.f32 %v864, %v1058
  %1060 = vmatprep.mubr.f32.mxu0 %v691
  %1061 = vmatmul.mubr.f32.gmra.mrb[0].mxu0 %v663
  %v1062 = vpop.f32.mrb[0].mxu0
  %v1063 = vadd.f32 %v860, %v1062
  %v1064 = vpop.f32.mrb[0].mxu0
  %v1065 = vadd.f32 %v864, %v1064
  %1066 = vmatprep.mubr.f32.mxu0 %v692
  %1067 = vmatmul.mubr.f32.gmra.mrb[0].mxu0 %v664
  %v1068 = vpop.f32.mrb[0].mxu0
  %v1069 = vadd.f32 %v860, %v1068
  %v1070 = vpop.f32.mrb[0].mxu0
  %v1071 = vadd.f32 %v864, %v1070
  %1072 = vmatprep.mubr.f32.mxu0 %v693
  %1073 = vmatmul.mubr.f32.gmra.mrb[0].mxu0 %v665
  %v1074 = vpop.f32.mrb[0].mxu0
  %v1075 = vadd.f32 %v860, %v1074
  %v1076 = vpop.f32.mrb[0].mxu0
  %v1077 = vadd.f32 %v864, %v1076
  %1078 = vmatprep.mubr.f32.mxu0 %v694
  %1079 = vmatmul.mubr.f32.gmra.mrb[0].mxu0 %v666
  %v1080 = vpop.f32.mrb[0].mxu0
  %v1081 = vadd.f32 %v860, %v1080
  %v1082 = vpop.f32.mrb[0].mxu0
  %v1083 = vadd.f32 %v864, %v1082
  %1084 = vmatprep.mubr.f32.mxu0 %v695
  %1085 = vmatmul.mubr.f32.gmra.mrb[0].mxu0 %v667
  %v1086 = vpop.f32.mrb[0].mxu0
  %v1087 = vadd.f32 %v860, %v1086
  %v1088 = vpop.f32.mrb[0].mxu0
  %v1089 = vadd.f32 %v864, %v1088
  %1090 = vmatprep.mubr.f32.mxu0 %v696
  %1091 = vmatmul.mubr.f32.gmra.mrb[0].mxu0 %v668
  %v1092 = vpop.f32.mrb[0].mxu0
  %v1093 = vadd.f32 %v860, %v1092
  %v1094 = vpop.f32.mrb[0].mxu0
  %v1095 = vadd.f32 %v864, %v1094
  %1096 = vmatprep.mubr.f32.mxu0 %v697
  %1097 = vmatmul.mubr.f32.gmra.mrb[0].mxu0 %v669
  %v1098 = vpop.f32.mrb[0].mxu0
  %v1099 = vadd.f32 %v860, %v1098
  %v1100 = vpop.f32.mrb[0].mxu0
  %v1101 = vadd.f32 %v864, %v1100
  %1102 = vmatprep.mubr.f32.mxu0 %v698
  %1103 = vmatmul.mubr.f32.gmra.mrb[0].mxu0 %v670
  %v1104 = vpop.f32.mrb[0].mxu0
  %v1105 = vadd.f32 %v860, %v1104
  %v1106 = vpop.f32.mrb[0].mxu0
  %v1107 = vadd.f32 %v864, %v1106
  %1108 = vmatprep.mubr.f32.mxu0 %v699
  %1109 = vmatmul.mubr.f32.gmra.mrb[0].mxu0 %v671
  %v1110 = vpop.f32.mrb[0].mxu0
  %v1111 = vadd.f32 %v860, %v1110
  %v1112 = vpop.f32.mrb[0].mxu0
  %v1113 = vadd.f32 %v864, %v1112
  %1114 = vmatprep.mubr.f32.mxu0 %v700
  %1115 = vmatmul.mubr.f32.gmra.mrb[0].mxu0 %v672
  %v1116 = vpop.f32.mrb[0].mxu0
  %v1117 = vadd.f32 %v860, %v1116
  %v1118 = vpop.f32.mrb[0].mxu0
  %v1119 = vadd.f32 %v864, %v1118
  %1120 = vmatprep.mubr.f32.mxu0 %v701
  %1121 = vmatmul.mubr.f32.gmra.mrb[0].mxu0 %v673
  %v1122 = vpop.f32.mrb[0].mxu0
  %v1123 = vadd.f32 %v860, %v1122
  %v1124 = vpop.f32.mrb[0].mxu0
  %v1125 = vadd.f32 %v864, %v1124
  %1126 = vmatprep.mubr.f32.mxu0 %v702
  %1127 = vmatmul.mubr.f32.gmra.mrb[0].mxu0 %v674
  %v1128 = vpop.f32.mrb[0].mxu0
  %v1129 = vadd.f32 %v860, %v1128
  %v1130 = vpop.f32.mrb[0].mxu0
  %v1131 = vadd.f32 %v864, %v1130
  %1132 = vmatprep.mubr.f32.mxu0 %v703
  %1133 = vmatmul.mubr.f32.gmra.mrb[0].mxu0 %v675
  %v1134 = vpop.f32.mrb[0].mxu0
  %v1135 = vadd.f32 %v860, %v1134
  %v1136 = vpop.f32.mrb[0].mxu0
  %v1137 = vadd.f32 %v864, %v1136
  %1138 = vmatprep.mubr.f32.mxu0 %v704
  %1139 = vmatmul.mubr.f32.gmra.mrb[0].mxu0 %v676
  %v1140 = vpop.f32.mrb[0].mxu0
  %v1141 = vadd.f32 %v860, %v1140
  %v1142 = vpop.f32.mrb[0].mxu0
  %v1143 = vadd.f32 %v864, %v1142
  %1144 = vmatprep.mubr.f32.mxu0 %v705
  %1145 = vmatmul.mubr.f32.gmra.mrb[0].mxu0 %v677
  %v1146 = vpop.f32.mrb[0].mxu0
  %v1147 = vadd.f32 %v860, %v1146
  %v1148 = vpop.f32.mrb[0].mxu0
  %v1149 = vadd.f32 %v864, %v1148
  %1150 = vmatprep.mubr.f32.mxu0 %v706
  %1151 = vmatmul.mubr.f32.gmra.mrb[0].mxu0 %v678
  %v1152 = vpop.f32.mrb[0].mxu0
  %v1153 = vadd.f32 %v860, %v1152
  %v1154 = vpop.f32.mrb[0].mxu0
  %v1155 = vadd.f32 %v864, %v1154
  %1156 = vdwg.mxu0
  %1157 = vmatprep.subr.mxu0 %v800
  %1158 = vmatpush1.msra.mxu0 %v799
  %1159 = vmatprep.subr.mxu0 %v802
  %1160 = vmatpush1.msra.mxu0 %v801
  %1161 = vmatprep.subr.mxu0 %v804
  %1162 = vmatpush1.msra.mxu0 %v803
  %1163 = vmatprep.subr.mxu0 %v806
  %1164 = vmatpush1.msra.mxu0 %v805
  %1165 = vmatprep.subr.mxu0 %v808
  %1166 = vmatpush1.msra.mxu0 %v807
  %1167 = vmatprep.subr.mxu0 %v810
  %1168 = vmatpush1.msra.mxu0 %v809
  %1169 = vmatprep.subr.mxu0 %v812
  %1170 = vmatpush1.msra.mxu0 %v811
  %1171 = vmatprep.subr.mxu0 %v814
  %1172 = vmatpush1.msra.mxu0 %v813
  %1173 = vmatprep.subr.mxu0 %v816
  %1174 = vmatpush1.msra.mxu0 %v815
  %1175 = vmatprep.subr.mxu0 %v818
  %1176 = vmatpush1.msra.mxu0 %v817
  %1177 = vmatprep.subr.mxu0 %v820
  %1178 = vmatpush1.msra.mxu0 %v819
  %1179 = vmatprep.subr.mxu0 %v822
  %1180 = vmatpush1.msra.mxu0 %v821
  %1181 = vmatprep.subr.mxu0 %v824
  %1182 = vmatpush1.msra.mxu0 %v823
  %1183 = vmatprep.subr.mxu0 %v826
  %1184 = vmatpush1.msra.mxu0 %v825
  %1185 = vmatprep.subr.mxu0 %v828
  %1186 = vmatpush1.msra.mxu0 %v827
  %1187 = vmatprep.subr.mxu0 %v830
  %1188 = vmatpush1.msra.mxu0 %v829
  %1189 = vmatprep.subr.mxu0 %v832
  %1190 = vmatpush1.msra.mxu0 %v831
  %1191 = vmatprep.subr.mxu0 %v834
  %1192 = vmatpush1.msra.mxu0 %v833
  %1193 = vmatprep.subr.mxu0 %v836
  %1194 = vmatpush1.msra.mxu0 %v835
  %1195 = vmatprep.subr.mxu0 %v838
  %1196 = vmatpush1.msra.mxu0 %v837
  %1197 = vmatprep.subr.mxu0 %v840
  %1198 = vmatpush1.msra.mxu0 %v839
  %1199 = vmatprep.subr.mxu0 %v842
  %1200 = vmatpush1.msra.mxu0 %v841
  %1201 = vmatprep.subr.mxu0 %v844
  %1202 = vmatpush1.msra.mxu0 %v843
  %1203 = vmatprep.subr.mxu0 %v846
  %1204 = vmatpush1.msra.mxu0 %v845
  %1205 = vmatprep.subr.mxu0 %v848
  %1206 = vmatpush1.msra.mxu0 %v847
  %1207 = vmatprep.subr.mxu0 %v850
  %1208 = vmatpush1.msra.mxu0 %v849
  %1209 = vmatprep.subr.mxu0 %v852
  %1210 = vmatpush1.msra.mxu0 %v851
  %1211 = vmatprep.subr.mxu0 %v854
  %1212 = vmatpush1.msra.mxu0 %v853
  %1213 = vmatprep.subr.mxu0 0.0
  %1214 = vmatpush1.msra.mxu0 0.0
  %1215 = vmatprep.subr.mxu0 0.0
  %1216 = vmatpush1.msra.mxu0 0.0
  %1217 = vmatprep.subr.mxu0 0.0
  %1218 = vmatpush1.msra.mxu0 0.0
  %1219 = vmatprep.subr.mxu0 0.0
  %1220 = vmatpush1.msra.mxu0 0.0
  %1221 = vmatprep.mubr.f32.mxu0 %v867
  %1222 = vmatmul.mubr.f32.gmra.mrb[0].mxu0 %v707
  %v1223 = vpop.f32.mrb[0].mxu0
  %v1224 = vadd.f32 %v991, %v1223
  %v1225 = vpop.f32.mrb[0].mxu0
  %v1226 = vadd.f32 %v993, %v1225
  %1227 = vmatprep.mubr.f32.mxu0 %v869
  %1228 = vmatmul.mubr.f32.gmra.mrb[0].mxu0 %v708
  %v1229 = vpop.f32.mrb[0].mxu0
  %v1230 = vadd.f32 %v997, %v1229
  %v1231 = vpop.f32.mrb[0].mxu0
  %v1232 = vadd.f32 %v999, %v1231
  %1233 = vmatprep.mubr.f32.mxu0 %v871
  %1234 = vmatmul.mubr.f32.gmra.mrb[0].mxu0 %v709
  %v1235 = vpop.f32.mrb[0].mxu0
  %v1236 = vadd.f32 %v1003, %v1235
  %v1237 = vpop.f32.mrb[0].mxu0
  %v1238 = vadd.f32 %v1005, %v1237
  %1239 = vmatprep.mubr.f32.mxu0 %v873
  %1240 = vmatmul.mubr.f32.gmra.mrb[0].mxu0 %v710
  %v1241 = vpop.f32.mrb[0].mxu0
  %v1242 = vadd.f32 %v1009, %v1241
  %v1243 = vpop.f32.mrb[0].mxu0
  %v1244 = vadd.f32 %v1011, %v1243
  %1245 = vmatprep.mubr.f32.mxu0 %v875
  %1246 = vmatmul.mubr.f32.gmra.mrb[0].mxu0 %v711
  %v1247 = vpop.f32.mrb[0].mxu0
  %v1248 = vadd.f32 %v1015, %v1247
  %v1249 = vpop.f32.mrb[0].mxu0
  %v1250 = vadd.f32 %v1017, %v1249
  %1251 = vmatprep.mubr.f32.mxu0 %v877
  %1252 = vmatmul.mubr.f32.gmra.mrb[0].mxu0 %v712
  %v1253 = vpop.f32.mrb[0].mxu0
  %v1254 = vadd.f32 %v1021, %v1253
  %v1255 = vpop.f32.mrb[0].mxu0
  %v1256 = vadd.f32 %v1023, %v1255
  %1257 = vmatprep.mubr.f32.mxu0 %v879
  %1258 = vmatmul.mubr.f32.gmra.mrb[0].mxu0 %v713
  %v1259 = vpop.f32.mrb[0].mxu0
  %v1260 = vadd.f32 %v1027, %v1259
  %v1261 = vpop.f32.mrb[0].mxu0
  %v1262 = vadd.f32 %v1029, %v1261
  %1263 = vmatprep.mubr.f32.mxu0 %v881
  %1264 = vmatmul.mubr.f32.gmra.mrb[0].mxu0 %v714
  %v1265 = vpop.f32.mrb[0].mxu0
  %v1266 = vadd.f32 %v1033, %v1265
  %v1267 = vpop.f32.mrb[0].mxu0
  %v1268 = vadd.f32 %v1035, %v1267
  %1269 = vmatprep.mubr.f32.mxu0 %v883
  %1270 = vmatmul.mubr.f32.gmra.mrb[0].mxu0 %v715
  %v1271 = vpop.f32.mrb[0].mxu0
  %v1272 = vadd.f32 %v1039, %v1271
  %v1273 = vpop.f32.mrb[0].mxu0
  %v1274 = vadd.f32 %v1041, %v1273
  %1275 = vmatprep.mubr.f32.mxu0 %v885
  %1276 = vmatmul.mubr.f32.gmra.mrb[0].mxu0 %v716
  %v1277 = vpop.f32.mrb[0].mxu0
  %v1278 = vadd.f32 %v1045, %v1277
  %v1279 = vpop.f32.mrb[0].mxu0
  %v1280 = vadd.f32 %v1047, %v1279
  %1281 = vmatprep.mubr.f32.mxu0 %v887
  %1282 = vmatmul.mubr.f32.gmra.mrb[0].mxu0 %v717
  %v1283 = vpop.f32.mrb[0].mxu0
  %v1284 = vadd.f32 %v1051, %v1283
  %v1285 = vpop.f32.mrb[0].mxu0
  %v1286 = vadd.f32 %v1053, %v1285
  %1287 = vmatprep.mubr.f32.mxu0 %v889
  %1288 = vmatmul.mubr.f32.gmra.mrb[0].mxu0 %v718
  %v1289 = vpop.f32.mrb[0].mxu0
  %v1290 = vadd.f32 %v1057, %v1289
  %v1291 = vpop.f32.mrb[0].mxu0
  %v1292 = vadd.f32 %v1059, %v1291
  %1293 = vmatprep.mubr.f32.mxu0 %v891
  %1294 = vmatmul.mubr.f32.gmra.mrb[0].mxu0 %v719
  %v1295 = vpop.f32.mrb[0].mxu0
  %v1296 = vadd.f32 %v1063, %v1295
  %v1297 = vpop.f32.mrb[0].mxu0
  %v1298 = vadd.f32 %v1065, %v1297
  %1299 = vmatprep.mubr.f32.mxu0 %v893
  %1300 = vmatmul.mubr.f32.gmra.mrb[0].mxu0 %v720
  %v1301 = vpop.f32.mrb[0].mxu0
  %v1302 = vadd.f32 %v1069, %v1301
  %v1303 = vpop.f32.mrb[0].mxu0
  %v1304 = vadd.f32 %v1071, %v1303
  %1305 = vmatprep.mubr.f32.mxu0 %v895
  %1306 = vmatmul.mubr.f32.gmra.mrb[0].mxu0 %v721
  %v1307 = vpop.f32.mrb[0].mxu0
  %v1308 = vadd.f32 %v1075, %v1307
  %v1309 = vpop.f32.mrb[0].mxu0
  %v1310 = vadd.f32 %v1077, %v1309
  %1311 = vmatprep.mubr.f32.mxu0 %v897
  %1312 = vmatmul.mubr.f32.gmra.mrb[0].mxu0 %v722
  %v1313 = vpop.f32.mrb[0].mxu0
  %v1314 = vadd.f32 %v1081, %v1313
  %v1315 = vpop.f32.mrb[0].mxu0
  %v1316 = vadd.f32 %v1083, %v1315
  %1317 = vmatprep.mubr.f32.mxu0 %v899
  %1318 = vmatmul.mubr.f32.gmra.mrb[0].mxu0 %v723
  %v1319 = vpop.f32.mrb[0].mxu0
  %v1320 = vadd.f32 %v1087, %v1319
  %v1321 = vpop.f32.mrb[0].mxu0
  %v1322 = vadd.f32 %v1089, %v1321
  %1323 = vmatprep.mubr.f32.mxu0 %v901
  %1324 = vmatmul.mubr.f32.gmra.mrb[0].mxu0 %v724
  %v1325 = vpop.f32.mrb[0].mxu0
  %v1326 = vadd.f32 %v1093, %v1325
  %v1327 = vpop.f32.mrb[0].mxu0
  %v1328 = vadd.f32 %v1095, %v1327
  %1329 = vmatprep.mubr.f32.mxu0 %v903
  %1330 = vmatmul.mubr.f32.gmra.mrb[0].mxu0 %v725
  %v1331 = vpop.f32.mrb[0].mxu0
  %v1332 = vadd.f32 %v1099, %v1331
  %v1333 = vpop.f32.mrb[0].mxu0
  %v1334 = vadd.f32 %v1101, %v1333
  %1335 = vmatprep.mubr.f32.mxu0 %v905
  %1336 = vmatmul.mubr.f32.gmra.mrb[0].mxu0 %v726
  %v1337 = vpop.f32.mrb[0].mxu0
  %v1338 = vadd.f32 %v1105, %v1337
  %v1339 = vpop.f32.mrb[0].mxu0
  %v1340 = vadd.f32 %v1107, %v1339
  %1341 = vmatprep.mubr.f32.mxu0 %v907
  %1342 = vmatmul.mubr.f32.gmra.mrb[0].mxu0 %v727
  %v1343 = vpop.f32.mrb[0].mxu0
  %v1344 = vadd.f32 %v1111, %v1343
  %v1345 = vpop.f32.mrb[0].mxu0
  %v1346 = vadd.f32 %v1113, %v1345
  %1347 = vmatprep.mubr.f32.mxu0 %v909
  %1348 = vmatmul.mubr.f32.gmra.mrb[0].mxu0 %v728
  %v1349 = vpop.f32.mrb[0].mxu0
  %v1350 = vadd.f32 %v1117, %v1349
  %v1351 = vpop.f32.mrb[0].mxu0
  %v1352 = vadd.f32 %v1119, %v1351
  %1353 = vmatprep.mubr.f32.mxu0 %v911
  %1354 = vmatmul.mubr.f32.gmra.mrb[0].mxu0 %v729
  %v1355 = vpop.f32.mrb[0].mxu0
  %v1356 = vadd.f32 %v1123, %v1355
  %v1357 = vpop.f32.mrb[0].mxu0
  %v1358 = vadd.f32 %v1125, %v1357
  %1359 = vmatprep.mubr.f32.mxu0 %v913
  %1360 = vmatmul.mubr.f32.gmra.mrb[0].mxu0 %v730
  %v1361 = vpop.f32.mrb[0].mxu0
  %v1362 = vadd.f32 %v1129, %v1361
  %v1363 = vpop.f32.mrb[0].mxu0
  %v1364 = vadd.f32 %v1131, %v1363
  %1365 = vmatprep.mubr.f32.mxu0 %v915
  %1366 = vmatmul.mubr.f32.gmra.mrb[0].mxu0 %v731
  %v1367 = vpop.f32.mrb[0].mxu0
  %v1368 = vadd.f32 %v1135, %v1367
  %v1369 = vpop.f32.mrb[0].mxu0
  %v1370 = vadd.f32 %v1137, %v1369
  %1371 = vmatprep.mubr.f32.mxu0 %v917
  %1372 = vmatmul.mubr.f32.gmra.mrb[0].mxu0 %v732
  %v1373 = vpop.f32.mrb[0].mxu0
  %v1374 = vadd.f32 %v1141, %v1373
  %v1375 = vpop.f32.mrb[0].mxu0
  %v1376 = vadd.f32 %v1143, %v1375
  %1377 = vmatprep.mubr.f32.mxu0 %v919
  %1378 = vmatmul.mubr.f32.gmra.mrb[0].mxu0 %v733
  %v1379 = vpop.f32.mrb[0].mxu0
  %v1380 = vadd.f32 %v1147, %v1379
  %v1381 = vpop.f32.mrb[0].mxu0
  %v1382 = vadd.f32 %v1149, %v1381
  %1383 = vmatprep.mubr.f32.mxu0 %v922
  %1384 = vmatmul.mubr.f32.gmra.mrb[0].mxu0 %v734
  %v1385 = vpop.f32.mrb[0].mxu0
  %v1386 = vadd.f32 %v1153, %v1385
  %v1387 = vpop.f32.mrb[0].mxu0
  %v1388 = vadd.f32 %v1155, %v1387
  %1389 = vdwg.mxu0
  %v1390 = vmax.f32 %v1224, 0.0
  %v1391 = vmax.f32 %v1226, 0.0
  %v1392 = vmax.f32 %v1230, 0.0
  %v1393 = vmax.f32 %v1232, 0.0
  %v1394 = vmax.f32 %v1236, 0.0
  %v1395 = vmax.f32 %v1238, 0.0
  %v1396 = vmax.f32 %v1242, 0.0
  %v1397 = vmax.f32 %v1244, 0.0
  %v1398 = vmax.f32 %v1248, 0.0
  %v1399 = vmax.f32 %v1250, 0.0
  %v1400 = vmax.f32 %v1254, 0.0
  %v1401 = vmax.f32 %v1256, 0.0
  %v1402 = vmax.f32 %v1260, 0.0
  %v1403 = vmax.f32 %v1262, 0.0
  %v1404 = vmax.f32 %v1266, 0.0
  %v1405 = vmax.f32 %v1268, 0.0
  %v1406 = vmax.f32 %v1272, 0.0
  %v1407 = vmax.f32 %v1274, 0.0
  %v1408 = vmax.f32 %v1278, 0.0
  %v1409 = vmax.f32 %v1280, 0.0
  %v1410 = vmax.f32 %v1284, 0.0
  %v1411 = vmax.f32 %v1286, 0.0
  %v1412 = vmax.f32 %v1290, 0.0
  %v1413 = vmax.f32 %v1292, 0.0
  %v1414 = vmax.f32 %v1296, 0.0
  %v1415 = vmax.f32 %v1298, 0.0
  %v1416 = vmax.f32 %v1302, 0.0
  %v1417 = vmax.f32 %v1304, 0.0
  %v1418 = vmax.f32 %v1308, 0.0
  %v1419 = vmax.f32 %v1310, 0.0
  %v1420 = vmax.f32 %v1314, 0.0
  %v1421 = vmax.f32 %v1316, 0.0
  %v1422 = vmax.f32 %v1320, 0.0
  %v1423 = vmax.f32 %v1322, 0.0
  %v1424 = vmax.f32 %v1326, 0.0
  %v1425 = vmax.f32 %v1328, 0.0
  %v1426 = vmax.f32 %v1332, 0.0
  %v1427 = vmax.f32 %v1334, 0.0
  %v1428 = vmax.f32 %v1338, 0.0
  %v1429 = vmax.f32 %v1340, 0.0
  %v1430 = vmax.f32 %v1344, 0.0
  %v1431 = vmax.f32 %v1346, 0.0
  %v1432 = vmax.f32 %v1350, 0.0
  %v1433 = vmax.f32 %v1352, 0.0
  %v1434 = vmax.f32 %v1356, 0.0
  %v1435 = vmax.f32 %v1358, 0.0
  %v1436 = vmax.f32 %v1362, 0.0
  %v1437 = vmax.f32 %v1364, 0.0
  %v1438 = vmax.f32 %v1368, 0.0
  %v1439 = vmax.f32 %v1370, 0.0
  %v1440 = vmax.f32 %v1374, 0.0
  %v1441 = vmax.f32 %v1376, 0.0
  %v1442 = vmax.f32 %v1380, 0.0
  %v1443 = vmax.f32 %v1382, 0.0
  %v1444 = vmax.f32 %v1386, 0.0
  %v1445 = vmax.f32 %v1388, 0.0
  %1502 = vrot.lane.b32.xlu0 %v1390, 127
  %v1503 = vpop.permute.xlu0 %1502
  %1504 = vrot.lane.b32.xlu0 %v1391, 127
  %v1505 = vpop.permute.xlu0 %1504
  %1506 = vrot.lane.b32.xlu0 %v1392, 127
  %v1507 = vpop.permute.xlu0 %1506
  %1508 = vrot.lane.b32.xlu0 %v1393, 127
  %v1509 = vpop.permute.xlu0 %1508
  %1510 = vrot.lane.b32.xlu0 %v1394, 127
  %v1511 = vpop.permute.xlu0 %1510
  %1512 = vrot.lane.b32.xlu0 %v1395, 127
  %v1513 = vpop.permute.xlu0 %1512
  %1514 = vrot.lane.b32.xlu0 %v1396, 127
  %v1515 = vpop.permute.xlu0 %1514
  %1516 = vrot.lane.b32.xlu0 %v1397, 127
  %v1517 = vpop.permute.xlu0 %1516
  %1518 = vrot.lane.b32.xlu0 %v1398, 127
  %v1519 = vpop.permute.xlu0 %1518
  %1520 = vrot.lane.b32.xlu0 %v1399, 127
  %v1521 = vpop.permute.xlu0 %1520
  %1522 = vrot.lane.b32.xlu0 %v1400, 127
  %v1523 = vpop.permute.xlu0 %1522
  %1524 = vrot.lane.b32.xlu0 %v1401, 127
  %v1525 = vpop.permute.xlu0 %1524
  %1526 = vrot.lane.b32.xlu0 %v1402, 127
  %v1527 = vpop.permute.xlu0 %1526
  %1528 = vrot.lane.b32.xlu0 %v1403, 127
  %v1529 = vpop.permute.xlu0 %1528
  %1530 = vrot.lane.b32.xlu0 %v1404, 127
  %v1531 = vpop.permute.xlu0 %1530
  %1532 = vrot.lane.b32.xlu0 %v1405, 127
  %v1533 = vpop.permute.xlu0 %1532
  %1534 = vrot.lane.b32.xlu0 %v1406, 127
  %v1535 = vpop.permute.xlu0 %1534
  %1536 = vrot.lane.b32.xlu0 %v1407, 127
  %v1537 = vpop.permute.xlu0 %1536
  %1538 = vrot.lane.b32.xlu0 %v1408, 127
  %v1539 = vpop.permute.xlu0 %1538
  %1540 = vrot.lane.b32.xlu0 %v1409, 127
  %v1541 = vpop.permute.xlu0 %1540
  %1542 = vrot.lane.b32.xlu0 %v1410, 127
  %v1543 = vpop.permute.xlu0 %1542
  %1544 = vrot.lane.b32.xlu0 %v1411, 127
  %v1545 = vpop.permute.xlu0 %1544
  %1546 = vrot.lane.b32.xlu0 %v1412, 127
  %v1547 = vpop.permute.xlu0 %1546
  %1548 = vrot.lane.b32.xlu0 %v1413, 127
  %v1549 = vpop.permute.xlu0 %1548
  %1550 = vrot.lane.b32.xlu0 %v1414, 127
  %v1551 = vpop.permute.xlu0 %1550
  %1552 = vrot.lane.b32.xlu0 %v1415, 127
  %v1553 = vpop.permute.xlu0 %1552
  %1554 = vrot.lane.b32.xlu0 %v1416, 127
  %v1555 = vpop.permute.xlu0 %1554
  %1556 = vrot.lane.b32.xlu0 %v1417, 127
  %v1557 = vpop.permute.xlu0 %1556
  %1558 = vrot.lane.b32.xlu0 %v1418, 127
  %v1559 = vpop.permute.xlu0 %1558
  %1560 = vrot.lane.b32.xlu0 %v1419, 127
  %v1561 = vpop.permute.xlu0 %1560
  %1562 = vrot.lane.b32.xlu0 %v1420, 127
  %v1563 = vpop.permute.xlu0 %1562
  %1564 = vrot.lane.b32.xlu0 %v1421, 127
  %v1565 = vpop.permute.xlu0 %1564
  %1566 = vrot.lane.b32.xlu0 %v1422, 127
  %v1567 = vpop.permute.xlu0 %1566
  %1568 = vrot.lane.b32.xlu0 %v1423, 127
  %v1569 = vpop.permute.xlu0 %1568
  %1570 = vrot.lane.b32.xlu0 %v1424, 127
  %v1571 = vpop.permute.xlu0 %1570
  %1572 = vrot.lane.b32.xlu0 %v1425, 127
  %v1573 = vpop.permute.xlu0 %1572
  %1574 = vrot.lane.b32.xlu0 %v1426, 127
  %v1575 = vpop.permute.xlu0 %1574
  %1576 = vrot.lane.b32.xlu0 %v1427, 127
  %v1577 = vpop.permute.xlu0 %1576
  %1578 = vrot.lane.b32.xlu0 %v1428, 127
  %v1579 = vpop.permute.xlu0 %1578
  %1580 = vrot.lane.b32.xlu0 %v1429, 127
  %v1581 = vpop.permute.xlu0 %1580
  %1582 = vrot.lane.b32.xlu0 %v1430, 127
  %v1583 = vpop.permute.xlu0 %1582
  %1584 = vrot.lane.b32.xlu0 %v1431, 127
  %v1585 = vpop.permute.xlu0 %1584
  %1586 = vrot.lane.b32.xlu0 %v1432, 127
  %v1587 = vpop.permute.xlu0 %1586
  %1588 = vrot.lane.b32.xlu0 %v1433, 127
  %v1589 = vpop.permute.xlu0 %1588
  %1590 = vrot.lane.b32.xlu0 %v1434, 127
  %v1591 = vpop.permute.xlu0 %1590
  %1592 = vrot.lane.b32.xlu0 %v1435, 127
  %v1593 = vpop.permute.xlu0 %1592
  %1594 = vrot.lane.b32.xlu0 %v1436, 127
  %v1595 = vpop.permute.xlu0 %1594
  %1596 = vrot.lane.b32.xlu0 %v1437, 127
  %v1597 = vpop.permute.xlu0 %1596
  %1598 = vrot.lane.b32.xlu0 %v1438, 127
  %v1599 = vpop.permute.xlu0 %1598
  %1600 = vrot.lane.b32.xlu0 %v1439, 127
  %v1601 = vpop.permute.xlu0 %1600
  %1602 = vrot.lane.b32.xlu0 %v1440, 127
  %v1603 = vpop.permute.xlu0 %1602
  %1604 = vrot.lane.b32.xlu0 %v1441, 127
  %v1605 = vpop.permute.xlu0 %1604
  %1606 = vrot.lane.b32.xlu0 %v1442, 127
  %v1607 = vpop.permute.xlu0 %1606
  %1608 = vrot.lane.b32.xlu0 %v1443, 127
  %v1609 = vpop.permute.xlu0 %1608
  %1610 = vrot.lane.b32.xlu0 %v1444, 127
  %v1611 = vpop.permute.xlu0 %1610
  %1612 = vrot.lane.b32.xlu0 %v1445, 127
  %v1613 = vpop.permute.xlu0 %1612
  %vm1614 = vcmask 1039360
  %v1615 = vsel %vm1614, %v1503, %v1505
  %v1616 = vsel %vm1614, %v1507, %v1509
  %v1617 = vsel %vm1614, %v1511, %v1513
  %v1618 = vsel %vm1614, %v1515, %v1517
  %v1619 = vsel %vm1614, %v1519, %v1521
  %v1620 = vsel %vm1614, %v1523, %v1525
  %v1621 = vsel %vm1614, %v1527, %v1529
  %v1622 = vsel %vm1614, %v1531, %v1533
  %v1623 = vsel %vm1614, %v1535, %v1537
  %v1624 = vsel %vm1614, %v1539, %v1541
  %v1625 = vsel %vm1614, %v1543, %v1545
  %v1626 = vsel %vm1614, %v1547, %v1549
  %v1627 = vsel %vm1614, %v1551, %v1553
  %v1628 = vsel %vm1614, %v1555, %v1557
  %v1629 = vsel %vm1614, %v1559, %v1561
  %v1630 = vsel %vm1614, %v1563, %v1565
  %v1631 = vsel %vm1614, %v1567, %v1569
  %v1632 = vsel %vm1614, %v1571, %v1573
  %v1633 = vsel %vm1614, %v1575, %v1577
  %v1634 = vsel %vm1614, %v1579, %v1581
  %v1635 = vsel %vm1614, %v1583, %v1585
  %v1636 = vsel %vm1614, %v1587, %v1589
  %v1637 = vsel %vm1614, %v1591, %v1593
  %v1638 = vsel %vm1614, %v1595, %v1597
  %v1639 = vsel %vm1614, %v1599, %v1601
  %v1640 = vsel %vm1614, %v1603, %v1605
  %v1641 = vsel %vm1614, %v1607, %v1609
  %v1642 = vsel %vm1614, %v1611, %v1613
  %v1699 = vmax.f32 %v1390, %v1615
  %v1700 = vmax.f32 %v1391, %v1505
  %v1701 = vmax.f32 %v1392, %v1616
  %v1702 = vmax.f32 %v1393, %v1509
  %v1703 = vmax.f32 %v1394, %v1617
  %v1704 = vmax.f32 %v1395, %v1513
  %v1705 = vmax.f32 %v1396, %v1618
  %v1706 = vmax.f32 %v1397, %v1517
  %v1707 = vmax.f32 %v1398, %v1619
  %v1708 = vmax.f32 %v1399, %v1521
  %v1709 = vmax.f32 %v1400, %v1620
  %v1710 = vmax.f32 %v1401, %v1525
  %v1711 = vmax.f32 %v1402, %v1621
  %v1712 = vmax.f32 %v1403, %v1529
  %v1713 = vmax.f32 %v1404, %v1622
  %v1714 = vmax.f32 %v1405, %v1533
  %v1715 = vmax.f32 %v1406, %v1623
  %v1716 = vmax.f32 %v1407, %v1537
  %v1717 = vmax.f32 %v1408, %v1624
  %v1718 = vmax.f32 %v1409, %v1541
  %v1719 = vmax.f32 %v1410, %v1625
  %v1720 = vmax.f32 %v1411, %v1545
  %v1721 = vmax.f32 %v1412, %v1626
  %v1722 = vmax.f32 %v1413, %v1549
  %v1723 = vmax.f32 %v1414, %v1627
  %v1724 = vmax.f32 %v1415, %v1553
  %v1725 = vmax.f32 %v1416, %v1628
  %v1726 = vmax.f32 %v1417, %v1557
  %v1727 = vmax.f32 %v1418, %v1629
  %v1728 = vmax.f32 %v1419, %v1561
  %v1729 = vmax.f32 %v1420, %v1630
  %v1730 = vmax.f32 %v1421, %v1565
  %v1731 = vmax.f32 %v1422, %v1631
  %v1732 = vmax.f32 %v1423, %v1569
  %v1733 = vmax.f32 %v1424, %v1632
  %v1734 = vmax.f32 %v1425, %v1573
  %v1735 = vmax.f32 %v1426, %v1633
  %v1736 = vmax.f32 %v1427, %v1577
  %v1737 = vmax.f32 %v1428, %v1634
  %v1738 = vmax.f32 %v1429, %v1581
  %v1739 = vmax.f32 %v1430, %v1635
  %v1740 = vmax.f32 %v1431, %v1585
  %v1741 = vmax.f32 %v1432, %v1636
  %v1742 = vmax.f32 %v1433, %v1589
  %v1743 = vmax.f32 %v1434, %v1637
  %v1744 = vmax.f32 %v1435, %v1593
  %v1745 = vmax.f32 %v1436, %v1638
  %v1746 = vmax.f32 %v1437, %v1597
  %v1747 = vmax.f32 %v1438, %v1639
  %v1748 = vmax.f32 %v1439, %v1601
  %v1749 = vmax.f32 %v1440, %v1640
  %v1750 = vmax.f32 %v1441, %v1605
  %v1751 = vmax.f32 %v1442, %v1641
  %v1752 = vmax.f32 %v1443, %v1609
  %v1753 = vmax.f32 %v1444, %v1642
  %v1754 = vmax.f32 %v1445, %v1613
  %v1755 = vmax.f32 %v1699, %v1701
  %v1756 = vmax.f32 %v1700, %v1702
  %v1757 = vmax.f32 %v1703, %v1705
  %v1758 = vmax.f32 %v1704, %v1706
  %v1759 = vmax.f32 %v1707, %v1709
  %v1760 = vmax.f32 %v1708, %v1710
  %v1761 = vmax.f32 %v1711, %v1713
  %v1762 = vmax.f32 %v1712, %v1714
  %v1763 = vmax.f32 %v1715, %v1717
  %v1764 = vmax.f32 %v1716, %v1718
  %v1765 = vmax.f32 %v1719, %v1721
  %v1766 = vmax.f32 %v1720, %v1722
  %v1767 = vmax.f32 %v1723, %v1725
  %v1768 = vmax.f32 %v1724, %v1726
  %v1769 = vmax.f32 %v1727, %v1729
  %v1770 = vmax.f32 %v1728, %v1730
  %v1771 = vmax.f32 %v1731, %v1733
  %v1772 = vmax.f32 %v1732, %v1734
  %v1773 = vmax.f32 %v1735, %v1737
  %v1774 = vmax.f32 %v1736, %v1738
  %v1775 = vmax.f32 %v1739, %v1741
  %v1776 = vmax.f32 %v1740, %v1742
  %v1777 = vmax.f32 %v1743, %v1745
  %v1778 = vmax.f32 %v1744, %v1746
  %v1779 = vmax.f32 %v1747, %v1749
  %v1780 = vmax.f32 %v1748, %v1750
  %v1781 = vmax.f32 %v1751, %v1753
  %v1782 = vmax.f32 %v1752, %v1754
  %1803 = vrot.lane.b32.xlu0 %v1757, 39
  %v1804 = vpop.permute.xlu0 %1803
  %1805 = vrot.lane.b32.xlu0 %v1758, 39
  %v1806 = vpop.permute.xlu0 %1805
  %1807 = vrot.lane.b32.xlu0 %v1759, 39
  %v1808 = vpop.permute.xlu0 %1807
  %1809 = vrot.lane.b32.xlu0 %v1760, 39
  %v1810 = vpop.permute.xlu0 %1809
  %1811 = vrot.lane.b32.xlu0 %v1761, 39
  %v1812 = vpop.permute.xlu0 %1811
  %1813 = vrot.lane.b32.xlu0 %v1762, 39
  %v1814 = vpop.permute.xlu0 %1813
  %1815 = vrot.lane.b32.xlu0 %v1763, 39
  %v1816 = vpop.permute.xlu0 %1815
  %1817 = vrot.lane.b32.xlu0 %v1764, 39
  %v1818 = vpop.permute.xlu0 %1817
  %1819 = vrot.lane.b32.xlu0 %v1765, 39
  %v1820 = vpop.permute.xlu0 %1819
  %1821 = vrot.lane.b32.xlu0 %v1766, 39
  %v1822 = vpop.permute.xlu0 %1821
  %1823 = vrot.lane.b32.xlu0 %v1767, 39
  %v1824 = vpop.permute.xlu0 %1823
  %1825 = vrot.lane.b32.xlu0 %v1768, 39
  %v1826 = vpop.permute.xlu0 %1825
  %1827 = vrot.lane.b32.xlu0 %v1769, 39
  %v1828 = vpop.permute.xlu0 %1827
  %1829 = vrot.lane.b32.xlu0 %v1770, 39
  %v1830 = vpop.permute.xlu0 %1829
  %1831 = vrot.lane.b32.xlu0 %v1771, 39
  %v1832 = vpop.permute.xlu0 %1831
  %1833 = vrot.lane.b32.xlu0 %v1772, 39
  %v1834 = vpop.permute.xlu0 %1833
  %1835 = vrot.lane.b32.xlu0 %v1773, 39
  %v1836 = vpop.permute.xlu0 %1835
  %1837 = vrot.lane.b32.xlu0 %v1774, 39
  %v1838 = vpop.permute.xlu0 %1837
  %1839 = vrot.lane.b32.xlu0 %v1775, 39
  %v1840 = vpop.permute.xlu0 %1839
  %1841 = vrot.lane.b32.xlu0 %v1776, 39
  %v1842 = vpop.permute.xlu0 %1841
  %vm1843 = vcmask 318464
  %v1844 = vsel %vm1843, %v1804, %v1806
  %v1845 = vsel %vm1843, %v1808, %v1810
  %v1846 = vsel %vm1843, %v1812, %v1814
  %v1847 = vsel %vm1843, %v1816, %v1818
  %v1848 = vsel %vm1843, %v1820, %v1822
  %v1849 = vsel %vm1843, %v1824, %v1826
  %v1850 = vsel %vm1843, %v1828, %v1830
  %v1851 = vsel %vm1843, %v1832, %v1834
  %v1852 = vsel %vm1843, %v1836, %v1838
  %v1853 = vsel %vm1843, %v1840, %v1842
  %1876 = vrot.lane.b32.xlu0 %v1759, 78
  %v1877 = vpop.permute.xlu0 %1876
  %1878 = vrot.lane.b32.xlu0 %v1760, 78
  %v1879 = vpop.permute.xlu0 %1878
  %1880 = vrot.lane.b32.xlu0 %v1761, 78
  %v1881 = vpop.permute.xlu0 %1880
  %1882 = vrot.lane.b32.xlu0 %v1762, 78
  %v1883 = vpop.permute.xlu0 %1882
  %1884 = vrot.lane.b32.xlu0 %v1763, 78
  %v1885 = vpop.permute.xlu0 %1884
  %1886 = vrot.lane.b32.xlu0 %v1764, 78
  %v1887 = vpop.permute.xlu0 %1886
  %1888 = vrot.lane.b32.xlu0 %v1765, 78
  %v1889 = vpop.permute.xlu0 %1888
  %1890 = vrot.lane.b32.xlu0 %v1766, 78
  %v1891 = vpop.permute.xlu0 %1890
  %1892 = vrot.lane.b32.xlu0 %v1767, 78
  %v1893 = vpop.permute.xlu0 %1892
  %1894 = vrot.lane.b32.xlu0 %v1768, 78
  %v1895 = vpop.permute.xlu0 %1894
  %1896 = vrot.lane.b32.xlu0 %v1769, 78
  %v1897 = vpop.permute.xlu0 %1896
  %1898 = vrot.lane.b32.xlu0 %v1770, 78
  %v1899 = vpop.permute.xlu0 %1898
  %1900 = vrot.lane.b32.xlu0 %v1771, 78
  %v1901 = vpop.permute.xlu0 %1900
  %1902 = vrot.lane.b32.xlu0 %v1772, 78
  %v1903 = vpop.permute.xlu0 %1902
  %1904 = vrot.lane.b32.xlu0 %v1773, 78
  %v1905 = vpop.permute.xlu0 %1904
  %1906 = vrot.lane.b32.xlu0 %v1774, 78
  %v1907 = vpop.permute.xlu0 %1906
  %1908 = vrot.lane.b32.xlu0 %v1775, 78
  %v1909 = vpop.permute.xlu0 %1908
  %1910 = vrot.lane.b32.xlu0 %v1776, 78
  %v1911 = vpop.permute.xlu0 %1910
  %1912 = vrot.lane.b32.xlu0 %v1777, 78
  %v1913 = vpop.permute.xlu0 %1912
  %1914 = vrot.lane.b32.xlu0 %v1778, 78
  %v1915 = vpop.permute.xlu0 %1914
  %vm1916 = vcmask 637952
  %v1917 = vsel %vm1916, %v1877, %v1879
  %v1918 = vsel %vm1916, %v1881, %v1883
  %v1919 = vsel %vm1916, %v1885, %v1887
  %v1920 = vsel %vm1916, %v1889, %v1891
  %v1921 = vsel %vm1916, %v1893, %v1895
  %v1922 = vsel %vm1916, %v1897, %v1899
  %v1923 = vsel %vm1916, %v1901, %v1903
  %v1924 = vsel %vm1916, %v1905, %v1907
  %v1925 = vsel %vm1916, %v1909, %v1911
  %v1926 = vsel %vm1916, %v1913, %v1915
  %1949 = vrot.lane.b32.xlu0 %v1761, 117
  %v1950 = vpop.permute.xlu0 %1949
  %1951 = vrot.lane.b32.xlu0 %v1762, 117
  %v1952 = vpop.permute.xlu0 %1951
  %1953 = vrot.lane.b32.xlu0 %v1763, 117
  %v1954 = vpop.permute.xlu0 %1953
  %1955 = vrot.lane.b32.xlu0 %v1764, 117
  %v1956 = vpop.permute.xlu0 %1955
  %1957 = vrot.lane.b32.xlu0 %v1765, 117
  %v1958 = vpop.permute.xlu0 %1957
  %1959 = vrot.lane.b32.xlu0 %v1766, 117
  %v1960 = vpop.permute.xlu0 %1959
  %1961 = vrot.lane.b32.xlu0 %v1767, 117
  %v1962 = vpop.permute.xlu0 %1961
  %1963 = vrot.lane.b32.xlu0 %v1768, 117
  %v1964 = vpop.permute.xlu0 %1963
  %1965 = vrot.lane.b32.xlu0 %v1769, 117
  %v1966 = vpop.permute.xlu0 %1965
  %1967 = vrot.lane.b32.xlu0 %v1770, 117
  %v1968 = vpop.permute.xlu0 %1967
  %1969 = vrot.lane.b32.xlu0 %v1771, 117
  %v1970 = vpop.permute.xlu0 %1969
  %1971 = vrot.lane.b32.xlu0 %v1772, 117
  %v1972 = vpop.permute.xlu0 %1971
  %1973 = vrot.lane.b32.xlu0 %v1773, 117
  %v1974 = vpop.permute.xlu0 %1973
  %1975 = vrot.lane.b32.xlu0 %v1774, 117
  %v1976 = vpop.permute.xlu0 %1975
  %1977 = vrot.lane.b32.xlu0 %v1775, 117
  %v1978 = vpop.permute.xlu0 %1977
  %1979 = vrot.lane.b32.xlu0 %v1776, 117
  %v1980 = vpop.permute.xlu0 %1979
  %1981 = vrot.lane.b32.xlu0 %v1777, 117
  %v1982 = vpop.permute.xlu0 %1981
  %1983 = vrot.lane.b32.xlu0 %v1778, 117
  %v1984 = vpop.permute.xlu0 %1983
  %1985 = vrot.lane.b32.xlu0 %v1779, 117
  %v1986 = vpop.permute.xlu0 %1985
  %1987 = vrot.lane.b32.xlu0 %v1780, 117
  %v1988 = vpop.permute.xlu0 %1987
  %vm1989 = vcmask 957440
  %v1990 = vsel %vm1989, %v1950, %v1952
  %v1991 = vsel %vm1989, %v1954, %v1956
  %v1992 = vsel %vm1989, %v1958, %v1960
  %v1993 = vsel %vm1989, %v1962, %v1964
  %v1994 = vsel %vm1989, %v1966, %v1968
  %v1995 = vsel %vm1989, %v1970, %v1972
  %v1996 = vsel %vm1989, %v1974, %v1976
  %v1997 = vsel %vm1989, %v1978, %v1980
  %v1998 = vsel %vm1989, %v1982, %v1984
  %v1999 = vsel %vm1989, %v1986, %v1988
  %2032 = vrot.lane.b32.xlu0 %v1763, 28
  %v2033 = vpop.permute.xlu0 %2032
  %2034 = vrot.lane.b32.xlu0 %v1764, 28
  %v2035 = vpop.permute.xlu0 %2034
  %2036 = vrot.lane.b32.xlu0 %v1765, 28
  %v2037 = vpop.permute.xlu0 %2036
  %2038 = vrot.lane.b32.xlu0 %v1766, 28
  %v2039 = vpop.permute.xlu0 %2038
  %2040 = vrot.lane.b32.xlu0 %v1767, 28
  %v2041 = vpop.permute.xlu0 %2040
  %2042 = vrot.lane.b32.xlu0 %v1768, 28
  %v2043 = vpop.permute.xlu0 %2042
  %2044 = vrot.lane.b32.xlu0 %v1769, 28
  %v2045 = vpop.permute.xlu0 %2044
  %2046 = vrot.lane.b32.xlu0 %v1770, 28
  %v2047 = vpop.permute.xlu0 %2046
  %2048 = vrot.lane.b32.xlu0 %v1771, 28
  %v2049 = vpop.permute.xlu0 %2048
  %2050 = vrot.lane.b32.xlu0 %v1772, 28
  %v2051 = vpop.permute.xlu0 %2050
  %2052 = vrot.lane.b32.xlu0 %v1773, 28
  %v2053 = vpop.permute.xlu0 %2052
  %2054 = vrot.lane.b32.xlu0 %v1774, 28
  %v2055 = vpop.permute.xlu0 %2054
  %2056 = vrot.lane.b32.xlu0 %v1775, 28
  %v2057 = vpop.permute.xlu0 %2056
  %2058 = vrot.lane.b32.xlu0 %v1776, 28
  %v2059 = vpop.permute.xlu0 %2058
  %2060 = vrot.lane.b32.xlu0 %v1777, 28
  %v2061 = vpop.permute.xlu0 %2060
  %2062 = vrot.lane.b32.xlu0 %v1778, 28
  %v2063 = vpop.permute.xlu0 %2062
  %2064 = vrot.lane.b32.xlu0 %v1779, 28
  %v2065 = vpop.permute.xlu0 %2064
  %2066 = vrot.lane.b32.xlu0 %v1780, 28
  %v2067 = vpop.permute.xlu0 %2066
  %2068 = vrot.lane.b32.xlu0 %v1781, 28
  %v2069 = vpop.permute.xlu0 %2068
  %2070 = vrot.lane.b32.xlu0 %v1782, 28
  %v2071 = vpop.permute.xlu0 %2070
  %vm2072 = vcmask 228352
  %v2073 = vsel %vm2072, %v2033, %v2035
  %v2074 = vsel %vm2072, %v2037, %v2039
  %v2075 = vsel %vm2072, %v2041, %v2043
  %v2076 = vsel %vm2072, %v2045, %v2047
  %v2077 = vsel %vm2072, %v2049, %v2051
  %v2078 = vsel %vm2072, %v2053, %v2055
  %v2079 = vsel %vm2072, %v2057, %v2059
  %v2080 = vsel %vm2072, %v2061, %v2063
  %v2081 = vsel %vm2072, %v2065, %v2067
  %v2082 = vsel %vm2072, %v2069, %v2071
  %v2093 = vsel %vm1843, %v1756, %v1804
  %v2094 = vsel %vm1843, %v1758, %v1808
  %v2095 = vsel %vm1843, %v1760, %v1812
  %v2096 = vsel %vm1843, %v1762, %v1816
  %v2097 = vsel %vm1843, %v1764, %v1820
  %v2098 = vsel %vm1843, %v1766, %v1824
  %v2099 = vsel %vm1843, %v1768, %v1828
  %v2100 = vsel %vm1843, %v1770, %v1832
  %v2101 = vsel %vm1843, %v1772, %v1836
  %v2102 = vsel %vm1843, %v1774, %v1840
  %v2103 = vsel %vm1916, %v1844, %v1877
  %v2104 = vsel %vm1916, %v1845, %v1881
  %v2105 = vsel %vm1916, %v1846, %v1885
  %v2106 = vsel %vm1916, %v1847, %v1889
  %v2107 = vsel %vm1916, %v1848, %v1893
  %v2108 = vsel %vm1916, %v1849, %v1897
  %v2109 = vsel %vm1916, %v1850, %v1901
  %v2110 = vsel %vm1916, %v1851, %v1905
  %v2111 = vsel %vm1916, %v1852, %v1909
  %v2112 = vsel %vm1916, %v1853, %v1913
  %v2113 = vsel %vm1989, %v1917, %v1950
  %v2114 = vsel %vm1989, %v1918, %v1954
  %v2115 = vsel %vm1989, %v1919, %v1958
  %v2116 = vsel %vm1989, %v1920, %v1962
  %v2117 = vsel %vm1989, %v1921, %v1966
  %v2118 = vsel %vm1989, %v1922, %v1970
  %v2119 = vsel %vm1989, %v1923, %v1974
  %v2120 = vsel %vm1989, %v1924, %v1978
  %v2121 = vsel %vm1989, %v1925, %v1982
  %v2122 = vsel %vm1989, %v1926, %v1986
  %v2123 = vsel %vm2072, %v1952, %v2033
  %v2124 = vsel %vm2072, %v1956, %v2037
  %v2125 = vsel %vm2072, %v1960, %v2041
  %v2126 = vsel %vm2072, %v1964, %v2045
  %v2127 = vsel %vm2072, %v1968, %v2049
  %v2128 = vsel %vm2072, %v1972, %v2053
  %v2129 = vsel %vm2072, %v1976, %v2057
  %v2130 = vsel %vm2072, %v1980, %v2061
  %v2131 = vsel %vm2072, %v1984, %v2065
  %v2132 = vsel %vm2072, %v1988, %v2069
  %v2133 = vld [vmem:[%s3] sm:$0xff]
  %v2134 = vld [vmem:[%s3 + $0x8] sm:$0xff]
  %v2135 = vld [vmem:[%s3 + $0x10] sm:$0xff]
  %v2136 = vld [vmem:[%s3 + $0x18] sm:$0xff]
  %v2137 = vld [vmem:[%s3 + $0x20] sm:$0xff]
  %v2138 = vld [vmem:[%s3 + $0x28] sm:$0xff]
  %v2139 = vld [vmem:[%s3 + $0x30] sm:$0xff]
  %v2140 = vld [vmem:[%s3 + $0x38] sm:$0xff]
  %v2141 = vld [vmem:[%s3 + $0x40] sm:$0xff]
  %v2142 = vld [vmem:[%s3 + $0x48] sm:$0xff]
  %v2143 = vld [vmem:[%s3 + $0x50] sm:$0xff]
  %v2144 = vld [vmem:[%s3 + $0x58] sm:$0xff]
  %v2145 = vld [vmem:[%s3 + $0x60] sm:$0xff]
  %v2146 = vld [vmem:[%s3 + $0x68] sm:$0xff]
  %v2147 = vld [vmem:[%s3 + $0x70] sm:$0xff]
  %v2148 = vld [vmem:[%s3 + $0x78] sm:$0xff]
  %v2149 = vld [vmem:[%s3 + $0x80] sm:$0xff]
  %v2150 = vld [vmem:[%s3 + $0x88] sm:$0xff]
  %v2151 = vld [vmem:[%s3 + $0x90] sm:$0xff]
  %v2152 = vld [vmem:[%s3 + $0x98] sm:$0xff]
  %v2153 = vld [vmem:[%s3 + $0xa0] sm:$0xff]
  %v2154 = vld [vmem:[%s3 + $0xa8] sm:$0xff]
  %v2155 = vld [vmem:[%s3 + $0xb0] sm:$0xff]
  %v2156 = vld [vmem:[%s3 + $0xb8] sm:$0xff]
  %v2157 = vld [vmem:[%s3 + $0xc0] sm:$0xff]
  %v2158 = vld [vmem:[%s3 + $0xc8] sm:$0xff]
  %v2159 = vld [vmem:[%s3 + $0xd0] sm:$0xff]
  %v2160 = vld [vmem:[%s3 + $0xd8] sm:$0xff]
  %v2161 = vld [vmem:[%s3 + $0xe0] sm:$0xff]
  %v2162 = vld [vmem:[%s3 + $0xe8] sm:$0xff]
  %v2163 = vld [vmem:[%s3 + $0xf0] sm:$0xff]
  %v2164 = vld [vmem:[%s3 + $0xf8] sm:$0xff]
  %v2165 = vld [vmem:[%s3 + $0x100] sm:$0xff]
  %v2166 = vld [vmem:[%s3 + $0x108] sm:$0xff]
  %v2167 = vld [vmem:[%s3 + $0x110] sm:$0xff]
  %v2168 = vld [vmem:[%s3 + $0x118] sm:$0xff]
  %v2169 = vld [vmem:[%s3 + $0x120] sm:$0xff]
  %v2170 = vld [vmem:[%s3 + $0x128] sm:$0xff]
  %v2171 = vld [vmem:[%s3 + $0x130] sm:$0xff]
  %v2172 = vld [vmem:[%s3 + $0x138] sm:$0xff]
  %v2173 = vld [vmem:[%s3 + $0x140] sm:$0xff]
  %v2174 = vld [vmem:[%s3 + $0x148] sm:$0xff]
  %v2175 = vld [vmem:[%s3 + $0x150] sm:$0xff]
  %v2176 = vld [vmem:[%s3 + $0x158] sm:$0xff]
  %v2177 = vld [vmem:[%s3 + $0x160] sm:$0xff]
  %v2178 = vld [vmem:[%s3 + $0x168] sm:$0xff]
  %v2179 = vld [vmem:[%s3 + $0x170] sm:$0xff]
  %v2180 = vld [vmem:[%s3 + $0x178] sm:$0xff]
  %v2181 = vld [vmem:[%s3 + $0x180] sm:$0xff]
  %v2182 = vld [vmem:[%s3 + $0x188] sm:$0xff]
  %v2183 = vld [vmem:[%s3 + $0x190] sm:$0xff]
  %v2184 = vld [vmem:[%s3 + $0x198] sm:$0xff]
  %v2185 = vld [vmem:[%s3 + $0x1a0] sm:$0xff]
  %v2186 = vld [vmem:[%s3 + $0x1a8] sm:$0xff]
  %v2187 = vld [vmem:[%s3 + $0x1b0] sm:$0xff]
  %v2188 = vld [vmem:[%s3 + $0x1b8] sm:$0xff]
  %v2189 = vld [vmem:[%s3 + $0x1c0] sm:$0xff]
  %v2190 = vld [vmem:[%s3 + $0x1c8] sm:$0xff]
  %v2191 = vld [vmem:[%s3 + $0x1d0] sm:$0xff]
  %v2192 = vld [vmem:[%s3 + $0x1d8] sm:$0xff]
  %v2193 = vld [vmem:[%s3 + $0x1e0] sm:$0xff]
  %v2194 = vld [vmem:[%s3 + $0x1e8] sm:$0xff]
  %v2195 = vld [vmem:[%s3 + $0x1f0] sm:$0xff]
  %v2196 = vld [vmem:[%s3 + $0x1f8] sm:$0xff]
  %v2197 = vld [vmem:[%s3 + $0x200] sm:$0xff]
  %v2198 = vld [vmem:[%s3 + $0x208] sm:$0xff]
  %v2199 = vld [vmem:[%s3 + $0x210] sm:$0xff]
  %v2200 = vld [vmem:[%s3 + $0x218] sm:$0xff]
  %v2201 = vld [vmem:[%s3 + $0x220] sm:$0xff]
  %v2202 = vld [vmem:[%s3 + $0x228] sm:$0xff]
  %v2203 = vld [vmem:[%s3 + $0x230] sm:$0xff]
  %v2204 = vld [vmem:[%s3 + $0x238] sm:$0xff]
  %v2205 = vld [vmem:[%s3 + $0x240] sm:$0xff]
  %v2206 = vld [vmem:[%s3 + $0x248] sm:$0xff]
  %v2207 = vld [vmem:[%s3 + $0x250] sm:$0xff]
  %v2208 = vld [vmem:[%s3 + $0x258] sm:$0xff]
  %v2209 = vld [vmem:[%s3 + $0x260] sm:$0xff]
  %v2210 = vld [vmem:[%s3 + $0x268] sm:$0xff]
  %v2211 = vld [vmem:[%s3 + $0x270] sm:$0xff]
  %v2212 = vld [vmem:[%s3 + $0x278] sm:$0xff]
  %v2213 = vld [vmem:[%s3 + $0x280] sm:$0xff]
  %v2214 = vld [vmem:[%s3 + $0x288] sm:$0xff]
  %v2215 = vld [vmem:[%s3 + $0x290] sm:$0xff]
  %v2216 = vld [vmem:[%s3 + $0x298] sm:$0xff]
  %v2217 = vld [vmem:[%s3 + $0x2a0] sm:$0xff]
  %v2218 = vld [vmem:[%s3 + $0x2a8] sm:$0xff]
  %v2219 = vld [vmem:[%s3 + $0x2b0] sm:$0xff]
  %v2220 = vld [vmem:[%s3 + $0x2b8] sm:$0xff]
  %v2221 = vld [vmem:[%s3 + $0x2c0] sm:$0xff]
  %v2222 = vld [vmem:[%s3 + $0x2c8] sm:$0xff]
  %v2223 = vld [vmem:[%s3 + $0x2d0] sm:$0xff]
  %v2224 = vld [vmem:[%s3 + $0x2d8] sm:$0xff]
  %v2225 = vld [vmem:[%s3 + $0x2e0] sm:$0xff]
  %v2226 = vld [vmem:[%s3 + $0x2e8] sm:$0xff]
  %v2227 = vld [vmem:[%s3 + $0x2f0] sm:$0xff]
  %v2228 = vld [vmem:[%s3 + $0x2f8] sm:$0xff]
  %v2229 = vld [vmem:[%s3 + $0x300] sm:$0xff]
  %v2230 = vld [vmem:[%s3 + $0x308] sm:$0xff]
  %v2231 = vld [vmem:[%s3 + $0x310] sm:$0xff]
  %v2232 = vld [vmem:[%s3 + $0x318] sm:$0xff]
  %v2233 = vld [vmem:[%s3 + $0x320] sm:$0xff]
  %v2234 = vld [vmem:[%s3 + $0x328] sm:$0xff]
  %v2235 = vld [vmem:[%s3 + $0x330] sm:$0xff]
  %v2236 = vld [vmem:[%s3 + $0x338] sm:$0xff]
  %v2237 = vld [vmem:[%s3 + $0x340] sm:$0xff]
  %v2238 = vld [vmem:[%s3 + $0x348] sm:$0xff]
  %v2239 = vld [vmem:[%s3 + $0x350] sm:$0xff]
  %v2240 = vld [vmem:[%s3 + $0x358] sm:$0xff]
  %v2241 = vld [vmem:[%s3 + $0x360] sm:$0xff]
  %v2242 = vld [vmem:[%s3 + $0x368] sm:$0xff]
  %v2243 = vld [vmem:[%s3 + $0x370] sm:$0xff]
  %v2244 = vld [vmem:[%s3 + $0x378] sm:$0xff]
  %v2245 = vld [vmem:[%s3 + $0x380] sm:$0xff]
  %v2246 = vld [vmem:[%s3 + $0x388] sm:$0xff]
  %v2247 = vld [vmem:[%s3 + $0x390] sm:$0xff]
  %v2248 = vld [vmem:[%s3 + $0x398] sm:$0xff]
  %v2249 = vld [vmem:[%s3 + $0x3a0] sm:$0xff]
  %v2250 = vld [vmem:[%s3 + $0x3a8] sm:$0xff]
  %v2251 = vld [vmem:[%s3 + $0x3b0] sm:$0xff]
  %v2252 = vld [vmem:[%s3 + $0x3b8] sm:$0xff]
  %v2253 = vld [vmem:[%s3 + $0x3c0] sm:$0xff]
  %v2254 = vld [vmem:[%s3 + $0x3c8] sm:$0xff]
  %v2255 = vld [vmem:[%s3 + $0x3d0] sm:$0xff]
  %v2256 = vld [vmem:[%s3 + $0x3d8] sm:$0xff]
  %v2257 = vld [vmem:[%s3 + $0x3e0] sm:$0xff]
  %v2258 = vld [vmem:[%s3 + $0x3e8] sm:$0xff]
  %v2259 = vld [vmem:[%s3 + $0x3f0] sm:$0xff]
  %v2260 = vld [vmem:[%s3 + $0x3f8] sm:$0xff]
  %v2261 = vld [vmem:[%s3 + $0x400] sm:$0xff]
  %v2262 = vld [vmem:[%s3 + $0x408] sm:$0xff]
  %v2263 = vld [vmem:[%s3 + $0x410] sm:$0xff]
  %v2264 = vld [vmem:[%s3 + $0x418] sm:$0xff]
  %v2265 = vld [vmem:[%s3 + $0x420] sm:$0xff]
  %v2266 = vld [vmem:[%s3 + $0x428] sm:$0xff]
  %v2267 = vld [vmem:[%s3 + $0x430] sm:$0xff]
  %v2268 = vld [vmem:[%s3 + $0x438] sm:$0xff]
  %v2269 = vld [vmem:[%s3 + $0x440] sm:$0xff]
  %v2270 = vld [vmem:[%s3 + $0x448] sm:$0xff]
  %v2271 = vld [vmem:[%s3 + $0x450] sm:$0xff]
  %v2272 = vld [vmem:[%s3 + $0x458] sm:$0xff]
  %v2273 = vld [vmem:[%s3 + $0x460] sm:$0xff]
  %v2274 = vld [vmem:[%s3 + $0x468] sm:$0xff]
  %v2275 = vld [vmem:[%s3 + $0x470] sm:$0xff]
  %v2276 = vld [vmem:[%s3 + $0x478] sm:$0xff]
  %v2277 = vld [vmem:[%s3 + $0x480] sm:$0xff]
  %v2278 = vld [vmem:[%s3 + $0x488] sm:$0xff]
  %v2279 = vld [vmem:[%s3 + $0x490] sm:$0xff]
  %v2280 = vld [vmem:[%s3 + $0x498] sm:$0xff]
  %v2281 = vld [vmem:[%s3 + $0x4a0] sm:$0xff]
  %v2282 = vld [vmem:[%s3 + $0x4a8] sm:$0xff]
  %v2283 = vld [vmem:[%s3 + $0x4b0] sm:$0xff]
  %v2284 = vld [vmem:[%s3 + $0x4b8] sm:$0xff]
  %v2285 = vld [vmem:[%s3 + $0x4c0] sm:$0xff]
  %v2286 = vld [vmem:[%s3 + $0x4c8] sm:$0xff]
  %v2287 = vld [vmem:[%s3 + $0x4d0] sm:$0xff]
  %v2288 = vld [vmem:[%s3 + $0x4d8] sm:$0xff]
  %v2289 = vld [vmem:[%s3 + $0x4e0] sm:$0xff]
  %v2290 = vld [vmem:[%s3 + $0x4e8] sm:$0xff]
  %v2291 = vld [vmem:[%s3 + $0x4f0] sm:$0xff]
  %v2292 = vld [vmem:[%s3 + $0x4f8] sm:$0xff]
  %v2293 = vld [vmem:[%s3 + $0x500] sm:$0xff]
  %v2294 = vld [vmem:[%s3 + $0x508] sm:$0xff]
  %v2295 = vld [vmem:[%s3 + $0x510] sm:$0xff]
  %v2296 = vld [vmem:[%s3 + $0x518] sm:$0xff]
  %v2297 = vld [vmem:[%s3 + $0x520] sm:$0xff]
  %v2298 = vld [vmem:[%s3 + $0x528] sm:$0xff]
  %v2299 = vld [vmem:[%s3 + $0x530] sm:$0xff]
  %v2300 = vld [vmem:[%s3 + $0x538] sm:$0xff]
  %v2301 = vld [vmem:[%s3 + $0x540] sm:$0xff]
  %v2302 = vld [vmem:[%s3 + $0x548] sm:$0xff]
  %v2303 = vld [vmem:[%s3 + $0x550] sm:$0xff]
  %v2304 = vld [vmem:[%s3 + $0x558] sm:$0xff]
  %v2305 = vld [vmem:[%s3 + $0x560] sm:$0xff]
  %v2306 = vld [vmem:[%s3 + $0x568] sm:$0xff]
  %v2307 = vld [vmem:[%s3 + $0x570] sm:$0xff]
  %v2308 = vld [vmem:[%s3 + $0x578] sm:$0xff]
  %v2309 = vld [vmem:[%s3 + $0x580] sm:$0xff]
  %v2310 = vld [vmem:[%s3 + $0x588] sm:$0xff]
  %v2311 = vld [vmem:[%s3 + $0x590] sm:$0xff]
  %v2312 = vld [vmem:[%s3 + $0x598] sm:$0xff]
  %v2313 = vld [vmem:[%s3 + $0x5a0] sm:$0xff]
  %v2314 = vld [vmem:[%s3 + $0x5a8] sm:$0xff]
  %v2315 = vld [vmem:[%s3 + $0x5b0] sm:$0xff]
  %v2316 = vld [vmem:[%s3 + $0x5b8] sm:$0xff]
  %v2317 = vld [vmem:[%s3 + $0x5c0] sm:$0xff]
  %v2318 = vld [vmem:[%s3 + $0x5c8] sm:$0xff]
  %v2319 = vld [vmem:[%s3 + $0x5d0] sm:$0xff]
  %v2320 = vld [vmem:[%s3 + $0x5d8] sm:$0xff]
  %v2321 = vld [vmem:[%s3 + $0x5e0] sm:$0xff]
  %v2322 = vld [vmem:[%s3 + $0x5e8] sm:$0xff]
  %v2323 = vld [vmem:[%s3 + $0x5f0] sm:$0xff]
  %v2324 = vld [vmem:[%s3 + $0x5f8] sm:$0xff]
  %v2325 = vld [vmem:[%s3 + $0x600] sm:$0xff]
  %v2326 = vld [vmem:[%s3 + $0x608] sm:$0xff]
  %v2327 = vld [vmem:[%s3 + $0x610] sm:$0xff]
  %v2328 = vld [vmem:[%s3 + $0x618] sm:$0xff]
  %v2329 = vld [vmem:[%s3 + $0x620] sm:$0xff]
  %v2330 = vld [vmem:[%s3 + $0x628] sm:$0xff]
  %v2331 = vld [vmem:[%s3 + $0x630] sm:$0xff]
  %v2332 = vld [vmem:[%s3 + $0x638] sm:$0xff]
  %v2333 = vld [vmem:[%s3 + $0x640] sm:$0xff]
  %v2334 = vld [vmem:[%s3 + $0x648] sm:$0xff]
  %v2335 = vld [vmem:[%s3 + $0x650] sm:$0xff]
  %v2336 = vld [vmem:[%s3 + $0x658] sm:$0xff]
  %v2337 = vld [vmem:[%s3 + $0x660] sm:$0xff]
  %v2338 = vld [vmem:[%s3 + $0x668] sm:$0xff]
  %v2339 = vld [vmem:[%s3 + $0x670] sm:$0xff]
  %v2340 = vld [vmem:[%s3 + $0x678] sm:$0xff]
  %v2341 = vld [vmem:[%s3 + $0x680] sm:$0x7]
  %v2342 = vld [vmem:[%s3 + $0x688] sm:$0x7]
  %v2343 = vld [vmem:[%s4] sm:$0x3]
  %v2345 = vlaneseq
  %v2346 = vshrl.u32 %v2345, 7
  %v2347 = vsub.s32 0, %v2346
  %v2348 = vrot.slane %v2343, %v2347
  %v2349 = vlaneseq
  %v2350 = vshrl.u32 %v2349, 7
  %v2351 = vsub.s32 1, %v2350
  %v2352 = vrot.slane %v2343, %v2351
  %vm2355 = vcmask 547840
  %v2356 = vsel %vm2355, %v2073, 0
  %v2358 = vsel %vm2355, %v2074, 0
  %v2360 = vsel %vm2355, %v2075, 0
  %v2362 = vsel %vm2355, %v2076, 0
  %v2364 = vsel %vm2355, %v2077, 0
  %v2366 = vsel %vm2355, %v2078, 0
  %v2368 = vsel %vm2355, %v2079, 0
  %v2370 = vsel %vm2355, %v2080, 0
  %v2372 = vsel %vm2355, %v2081, 0
  %v2374 = vsel %vm2355, %v2082, 0
  %vm2376 = vcmask 1042432
  %v2378 = vsel %vm2376, %v2341, 0
  %v2381 = vsel %vm2376, %v2342, 0
  %2383 = vmatprep.subr.mxu0 %v2134
  %2384 = vmatpush1.msra.mxu0 %v2133
  %2385 = vmatprep.subr.mxu0 %v2136
  %2386 = vmatpush1.msra.mxu0 %v2135
  %2387 = vmatprep.subr.mxu0 %v2138
  %2388 = vmatpush1.msra.mxu0 %v2137
  %2389 = vmatprep.subr.mxu0 %v2140
  %2390 = vmatpush1.msra.mxu0 %v2139
  %2391 = vmatprep.subr.mxu0 %v2142
  %2392 = vmatpush1.msra.mxu0 %v2141
  %2393 = vmatprep.subr.mxu0 %v2144
  %2394 = vmatpush1.msra.mxu0 %v2143
  %2395 = vmatprep.subr.mxu0 %v2146
  %2396 = vmatpush1.msra.mxu0 %v2145
  %2397 = vmatprep.subr.mxu0 %v2148
  %2398 = vmatpush1.msra.mxu0 %v2147
  %2399 = vmatprep.subr.mxu0 %v2150
  %2400 = vmatpush1.msra.mxu0 %v2149
  %2401 = vmatprep.subr.mxu0 %v2152
  %2402 = vmatpush1.msra.mxu0 %v2151
  %2403 = vmatprep.subr.mxu0 %v2154
  %2404 = vmatpush1.msra.mxu0 %v2153
  %2405 = vmatprep.subr.mxu0 %v2156
  %2406 = vmatpush1.msra.mxu0 %v2155
  %2407 = vmatprep.subr.mxu0 %v2158
  %2408 = vmatpush1.msra.mxu0 %v2157
  %2409 = vmatprep.subr.mxu0 %v2160
  %2410 = vmatpush1.msra.mxu0 %v2159
  %2411 = vmatprep.subr.mxu0 %v2162
  %2412 = vmatpush1.msra.mxu0 %v2161
  %2413 = vmatprep.subr.mxu0 %v2164
  %2414 = vmatpush1.msra.mxu0 %v2163
  %2415 = vmatprep.subr.mxu0 %v2166
  %2416 = vmatpush1.msra.mxu0 %v2165
  %2417 = vmatprep.subr.mxu0 %v2168
  %2418 = vmatpush1.msra.mxu0 %v2167
  %2419 = vmatprep.subr.mxu0 %v2170
  %2420 = vmatpush1.msra.mxu0 %v2169
  %2421 = vmatprep.subr.mxu0 %v2172
  %2422 = vmatpush1.msra.mxu0 %v2171
  %2423 = vmatprep.subr.mxu0 %v2174
  %2424 = vmatpush1.msra.mxu0 %v2173
  %2425 = vmatprep.subr.mxu0 %v2176
  %2426 = vmatpush1.msra.mxu0 %v2175
  %2427 = vmatprep.subr.mxu0 %v2178
  %2428 = vmatpush1.msra.mxu0 %v2177
  %2429 = vmatprep.subr.mxu0 %v2180
  %2430 = vmatpush1.msra.mxu0 %v2179
  %2431 = vmatprep.subr.mxu0 %v2182
  %2432 = vmatpush1.msra.mxu0 %v2181
  %2433 = vmatprep.subr.mxu0 %v2184
  %2434 = vmatpush1.msra.mxu0 %v2183
  %2435 = vmatprep.subr.mxu0 %v2186
  %2436 = vmatpush1.msra.mxu0 %v2185
  %2437 = vmatprep.subr.mxu0 %v2188
  %2438 = vmatpush1.msra.mxu0 %v2187
  %2439 = vmatprep.subr.mxu0 %v2190
  %2440 = vmatpush1.msra.mxu0 %v2189
  %2441 = vmatprep.subr.mxu0 %v2192
  %2442 = vmatpush1.msra.mxu0 %v2191
  %2443 = vmatprep.subr.mxu0 %v2194
  %2444 = vmatpush1.msra.mxu0 %v2193
  %2445 = vmatprep.subr.mxu0 %v2196
  %2446 = vmatpush1.msra.mxu0 %v2195
  %2447 = vmatprep.mubr.f32.mxu0 %v2093
  %2448 = vmatmul.mubr.f32.gmra.mrb[0].mxu0 %v1755
  %v2449 = vpop.f32.mrb[0].mxu0
  %v2450 = vadd.f32 %v2348, %v2449
  %v2451 = vpop.f32.mrb[0].mxu0
  %v2452 = vadd.f32 %v2352, %v2451
  %2453 = vmatprep.mubr.f32.mxu0 %v2094
  %2454 = vmatmul.mubr.f32.gmra.mrb[0].mxu0 %v1757
  %v2455 = vpop.f32.mrb[0].mxu0
  %v2456 = vadd.f32 %v2348, %v2455
  %v2457 = vpop.f32.mrb[0].mxu0
  %v2458 = vadd.f32 %v2352, %v2457
  %2459 = vmatprep.mubr.f32.mxu0 %v2095
  %2460 = vmatmul.mubr.f32.gmra.mrb[0].mxu0 %v1759
  %v2461 = vpop.f32.mrb[0].mxu0
  %v2462 = vadd.f32 %v2348, %v2461
  %v2463 = vpop.f32.mrb[0].mxu0
  %v2464 = vadd.f32 %v2352, %v2463
  %2465 = vmatprep.mubr.f32.mxu0 %v2096
  %2466 = vmatmul.mubr.f32.gmra.mrb[0].mxu0 %v1761
  %v2467 = vpop.f32.mrb[0].mxu0
  %v2468 = vadd.f32 %v2348, %v2467
  %v2469 = vpop.f32.mrb[0].mxu0
  %v2470 = vadd.f32 %v2352, %v2469
  %2471 = vmatprep.mubr.f32.mxu0 %v2097
  %2472 = vmatmul.mubr.f32.gmra.mrb[0].mxu0 %v1763
  %v2473 = vpop.f32.mrb[0].mxu0
  %v2474 = vadd.f32 %v2348, %v2473
  %v2475 = vpop.f32.mrb[0].mxu0
  %v2476 = vadd.f32 %v2352, %v2475
  %2477 = vmatprep.mubr.f32.mxu0 %v2098
  %2478 = vmatmul.mubr.f32.gmra.mrb[0].mxu0 %v1765
  %v2479 = vpop.f32.mrb[0].mxu0
  %v2480 = vadd.f32 %v2348, %v2479
  %v2481 = vpop.f32.mrb[0].mxu0
  %v2482 = vadd.f32 %v2352, %v2481
  %2483 = vmatprep.mubr.f32.mxu0 %v2099
  %2484 = vmatmul.mubr.f32.gmra.mrb[0].mxu0 %v1767
  %v2485 = vpop.f32.mrb[0].mxu0
  %v2486 = vadd.f32 %v2348, %v2485
  %v2487 = vpop.f32.mrb[0].mxu0
  %v2488 = vadd.f32 %v2352, %v2487
  %2489 = vmatprep.mubr.f32.mxu0 %v2100
  %2490 = vmatmul.mubr.f32.gmra.mrb[0].mxu0 %v1769
  %v2491 = vpop.f32.mrb[0].mxu0
  %v2492 = vadd.f32 %v2348, %v2491
  %v2493 = vpop.f32.mrb[0].mxu0
  %v2494 = vadd.f32 %v2352, %v2493
  %2495 = vmatprep.mubr.f32.mxu0 %v2101
  %2496 = vmatmul.mubr.f32.gmra.mrb[0].mxu0 %v1771
  %v2497 = vpop.f32.mrb[0].mxu0
  %v2498 = vadd.f32 %v2348, %v2497
  %v2499 = vpop.f32.mrb[0].mxu0
  %v2500 = vadd.f32 %v2352, %v2499
  %2501 = vmatprep.mubr.f32.mxu0 %v2102
  %2502 = vmatmul.mubr.f32.gmra.mrb[0].mxu0 %v1773
  %v2503 = vpop.f32.mrb[0].mxu0
  %v2504 = vadd.f32 %v2348, %v2503
  %v2505 = vpop.f32.mrb[0].mxu0
  %v2506 = vadd.f32 %v2352, %v2505
  %2507 = vdwg.mxu0
  %2508 = vmatprep.subr.mxu0 %v2198
  %2509 = vmatpush1.msra.mxu0 %v2197
  %2510 = vmatprep.subr.mxu0 %v2200
  %2511 = vmatpush1.msra.mxu0 %v2199
  %2512 = vmatprep.subr.mxu0 %v2202
  %2513 = vmatpush1.msra.mxu0 %v2201
  %2514 = vmatprep.subr.mxu0 %v2204
  %2515 = vmatpush1.msra.mxu0 %v2203
  %2516 = vmatprep.subr.mxu0 %v2206
  %2517 = vmatpush1.msra.mxu0 %v2205
  %2518 = vmatprep.subr.mxu0 %v2208
  %2519 = vmatpush1.msra.mxu0 %v2207
  %2520 = vmatprep.subr.mxu0 %v2210
  %2521 = vmatpush1.msra.mxu0 %v2209
  %2522 = vmatprep.subr.mxu0 %v2212
  %2523 = vmatpush1.msra.mxu0 %v2211
  %2524 = vmatprep.subr.mxu0 %v2214
  %2525 = vmatpush1.msra.mxu0 %v2213
  %2526 = vmatprep.subr.mxu0 %v2216
  %2527 = vmatpush1.msra.mxu0 %v2215
  %2528 = vmatprep.subr.mxu0 %v2218
  %2529 = vmatpush1.msra.mxu0 %v2217
  %2530 = vmatprep.subr.mxu0 %v2220
  %2531 = vmatpush1.msra.mxu0 %v2219
  %2532 = vmatprep.subr.mxu0 %v2222
  %2533 = vmatpush1.msra.mxu0 %v2221
  %2534 = vmatprep.subr.mxu0 %v2224
  %2535 = vmatpush1.msra.mxu0 %v2223
  %2536 = vmatprep.subr.mxu0 %v2226
  %2537 = vmatpush1.msra.mxu0 %v2225
  %2538 = vmatprep.subr.mxu0 %v2228
  %2539 = vmatpush1.msra.mxu0 %v2227
  %2540 = vmatprep.subr.mxu0 %v2230
  %2541 = vmatpush1.msra.mxu0 %v2229
  %2542 = vmatprep.subr.mxu0 %v2232
  %2543 = vmatpush1.msra.mxu0 %v2231
  %2544 = vmatprep.subr.mxu0 %v2234
  %2545 = vmatpush1.msra.mxu0 %v2233
  %2546 = vmatprep.subr.mxu0 %v2236
  %2547 = vmatpush1.msra.mxu0 %v2235
  %2548 = vmatprep.subr.mxu0 %v2238
  %2549 = vmatpush1.msra.mxu0 %v2237
  %2550 = vmatprep.subr.mxu0 %v2240
  %2551 = vmatpush1.msra.mxu0 %v2239
  %2552 = vmatprep.subr.mxu0 %v2242
  %2553 = vmatpush1.msra.mxu0 %v2241
  %2554 = vmatprep.subr.mxu0 %v2244
  %2555 = vmatpush1.msra.mxu0 %v2243
  %2556 = vmatprep.subr.mxu0 %v2246
  %2557 = vmatpush1.msra.mxu0 %v2245
  %2558 = vmatprep.subr.mxu0 %v2248
  %2559 = vmatpush1.msra.mxu0 %v2247
  %2560 = vmatprep.subr.mxu0 %v2250
  %2561 = vmatpush1.msra.mxu0 %v2249
  %2562 = vmatprep.subr.mxu0 %v2252
  %2563 = vmatpush1.msra.mxu0 %v2251
  %2564 = vmatprep.subr.mxu0 %v2254
  %2565 = vmatpush1.msra.mxu0 %v2253
  %2566 = vmatprep.subr.mxu0 %v2256
  %2567 = vmatpush1.msra.mxu0 %v2255
  %2568 = vmatprep.subr.mxu0 %v2258
  %2569 = vmatpush1.msra.mxu0 %v2257
  %2570 = vmatprep.subr.mxu0 %v2260
  %2571 = vmatpush1.msra.mxu0 %v2259
  %2572 = vmatprep.mubr.f32.mxu0 %v2113
  %2573 = vmatmul.mubr.f32.gmra.mrb[0].mxu0 %v2103
  %v2574 = vpop.f32.mrb[0].mxu0
  %v2575 = vadd.f32 %v2450, %v2574
  %v2576 = vpop.f32.mrb[0].mxu0
  %v2577 = vadd.f32 %v2452, %v2576
  %2578 = vmatprep.mubr.f32.mxu0 %v2114
  %2579 = vmatmul.mubr.f32.gmra.mrb[0].mxu0 %v2104
  %v2580 = vpop.f32.mrb[0].mxu0
  %v2581 = vadd.f32 %v2456, %v2580
  %v2582 = vpop.f32.mrb[0].mxu0
  %v2583 = vadd.f32 %v2458, %v2582
  %2584 = vmatprep.mubr.f32.mxu0 %v2115
  %2585 = vmatmul.mubr.f32.gmra.mrb[0].mxu0 %v2105
  %v2586 = vpop.f32.mrb[0].mxu0
  %v2587 = vadd.f32 %v2462, %v2586
  %v2588 = vpop.f32.mrb[0].mxu0
  %v2589 = vadd.f32 %v2464, %v2588
  %2590 = vmatprep.mubr.f32.mxu0 %v2116
  %2591 = vmatmul.mubr.f32.gmra.mrb[0].mxu0 %v2106
  %v2592 = vpop.f32.mrb[0].mxu0
  %v2593 = vadd.f32 %v2468, %v2592
  %v2594 = vpop.f32.mrb[0].mxu0
  %v2595 = vadd.f32 %v2470, %v2594
  %2596 = vmatprep.mubr.f32.mxu0 %v2117
  %2597 = vmatmul.mubr.f32.gmra.mrb[0].mxu0 %v2107
  %v2598 = vpop.f32.mrb[0].mxu0
  %v2599 = vadd.f32 %v2474, %v2598
  %v2600 = vpop.f32.mrb[0].mxu0
  %v2601 = vadd.f32 %v2476, %v2600
  %2602 = vmatprep.mubr.f32.mxu0 %v2118
  %2603 = vmatmul.mubr.f32.gmra.mrb[0].mxu0 %v2108
  %v2604 = vpop.f32.mrb[0].mxu0
  %v2605 = vadd.f32 %v2480, %v2604
  %v2606 = vpop.f32.mrb[0].mxu0
  %v2607 = vadd.f32 %v2482, %v2606
  %2608 = vmatprep.mubr.f32.mxu0 %v2119
  %2609 = vmatmul.mubr.f32.gmra.mrb[0].mxu0 %v2109
  %v2610 = vpop.f32.mrb[0].mxu0
  %v2611 = vadd.f32 %v2486, %v2610
  %v2612 = vpop.f32.mrb[0].mxu0
  %v2613 = vadd.f32 %v2488, %v2612
  %2614 = vmatprep.mubr.f32.mxu0 %v2120
  %2615 = vmatmul.mubr.f32.gmra.mrb[0].mxu0 %v2110
  %v2616 = vpop.f32.mrb[0].mxu0
  %v2617 = vadd.f32 %v2492, %v2616
  %v2618 = vpop.f32.mrb[0].mxu0
  %v2619 = vadd.f32 %v2494, %v2618
  %2620 = vmatprep.mubr.f32.mxu0 %v2121
  %2621 = vmatmul.mubr.f32.gmra.mrb[0].mxu0 %v2111
  %v2622 = vpop.f32.mrb[0].mxu0
  %v2623 = vadd.f32 %v2498, %v2622
  %v2624 = vpop.f32.mrb[0].mxu0
  %v2625 = vadd.f32 %v2500, %v2624
  %2626 = vmatprep.mubr.f32.mxu0 %v2122
  %2627 = vmatmul.mubr.f32.gmra.mrb[0].mxu0 %v2112
  %v2628 = vpop.f32.mrb[0].mxu0
  %v2629 = vadd.f32 %v2504, %v2628
  %v2630 = vpop.f32.mrb[0].mxu0
  %v2631 = vadd.f32 %v2506, %v2630
  %2632 = vdwg.mxu0
  %2633 = vmatprep.subr.mxu0 %v2262
  %2634 = vmatpush1.msra.mxu0 %v2261
  %2635 = vmatprep.subr.mxu0 %v2264
  %2636 = vmatpush1.msra.mxu0 %v2263
  %2637 = vmatprep.subr.mxu0 %v2266
  %2638 = vmatpush1.msra.mxu0 %v2265
  %2639 = vmatprep.subr.mxu0 %v2268
  %2640 = vmatpush1.msra.mxu0 %v2267
  %2641 = vmatprep.subr.mxu0 %v2270
  %2642 = vmatpush1.msra.mxu0 %v2269
  %2643 = vmatprep.subr.mxu0 %v2272
  %2644 = vmatpush1.msra.mxu0 %v2271
  %2645 = vmatprep.subr.mxu0 %v2274
  %2646 = vmatpush1.msra.mxu0 %v2273
  %2647 = vmatprep.subr.mxu0 %v2276
  %2648 = vmatpush1.msra.mxu0 %v2275
  %2649 = vmatprep.subr.mxu0 %v2278
  %2650 = vmatpush1.msra.mxu0 %v2277
  %2651 = vmatprep.subr.mxu0 %v2280
  %2652 = vmatpush1.msra.mxu0 %v2279
  %2653 = vmatprep.subr.mxu0 %v2282
  %2654 = vmatpush1.msra.mxu0 %v2281
  %2655 = vmatprep.subr.mxu0 %v2284
  %2656 = vmatpush1.msra.mxu0 %v2283
  %2657 = vmatprep.subr.mxu0 %v2286
  %2658 = vmatpush1.msra.mxu0 %v2285
  %2659 = vmatprep.subr.mxu0 %v2288
  %2660 = vmatpush1.msra.mxu0 %v2287
  %2661 = vmatprep.subr.mxu0 %v2290
  %2662 = vmatpush1.msra.mxu0 %v2289
  %2663 = vmatprep.subr.mxu0 %v2292
  %2664 = vmatpush1.msra.mxu0 %v2291
  %2665 = vmatprep.subr.mxu0 %v2294
  %2666 = vmatpush1.msra.mxu0 %v2293
  %2667 = vmatprep.subr.mxu0 %v2296
  %2668 = vmatpush1.msra.mxu0 %v2295
  %2669 = vmatprep.subr.mxu0 %v2298
  %2670 = vmatpush1.msra.mxu0 %v2297
  %2671 = vmatprep.subr.mxu0 %v2300
  %2672 = vmatpush1.msra.mxu0 %v2299
  %2673 = vmatprep.subr.mxu0 %v2302
  %2674 = vmatpush1.msra.mxu0 %v2301
  %2675 = vmatprep.subr.mxu0 %v2304
  %2676 = vmatpush1.msra.mxu0 %v2303
  %2677 = vmatprep.subr.mxu0 %v2306
  %2678 = vmatpush1.msra.mxu0 %v2305
  %2679 = vmatprep.subr.mxu0 %v2308
  %2680 = vmatpush1.msra.mxu0 %v2307
  %2681 = vmatprep.subr.mxu0 %v2310
  %2682 = vmatpush1.msra.mxu0 %v2309
  %2683 = vmatprep.subr.mxu0 %v2312
  %2684 = vmatpush1.msra.mxu0 %v2311
  %2685 = vmatprep.subr.mxu0 %v2314
  %2686 = vmatpush1.msra.mxu0 %v2313
  %2687 = vmatprep.subr.mxu0 %v2316
  %2688 = vmatpush1.msra.mxu0 %v2315
  %2689 = vmatprep.subr.mxu0 %v2318
  %2690 = vmatpush1.msra.mxu0 %v2317
  %2691 = vmatprep.subr.mxu0 %v2320
  %2692 = vmatpush1.msra.mxu0 %v2319
  %2693 = vmatprep.subr.mxu0 %v2322
  %2694 = vmatpush1.msra.mxu0 %v2321
  %2695 = vmatprep.subr.mxu0 %v2324
  %2696 = vmatpush1.msra.mxu0 %v2323
  %2697 = vmatprep.mubr.f32.mxu0 %v2123
  %2698 = vmatmul.mubr.f32.gmra.mrb[0].mxu0 %v1990
  %v2699 = vpop.f32.mrb[0].mxu0
  %v2700 = vadd.f32 %v2575, %v2699
  %v2701 = vpop.f32.mrb[0].mxu0
  %v2702 = vadd.f32 %v2577, %v2701
  %2703 = vmatprep.mubr.f32.mxu0 %v2124
  %2704 = vmatmul.mubr.f32.gmra.mrb[0].mxu0 %v1991
  %v2705 = vpop.f32.mrb[0].mxu0
  %v2706 = vadd.f32 %v2581, %v2705
  %v2707 = vpop.f32.mrb[0].mxu0
  %v2708 = vadd.f32 %v2583, %v2707
  %2709 = vmatprep.mubr.f32.mxu0 %v2125
  %2710 = vmatmul.mubr.f32.gmra.mrb[0].mxu0 %v1992
  %v2711 = vpop.f32.mrb[0].mxu0
  %v2712 = vadd.f32 %v2587, %v2711
  %v2713 = vpop.f32.mrb[0].mxu0
  %v2714 = vadd.f32 %v2589, %v2713
  %2715 = vmatprep.mubr.f32.mxu0 %v2126
  %2716 = vmatmul.mubr.f32.gmra.mrb[0].mxu0 %v1993
  %v2717 = vpop.f32.mrb[0].mxu0
  %v2718 = vadd.f32 %v2593, %v2717
  %v2719 = vpop.f32.mrb[0].mxu0
  %v2720 = vadd.f32 %v2595, %v2719
  %2721 = vmatprep.mubr.f32.mxu0 %v2127
  %2722 = vmatmul.mubr.f32.gmra.mrb[0].mxu0 %v1994
  %v2723 = vpop.f32.mrb[0].mxu0
  %v2724 = vadd.f32 %v2599, %v2723
  %v2725 = vpop.f32.mrb[0].mxu0
  %v2726 = vadd.f32 %v2601, %v2725
  %2727 = vmatprep.mubr.f32.mxu0 %v2128
  %2728 = vmatmul.mubr.f32.gmra.mrb[0].mxu0 %v1995
  %v2729 = vpop.f32.mrb[0].mxu0
  %v2730 = vadd.f32 %v2605, %v2729
  %v2731 = vpop.f32.mrb[0].mxu0
  %v2732 = vadd.f32 %v2607, %v2731
  %2733 = vmatprep.mubr.f32.mxu0 %v2129
  %2734 = vmatmul.mubr.f32.gmra.mrb[0].mxu0 %v1996
  %v2735 = vpop.f32.mrb[0].mxu0
  %v2736 = vadd.f32 %v2611, %v2735
  %v2737 = vpop.f32.mrb[0].mxu0
  %v2738 = vadd.f32 %v2613, %v2737
  %2739 = vmatprep.mubr.f32.mxu0 %v2130
  %2740 = vmatmul.mubr.f32.gmra.mrb[0].mxu0 %v1997
  %v2741 = vpop.f32.mrb[0].mxu0
  %v2742 = vadd.f32 %v2617, %v2741
  %v2743 = vpop.f32.mrb[0].mxu0
  %v2744 = vadd.f32 %v2619, %v2743
  %2745 = vmatprep.mubr.f32.mxu0 %v2131
  %2746 = vmatmul.mubr.f32.gmra.mrb[0].mxu0 %v1998
  %v2747 = vpop.f32.mrb[0].mxu0
  %v2748 = vadd.f32 %v2623, %v2747
  %v2749 = vpop.f32.mrb[0].mxu0
  %v2750 = vadd.f32 %v2625, %v2749
  %2751 = vmatprep.mubr.f32.mxu0 %v2132
  %2752 = vmatmul.mubr.f32.gmra.mrb[0].mxu0 %v1999
  %v2753 = vpop.f32.mrb[0].mxu0
  %v2754 = vadd.f32 %v2629, %v2753
  %v2755 = vpop.f32.mrb[0].mxu0
  %v2756 = vadd.f32 %v2631, %v2755
  %2757 = vdwg.mxu0
  %2758 = vmatprep.subr.mxu0 %v2326
  %2759 = vmatpush1.msra.mxu0 %v2325
  %2760 = vmatprep.subr.mxu0 %v2328
  %2761 = vmatpush1.msra.mxu0 %v2327
  %2762 = vmatprep.subr.mxu0 %v2330
  %2763 = vmatpush1.msra.mxu0 %v2329
  %2764 = vmatprep.subr.mxu0 %v2332
  %2765 = vmatpush1.msra.mxu0 %v2331
  %2766 = vmatprep.subr.mxu0 %v2334
  %2767 = vmatpush1.msra.mxu0 %v2333
  %2768 = vmatprep.subr.mxu0 %v2336
  %2769 = vmatpush1.msra.mxu0 %v2335
  %2770 = vmatprep.subr.mxu0 %v2338
  %2771 = vmatpush1.msra.mxu0 %v2337
  %2772 = vmatprep.subr.mxu0 %v2340
  %2773 = vmatpush1.msra.mxu0 %v2339
  %2774 = vmatprep.subr.mxu0 %v2381
  %2775 = vmatpush1.msra.mxu0 %v2378
  %2776 = vmatprep.subr.mxu0 0.0
  %2777 = vmatpush1.msra.mxu0 0.0
  %2778 = vmatprep.subr.mxu0 0.0
  %2779 = vmatpush1.msra.mxu0 0.0
  %2780 = vmatprep.subr.mxu0 0.0
  %2781 = vmatpush1.msra.mxu0 0.0
  %2782 = vmatprep.subr.mxu0 0.0
  %2783 = vmatpush1.msra.mxu0 0.0
  %2784 = vmatprep.subr.mxu0 0.0
  %2785 = vmatpush1.msra.mxu0 0.0
  %2786 = vmatprep.subr.mxu0 0.0
  %2787 = vmatpush1.msra.mxu0 0.0
  %2788 = vmatprep.subr.mxu0 0.0
  %2789 = vmatpush1.msra.mxu0 0.0
  %2790 = vmatprep.subr.mxu0 0.0
  %2791 = vmatpush1.msra.mxu0 0.0
  %2792 = vmatprep.subr.mxu0 0.0
  %2793 = vmatpush1.msra.mxu0 0.0
  %2794 = vmatprep.subr.mxu0 0.0
  %2795 = vmatpush1.msra.mxu0 0.0
  %2796 = vmatprep.subr.mxu0 0.0
  %2797 = vmatpush1.msra.mxu0 0.0
  %2798 = vmatprep.subr.mxu0 0.0
  %2799 = vmatpush1.msra.mxu0 0.0
  %2800 = vmatprep.subr.mxu0 0.0
  %2801 = vmatpush1.msra.mxu0 0.0
  %2802 = vmatprep.subr.mxu0 0.0
  %2803 = vmatpush1.msra.mxu0 0.0
  %2804 = vmatprep.subr.mxu0 0.0
  %2805 = vmatpush1.msra.mxu0 0.0
  %2806 = vmatprep.subr.mxu0 0.0
  %2807 = vmatpush1.msra.mxu0 0.0
  %2808 = vmatprep.subr.mxu0 0.0
  %2809 = vmatpush1.msra.mxu0 0.0
  %2810 = vmatprep.subr.mxu0 0.0
  %2811 = vmatpush1.msra.mxu0 0.0
  %2812 = vmatprep.subr.mxu0 0.0
  %2813 = vmatpush1.msra.mxu0 0.0
  %2814 = vmatprep.subr.mxu0 0.0
  %2815 = vmatpush1.msra.mxu0 0.0
  %2816 = vmatprep.subr.mxu0 0.0
  %2817 = vmatpush1.msra.mxu0 0.0
  %2818 = vmatprep.subr.mxu0 0.0
  %2819 = vmatpush1.msra.mxu0 0.0
  %2820 = vmatprep.subr.mxu0 0.0
  %2821 = vmatpush1.msra.mxu0 0.0
  %2822 = vmatprep.mubr.f32.mxu0 0.0
  %2823 = vmatmul.mubr.f32.gmra.mrb[0].mxu0 %v2356
  %v2824 = vpop.f32.mrb[0].mxu0
  %v2825 = vadd.f32 %v2700, %v2824
  %v2826 = vpop.f32.mrb[0].mxu0
  %v2827 = vadd.f32 %v2702, %v2826
  %2828 = vmatprep.mubr.f32.mxu0 0.0
  %2829 = vmatmul.mubr.f32.gmra.mrb[0].mxu0 %v2358
  %v2830 = vpop.f32.mrb[0].mxu0
  %v2831 = vadd.f32 %v2706, %v2830
  %v2832 = vpop.f32.mrb[0].mxu0
  %v2833 = vadd.f32 %v2708, %v2832
  %2834 = vmatprep.mubr.f32.mxu0 0.0
  %2835 = vmatmul.mubr.f32.gmra.mrb[0].mxu0 %v2360
  %v2836 = vpop.f32.mrb[0].mxu0
  %v2837 = vadd.f32 %v2712, %v2836
  %v2838 = vpop.f32.mrb[0].mxu0
  %v2839 = vadd.f32 %v2714, %v2838
  %2840 = vmatprep.mubr.f32.mxu0 0.0
  %2841 = vmatmul.mubr.f32.gmra.mrb[0].mxu0 %v2362
  %v2842 = vpop.f32.mrb[0].mxu0
  %v2843 = vadd.f32 %v2718, %v2842
  %v2844 = vpop.f32.mrb[0].mxu0
  %v2845 = vadd.f32 %v2720, %v2844
  %2846 = vmatprep.mubr.f32.mxu0 0.0
  %2847 = vmatmul.mubr.f32.gmra.mrb[0].mxu0 %v2364
  %v2848 = vpop.f32.mrb[0].mxu0
  %v2849 = vadd.f32 %v2724, %v2848
  %v2850 = vpop.f32.mrb[0].mxu0
  %v2851 = vadd.f32 %v2726, %v2850
  %2852 = vmatprep.mubr.f32.mxu0 0.0
  %2853 = vmatmul.mubr.f32.gmra.mrb[0].mxu0 %v2366
  %v2854 = vpop.f32.mrb[0].mxu0
  %v2855 = vadd.f32 %v2730, %v2854
  %v2856 = vpop.f32.mrb[0].mxu0
  %v2857 = vadd.f32 %v2732, %v2856
  %2858 = vmatprep.mubr.f32.mxu0 0.0
  %2859 = vmatmul.mubr.f32.gmra.mrb[0].mxu0 %v2368
  %v2860 = vpop.f32.mrb[0].mxu0
  %v2861 = vadd.f32 %v2736, %v2860
  %v2862 = vpop.f32.mrb[0].mxu0
  %v2863 = vadd.f32 %v2738, %v2862
  %2864 = vmatprep.mubr.f32.mxu0 0.0
  %2865 = vmatmul.mubr.f32.gmra.mrb[0].mxu0 %v2370
  %v2866 = vpop.f32.mrb[0].mxu0
  %v2867 = vadd.f32 %v2742, %v2866
  %v2868 = vpop.f32.mrb[0].mxu0
  %v2869 = vadd.f32 %v2744, %v2868
  %2870 = vmatprep.mubr.f32.mxu0 0.0
  %2871 = vmatmul.mubr.f32.gmra.mrb[0].mxu0 %v2372
  %v2872 = vpop.f32.mrb[0].mxu0
  %v2873 = vadd.f32 %v2748, %v2872
  %v2874 = vpop.f32.mrb[0].mxu0
  %v2875 = vadd.f32 %v2750, %v2874
  %2876 = vmatprep.mubr.f32.mxu0 0.0
  %2877 = vmatmul.mubr.f32.gmra.mrb[0].mxu0 %v2374
  %v2878 = vpop.f32.mrb[0].mxu0
  %v2879 = vadd.f32 %v2754, %v2878
  %v2880 = vpop.f32.mrb[0].mxu0
  %v2881 = vadd.f32 %v2756, %v2880
  %2882 = vdwg.mxu0
  %v2883 = vmax.f32 %v2825, 0.0
  %v2884 = vmax.f32 %v2827, 0.0
  %v2885 = vmax.f32 %v2831, 0.0
  %v2886 = vmax.f32 %v2833, 0.0
  %v2887 = vmax.f32 %v2837, 0.0
  %v2888 = vmax.f32 %v2839, 0.0
  %v2889 = vmax.f32 %v2843, 0.0
  %v2890 = vmax.f32 %v2845, 0.0
  %v2891 = vmax.f32 %v2849, 0.0
  %v2892 = vmax.f32 %v2851, 0.0
  %v2893 = vmax.f32 %v2855, 0.0
  %v2894 = vmax.f32 %v2857, 0.0
  %v2895 = vmax.f32 %v2861, 0.0
  %v2896 = vmax.f32 %v2863, 0.0
  %v2897 = vmax.f32 %v2867, 0.0
  %v2898 = vmax.f32 %v2869, 0.0
  %v2899 = vmax.f32 %v2873, 0.0
  %v2900 = vmax.f32 %v2875, 0.0
  %v2901 = vmax.f32 %v2879, 0.0
  %v2902 = vmax.f32 %v2881, 0.0
  %2923 = vrot.lane.b32.xlu0 %v2883, 127
  %v2924 = vpop.permute.xlu0 %2923
  %2925 = vrot.lane.b32.xlu0 %v2884, 127
  %v2926 = vpop.permute.xlu0 %2925
  %2927 = vrot.lane.b32.xlu0 %v2885, 127
  %v2928 = vpop.permute.xlu0 %2927
  %2929 = vrot.lane.b32.xlu0 %v2886, 127
  %v2930 = vpop.permute.xlu0 %2929
  %2931 = vrot.lane.b32.xlu0 %v2887, 127
  %v2932 = vpop.permute.xlu0 %2931
  %2933 = vrot.lane.b32.xlu0 %v2888, 127
  %v2934 = vpop.permute.xlu0 %2933
  %2935 = vrot.lane.b32.xlu0 %v2889, 127
  %v2936 = vpop.permute.xlu0 %2935
  %2937 = vrot.lane.b32.xlu0 %v2890, 127
  %v2938 = vpop.permute.xlu0 %2937
  %2939 = vrot.lane.b32.xlu0 %v2891, 127
  %v2940 = vpop.permute.xlu0 %2939
  %2941 = vrot.lane.b32.xlu0 %v2892, 127
  %v2942 = vpop.permute.xlu0 %2941
  %2943 = vrot.lane.b32.xlu0 %v2893, 127
  %v2944 = vpop.permute.xlu0 %2943
  %2945 = vrot.lane.b32.xlu0 %v2894, 127
  %v2946 = vpop.permute.xlu0 %2945
  %2947 = vrot.lane.b32.xlu0 %v2895, 127
  %v2948 = vpop.permute.xlu0 %2947
  %2949 = vrot.lane.b32.xlu0 %v2896, 127
  %v2950 = vpop.permute.xlu0 %2949
  %2951 = vrot.lane.b32.xlu0 %v2897, 127
  %v2952 = vpop.permute.xlu0 %2951
  %2953 = vrot.lane.b32.xlu0 %v2898, 127
  %v2954 = vpop.permute.xlu0 %2953
  %2955 = vrot.lane.b32.xlu0 %v2899, 127
  %v2956 = vpop.permute.xlu0 %2955
  %2957 = vrot.lane.b32.xlu0 %v2900, 127
  %v2958 = vpop.permute.xlu0 %2957
  %2959 = vrot.lane.b32.xlu0 %v2901, 127
  %v2960 = vpop.permute.xlu0 %2959
  %2961 = vrot.lane.b32.xlu0 %v2902, 127
  %v2962 = vpop.permute.xlu0 %2961
  %v2963 = vsel %vm1614, %v2924, %v2926
  %v2964 = vsel %vm1614, %v2928, %v2930
  %v2965 = vsel %vm1614, %v2932, %v2934
  %v2966 = vsel %vm1614, %v2936, %v2938
  %v2967 = vsel %vm1614, %v2940, %v2942
  %v2968 = vsel %vm1614, %v2944, %v2946
  %v2969 = vsel %vm1614, %v2948, %v2950
  %v2970 = vsel %vm1614, %v2952, %v2954
  %v2971 = vsel %vm1614, %v2956, %v2958
  %v2972 = vsel %vm1614, %v2960, %v2962
  %v2993 = vmax.f32 %v2883, %v2963
  %v2994 = vmax.f32 %v2884, %v2926
  %v2995 = vmax.f32 %v2885, %v2964
  %v2996 = vmax.f32 %v2886, %v2930
  %v2997 = vmax.f32 %v2887, %v2965
  %v2998 = vmax.f32 %v2888, %v2934
  %v2999 = vmax.f32 %v2889, %v2966
  %v3000 = vmax.f32 %v2890, %v2938
  %v3001 = vmax.f32 %v2891, %v2967
  %v3002 = vmax.f32 %v2892, %v2942
  %v3003 = vmax.f32 %v2893, %v2968
  %v3004 = vmax.f32 %v2894, %v2946
  %v3005 = vmax.f32 %v2895, %v2969
  %v3006 = vmax.f32 %v2896, %v2950
  %v3007 = vmax.f32 %v2897, %v2970
  %v3008 = vmax.f32 %v2898, %v2954
  %v3009 = vmax.f32 %v2899, %v2971
  %v3010 = vmax.f32 %v2900, %v2958
  %v3011 = vmax.f32 %v2901, %v2972
  %v3012 = vmax.f32 %v2902, %v2962
  %v3013 = vmax.f32 %v2993, %v2995
  %v3014 = vmax.f32 %v2994, %v2996
  %v3015 = vmax.f32 %v2997, %v2999
  %v3016 = vmax.f32 %v2998, %v3000
  %v3017 = vmax.f32 %v3001, %v3003
  %v3018 = vmax.f32 %v3002, %v3004
  %v3019 = vmax.f32 %v3005, %v3007
  %v3020 = vmax.f32 %v3006, %v3008
  %v3021 = vmax.f32 %v3009, %v3011
  %v3022 = vmax.f32 %v3010, %v3012
  %3025 = vrot.lane.b32.xlu0 %v3015, 31
  %v3026 = vpop.permute.xlu0 %3025
  %3027 = vrot.lane.b32.xlu0 %v3016, 31
  %v3028 = vpop.permute.xlu0 %3027
  %vm3029 = vcmask 252928
  %v3030 = vsel %vm3029, %v3026, %v3028
  %3035 = vrot.lane.b32.xlu0 %v3017, 62
  %v3036 = vpop.permute.xlu0 %3035
  %3037 = vrot.lane.b32.xlu0 %v3018, 62
  %v3038 = vpop.permute.xlu0 %3037
  %vm3039 = vcmask 506880
  %v3040 = vsel %vm3039, %v3036, %v3038
  %3045 = vrot.lane.b32.xlu0 %v3019, 93
  %v3046 = vpop.permute.xlu0 %3045
  %3047 = vrot.lane.b32.xlu0 %v3020, 93
  %v3048 = vpop.permute.xlu0 %3047
  %vm3049 = vcmask 760832
  %v3050 = vsel %vm3049, %v3046, %v3048
  %3055 = vrot.lane.b32.xlu0 %v3021, 124
  %v3056 = vpop.permute.xlu0 %3055
  %3057 = vrot.lane.b32.xlu0 %v3022, 124
  %v3058 = vpop.permute.xlu0 %3057
  %vm3059 = vcmask 1014784
  %v3060 = vsel %vm3059, %v3056, %v3058
  %v3063 = vsel %vm3029, %v3014, %v3026
  %v3064 = vsel %vm3039, %v3030, %v3036
  %v3065 = vsel %vm3049, %v3040, %v3046
  %v3066 = vsel %vm3059, %v3050, %v3056
  %v3067 = vld [vmem:[%s5] sm:$0xff]
  %v3068 = vld [vmem:[%s5 + $0x8] sm:$0xff]
  %v3069 = vld [vmem:[%s5 + $0x10] sm:$0xff]
  %v3070 = vld [vmem:[%s5 + $0x18] sm:$0xff]
  %v3071 = vld [vmem:[%s5 + $0x20] sm:$0xff]
  %v3072 = vld [vmem:[%s5 + $0x28] sm:$0xff]
  %v3073 = vld [vmem:[%s5 + $0x30] sm:$0xff]
  %v3074 = vld [vmem:[%s5 + $0x38] sm:$0xff]
  %v3075 = vld [vmem:[%s5 + $0x40] sm:$0xff]
  %v3076 = vld [vmem:[%s5 + $0x48] sm:$0xff]
  %v3077 = vld [vmem:[%s5 + $0x50] sm:$0xff]
  %v3078 = vld [vmem:[%s5 + $0x58] sm:$0xff]
  %v3079 = vld [vmem:[%s5 + $0x60] sm:$0xff]
  %v3080 = vld [vmem:[%s5 + $0x68] sm:$0xff]
  %v3081 = vld [vmem:[%s5 + $0x70] sm:$0xff]
  %v3082 = vld [vmem:[%s5 + $0x78] sm:$0xff]
  %v3083 = vld [vmem:[%s5 + $0x80] sm:$0xff]
  %v3084 = vld [vmem:[%s5 + $0x88] sm:$0xff]
  %v3085 = vld [vmem:[%s5 + $0x90] sm:$0xff]
  %v3086 = vld [vmem:[%s5 + $0x98] sm:$0xff]
  %v3087 = vld [vmem:[%s5 + $0xa0] sm:$0xff]
  %v3088 = vld [vmem:[%s5 + $0xa8] sm:$0xff]
  %v3089 = vld [vmem:[%s5 + $0xb0] sm:$0xff]
  %v3090 = vld [vmem:[%s5 + $0xb8] sm:$0xff]
  %v3091 = vld [vmem:[%s5 + $0xc0] sm:$0xff]
  %v3092 = vld [vmem:[%s5 + $0xc8] sm:$0xff]
  %v3093 = vld [vmem:[%s5 + $0xd0] sm:$0xff]
  %v3094 = vld [vmem:[%s5 + $0xd8] sm:$0xff]
  %v3095 = vld [vmem:[%s5 + $0xe0] sm:$0xff]
  %v3096 = vld [vmem:[%s5 + $0xe8] sm:$0xff]
  %v3097 = vld [vmem:[%s5 + $0xf0] sm:$0xff]
  %v3098 = vld [vmem:[%s5 + $0xf8] sm:$0xff]
  %v3099 = vld [vmem:[%s5 + $0x100] sm:$0xff]
  %v3100 = vld [vmem:[%s5 + $0x108] sm:$0xff]
  %v3101 = vld [vmem:[%s5 + $0x110] sm:$0xff]
  %v3102 = vld [vmem:[%s5 + $0x118] sm:$0xff]
  %v3103 = vld [vmem:[%s5 + $0x120] sm:$0xff]
  %v3104 = vld [vmem:[%s5 + $0x128] sm:$0xff]
  %v3105 = vld [vmem:[%s5 + $0x130] sm:$0xff]
  %v3106 = vld [vmem:[%s5 + $0x138] sm:$0xff]
  %v3107 = vld [vmem:[%s5 + $0x140] sm:$0xff]
  %v3108 = vld [vmem:[%s5 + $0x148] sm:$0xff]
  %v3109 = vld [vmem:[%s5 + $0x150] sm:$0xff]
  %v3110 = vld [vmem:[%s5 + $0x158] sm:$0xff]
  %v3111 = vld [vmem:[%s5 + $0x160] sm:$0xff]
  %v3112 = vld [vmem:[%s5 + $0x168] sm:$0xff]
  %v3113 = vld [vmem:[%s5 + $0x170] sm:$0xff]
  %v3114 = vld [vmem:[%s5 + $0x178] sm:$0xff]
  %v3115 = vld [vmem:[%s5 + $0x180] sm:$0xff]
  %v3116 = vld [vmem:[%s5 + $0x188] sm:$0xff]
  %v3117 = vld [vmem:[%s5 + $0x190] sm:$0xff]
  %v3118 = vld [vmem:[%s5 + $0x198] sm:$0xff]
  %v3119 = vld [vmem:[%s5 + $0x1a0] sm:$0xff]
  %v3120 = vld [vmem:[%s5 + $0x1a8] sm:$0xff]
  %v3121 = vld [vmem:[%s5 + $0x1b0] sm:$0xff]
  %v3122 = vld [vmem:[%s5 + $0x1b8] sm:$0xff]
  %v3123 = vld [vmem:[%s5 + $0x1c0] sm:$0xff]
  %v3124 = vld [vmem:[%s5 + $0x1c8] sm:$0xff]
  %v3125 = vld [vmem:[%s5 + $0x1d0] sm:$0xff]
  %v3126 = vld [vmem:[%s5 + $0x1d8] sm:$0xff]
  %v3127 = vld [vmem:[%s5 + $0x1e0] sm:$0xff]
  %v3128 = vld [vmem:[%s5 + $0x1e8] sm:$0xff]
  %v3129 = vld [vmem:[%s5 + $0x1f0] sm:$0xff]
  %v3130 = vld [vmem:[%s5 + $0x1f8] sm:$0xff]
  %v3131 = vld [vmem:[%s5 + $0x200] sm:$0xff]
  %v3132 = vld [vmem:[%s5 + $0x208] sm:$0xff]
  %v3133 = vld [vmem:[%s5 + $0x210] sm:$0xff]
  %v3134 = vld [vmem:[%s5 + $0x218] sm:$0xff]
  %v3135 = vld [vmem:[%s5 + $0x220] sm:$0xff]
  %v3136 = vld [vmem:[%s5 + $0x228] sm:$0xff]
  %v3137 = vld [vmem:[%s5 + $0x230] sm:$0xff]
  %v3138 = vld [vmem:[%s5 + $0x238] sm:$0xff]
  %v3139 = vld [vmem:[%s5 + $0x240] sm:$0xff]
  %v3140 = vld [vmem:[%s5 + $0x248] sm:$0xff]
  %v3141 = vld [vmem:[%s5 + $0x250] sm:$0xff]
  %v3142 = vld [vmem:[%s5 + $0x258] sm:$0xff]
  %v3143 = vld [vmem:[%s5 + $0x260] sm:$0xff]
  %v3144 = vld [vmem:[%s5 + $0x268] sm:$0xff]
  %v3145 = vld [vmem:[%s5 + $0x270] sm:$0xff]
  %v3146 = vld [vmem:[%s5 + $0x278] sm:$0xff]
  %v3147 = vld [vmem:[%s5 + $0x280] sm:$0xff]
  %v3148 = vld [vmem:[%s5 + $0x288] sm:$0xff]
  %v3149 = vld [vmem:[%s5 + $0x290] sm:$0xff]
  %v3150 = vld [vmem:[%s5 + $0x298] sm:$0xff]
  %v3151 = vld [vmem:[%s5 + $0x2a0] sm:$0xff]
  %v3152 = vld [vmem:[%s5 + $0x2a8] sm:$0xff]
  %v3153 = vld [vmem:[%s5 + $0x2b0] sm:$0xff]
  %v3154 = vld [vmem:[%s5 + $0x2b8] sm:$0xff]
  %v3155 = vld [vmem:[%s5 + $0x2c0] sm:$0xff]
  %v3156 = vld [vmem:[%s5 + $0x2c8] sm:$0xff]
  %v3157 = vld [vmem:[%s5 + $0x2d0] sm:$0xff]
  %v3158 = vld [vmem:[%s5 + $0x2d8] sm:$0xff]
  %v3159 = vld [vmem:[%s5 + $0x2e0] sm:$0xff]
  %v3160 = vld [vmem:[%s5 + $0x2e8] sm:$0xff]
  %v3161 = vld [vmem:[%s5 + $0x2f0] sm:$0xff]
  %v3162 = vld [vmem:[%s5 + $0x2f8] sm:$0xff]
  %v3163 = vld [vmem:[%s5 + $0x300] sm:$0xff]
  %v3164 = vld [vmem:[%s5 + $0x308] sm:$0xff]
  %v3165 = vld [vmem:[%s5 + $0x310] sm:$0xff]
  %v3166 = vld [vmem:[%s5 + $0x318] sm:$0x7]
  %v3167 = vld [vmem:[%s6] sm:$0x1]
  %v3169 = vlaneseq
  %v3170 = vshrl.u32 %v3169, 7
  %v3171 = vsub.s32 0, %v3170
  %v3172 = vrot.slane %v3167, %v3171
  %vm3174 = vcmask 220160
  %v3175 = vsel %vm3174, %v3058, 0
  %v3178 = vsel %vm2376, %v3166, 0
  %3180 = vmatprep.subr.mxu0 0.0
  %3181 = vmatpush1.msra.mxu0 %v3067
  %3182 = vmatprep.subr.mxu0 0.0
  %3183 = vmatpush1.msra.mxu0 %v3068
  %3184 = vmatprep.subr.mxu0 0.0
  %3185 = vmatpush1.msra.mxu0 %v3069
  %3186 = vmatprep.subr.mxu0 0.0
  %3187 = vmatpush1.msra.mxu0 %v3070
  %3188 = vmatprep.subr.mxu0 0.0
  %3189 = vmatpush1.msra.mxu0 %v3071
  %3190 = vmatprep.subr.mxu0 0.0
  %3191 = vmatpush1.msra.mxu0 %v3072
  %3192 = vmatprep.subr.mxu0 0.0
  %3193 = vmatpush1.msra.mxu0 %v3073
  %3194 = vmatprep.subr.mxu0 0.0
  %3195 = vmatpush1.msra.mxu0 %v3074
  %3196 = vmatprep.subr.mxu0 0.0
  %3197 = vmatpush1.msra.mxu0 %v3075
  %3198 = vmatprep.subr.mxu0 0.0
  %3199 = vmatpush1.msra.mxu0 %v3076
  %3200 = vmatprep.subr.mxu0 0.0
  %3201 = vmatpush1.msra.mxu0 %v3077
  %3202 = vmatprep.subr.mxu0 0.0
  %3203 = vmatpush1.msra.mxu0 %v3078
  %3204 = vmatprep.subr.mxu0 0.0
  %3205 = vmatpush1.msra.mxu0 %v3079
  %3206 = vmatprep.subr.mxu0 0.0
  %3207 = vmatpush1.msra.mxu0 %v3080
  %3208 = vmatprep.subr.mxu0 0.0
  %3209 = vmatpush1.msra.mxu0 %v3081
  %3210 = vmatprep.subr.mxu0 0.0
  %3211 = vmatpush1.msra.mxu0 %v3082
  %3212 = vmatprep.subr.mxu0 0.0
  %3213 = vmatpush1.msra.mxu0 %v3083
  %3214 = vmatprep.subr.mxu0 0.0
  %3215 = vmatpush1.msra.mxu0 %v3084
  %3216 = vmatprep.subr.mxu0 0.0
  %3217 = vmatpush1.msra.mxu0 %v3085
  %3218 = vmatprep.subr.mxu0 0.0
  %3219 = vmatpush1.msra.mxu0 %v3086
  %3220 = vmatprep.subr.mxu0 0.0
  %3221 = vmatpush1.msra.mxu0 %v3087
  %3222 = vmatprep.subr.mxu0 0.0
  %3223 = vmatpush1.msra.mxu0 %v3088
  %3224 = vmatprep.subr.mxu0 0.0
  %3225 = vmatpush1.msra.mxu0 %v3089
  %3226 = vmatprep.subr.mxu0 0.0
  %3227 = vmatpush1.msra.mxu0 %v3090
  %3228 = vmatprep.subr.mxu0 0.0
  %3229 = vmatpush1.msra.mxu0 %v3091
  %3230 = vmatprep.subr.mxu0 0.0
  %3231 = vmatpush1.msra.mxu0 %v3092
  %3232 = vmatprep.subr.mxu0 0.0
  %3233 = vmatpush1.msra.mxu0 %v3093
  %3234 = vmatprep.subr.mxu0 0.0
  %3235 = vmatpush1.msra.mxu0 %v3094
  %3236 = vmatprep.subr.mxu0 0.0
  %3237 = vmatpush1.msra.mxu0 %v3095
  %3238 = vmatprep.subr.mxu0 0.0
  %3239 = vmatpush1.msra.mxu0 %v3096
  %3240 = vmatprep.subr.mxu0 0.0
  %3241 = vmatpush1.msra.mxu0 %v3097
  %3242 = vmatprep.subr.mxu0 0.0
  %3243 = vmatpush1.msra.mxu0 %v3098
  %3244 = vmatprep.mubr.f32.mxu0 %v3063
  %3245 = vmatmul.mubr.f32.gmra.mrb[0].mxu0 %v3013
  %v3246 = vpop.f32.mrb[0].mxu0
  %v3247 = vadd.f32 %v3172, %v3246
  %v3248 = vpop.f32.mrb[0].mxu0
  %3249 = vdwg.mxu0
  %3250 = vmatprep.subr.mxu0 0.0
  %3251 = vmatpush1.msra.mxu0 %v3099
  %3252 = vmatprep.subr.mxu0 0.0
  %3253 = vmatpush1.msra.mxu0 %v3100
  %3254 = vmatprep.subr.mxu0 0.0
  %3255 = vmatpush1.msra.mxu0 %v3101
  %3256 = vmatprep.subr.mxu0 0.0
  %3257 = vmatpush1.msra.mxu0 %v3102
  %3258 = vmatprep.subr.mxu0 0.0
  %3259 = vmatpush1.msra.mxu0 %v3103
  %3260 = vmatprep.subr.mxu0 0.0
  %3261 = vmatpush1.msra.mxu0 %v3104
  %3262 = vmatprep.subr.mxu0 0.0
  %3263 = vmatpush1.msra.mxu0 %v3105
  %3264 = vmatprep.subr.mxu0 0.0
  %3265 = vmatpush1.msra.mxu0 %v3106
  %3266 = vmatprep.subr.mxu0 0.0
  %3267 = vmatpush1.msra.mxu0 %v3107
  %3268 = vmatprep.subr.mxu0 0.0
  %3269 = vmatpush1.msra.mxu0 %v3108
  %3270 = vmatprep.subr.mxu0 0.0
  %3271 = vmatpush1.msra.mxu0 %v3109
  %3272 = vmatprep.subr.mxu0 0.0
  %3273 = vmatpush1.msra.mxu0 %v3110
  %3274 = vmatprep.subr.mxu0 0.0
  %3275 = vmatpush1.msra.mxu0 %v3111
  %3276 = vmatprep.subr.mxu0 0.0
  %3277 = vmatpush1.msra.mxu0 %v3112
  %3278 = vmatprep.subr.mxu0 0.0
  %3279 = vmatpush1.msra.mxu0 %v3113
  %3280 = vmatprep.subr.mxu0 0.0
  %3281 = vmatpush1.msra.mxu0 %v3114
  %3282 = vmatprep.subr.mxu0 0.0
  %3283 = vmatpush1.msra.mxu0 %v3115
  %3284 = vmatprep.subr.mxu0 0.0
  %3285 = vmatpush1.msra.mxu0 %v3116
  %3286 = vmatprep.subr.mxu0 0.0
  %3287 = vmatpush1.msra.mxu0 %v3117
  %3288 = vmatprep.subr.mxu0 0.0
  %3289 = vmatpush1.msra.mxu0 %v3118
  %3290 = vmatprep.subr.mxu0 0.0
  %3291 = vmatpush1.msra.mxu0 %v3119
  %3292 = vmatprep.subr.mxu0 0.0
  %3293 = vmatpush1.msra.mxu0 %v3120
  %3294 = vmatprep.subr.mxu0 0.0
  %3295 = vmatpush1.msra.mxu0 %v3121
  %3296 = vmatprep.subr.mxu0 0.0
  %3297 = vmatpush1.msra.mxu0 %v3122
  %3298 = vmatprep.subr.mxu0 0.0
  %3299 = vmatpush1.msra.mxu0 %v3123
  %3300 = vmatprep.subr.mxu0 0.0
  %3301 = vmatpush1.msra.mxu0 %v3124
  %3302 = vmatprep.subr.mxu0 0.0
  %3303 = vmatpush1.msra.mxu0 %v3125
  %3304 = vmatprep.subr.mxu0 0.0
  %3305 = vmatpush1.msra.mxu0 %v3126
  %3306 = vmatprep.subr.mxu0 0.0
  %3307 = vmatpush1.msra.mxu0 %v3127
  %3308 = vmatprep.subr.mxu0 0.0
  %3309 = vmatpush1.msra.mxu0 %v3128
  %3310 = vmatprep.subr.mxu0 0.0
  %3311 = vmatpush1.msra.mxu0 %v3129
  %3312 = vmatprep.subr.mxu0 0.0
  %3313 = vmatpush1.msra.mxu0 %v3130
  %3314 = vmatprep.mubr.f32.mxu0 %v3065
  %3315 = vmatmul.mubr.f32.gmra.mrb[0].mxu0 %v3064
  %v3316 = vpop.f32.mrb[0].mxu0
  %v3317 = vadd.f32 %v3247, %v3316
  %v3318 = vpop.f32.mrb[0].mxu0
  %3319 = vdwg.mxu0
  %3320 = vmatprep.subr.mxu0 0.0
  %3321 = vmatpush1.msra.mxu0 %v3131
  %3322 = vmatprep.subr.mxu0 0.0
  %3323 = vmatpush1.msra.mxu0 %v3132
  %3324 = vmatprep.subr.mxu0 0.0
  %3325 = vmatpush1.msra.mxu0 %v3133
  %3326 = vmatprep.subr.mxu0 0.0
  %3327 = vmatpush1.msra.mxu0 %v3134
  %3328 = vmatprep.subr.mxu0 0.0
  %3329 = vmatpush1.msra.mxu0 %v3135
  %3330 = vmatprep.subr.mxu0 0.0
  %3331 = vmatpush1.msra.mxu0 %v3136
  %3332 = vmatprep.subr.mxu0 0.0
  %3333 = vmatpush1.msra.mxu0 %v3137
  %3334 = vmatprep.subr.mxu0 0.0
  %3335 = vmatpush1.msra.mxu0 %v3138
  %3336 = vmatprep.subr.mxu0 0.0
  %3337 = vmatpush1.msra.mxu0 %v3139
  %3338 = vmatprep.subr.mxu0 0.0
  %3339 = vmatpush1.msra.mxu0 %v3140
  %3340 = vmatprep.subr.mxu0 0.0
  %3341 = vmatpush1.msra.mxu0 %v3141
  %3342 = vmatprep.subr.mxu0 0.0
  %3343 = vmatpush1.msra.mxu0 %v3142
  %3344 = vmatprep.subr.mxu0 0.0
  %3345 = vmatpush1.msra.mxu0 %v3143
  %3346 = vmatprep.subr.mxu0 0.0
  %3347 = vmatpush1.msra.mxu0 %v3144
  %3348 = vmatprep.subr.mxu0 0.0
  %3349 = vmatpush1.msra.mxu0 %v3145
  %3350 = vmatprep.subr.mxu0 0.0
  %3351 = vmatpush1.msra.mxu0 %v3146
  %3352 = vmatprep.subr.mxu0 0.0
  %3353 = vmatpush1.msra.mxu0 %v3147
  %3354 = vmatprep.subr.mxu0 0.0
  %3355 = vmatpush1.msra.mxu0 %v3148
  %3356 = vmatprep.subr.mxu0 0.0
  %3357 = vmatpush1.msra.mxu0 %v3149
  %3358 = vmatprep.subr.mxu0 0.0
  %3359 = vmatpush1.msra.mxu0 %v3150
  %3360 = vmatprep.subr.mxu0 0.0
  %3361 = vmatpush1.msra.mxu0 %v3151
  %3362 = vmatprep.subr.mxu0 0.0
  %3363 = vmatpush1.msra.mxu0 %v3152
  %3364 = vmatprep.subr.mxu0 0.0
  %3365 = vmatpush1.msra.mxu0 %v3153
  %3366 = vmatprep.subr.mxu0 0.0
  %3367 = vmatpush1.msra.mxu0 %v3154
  %3368 = vmatprep.subr.mxu0 0.0
  %3369 = vmatpush1.msra.mxu0 %v3155
  %3370 = vmatprep.subr.mxu0 0.0
  %3371 = vmatpush1.msra.mxu0 %v3156
  %3372 = vmatprep.subr.mxu0 0.0
  %3373 = vmatpush1.msra.mxu0 %v3157
  %3374 = vmatprep.subr.mxu0 0.0
  %3375 = vmatpush1.msra.mxu0 %v3158
  %3376 = vmatprep.subr.mxu0 0.0
  %3377 = vmatpush1.msra.mxu0 %v3159
  %3378 = vmatprep.subr.mxu0 0.0
  %3379 = vmatpush1.msra.mxu0 %v3160
  %3380 = vmatprep.subr.mxu0 0.0
  %3381 = vmatpush1.msra.mxu0 %v3161
  %3382 = vmatprep.subr.mxu0 0.0
  %3383 = vmatpush1.msra.mxu0 %v3162
  %3384 = vmatprep.mubr.f32.mxu0 %v3060
  %3385 = vmatmul.mubr.f32.gmra.mrb[0].mxu0 %v3066
  %v3386 = vpop.f32.mrb[0].mxu0
  %v3387 = vadd.f32 %v3317, %v3386
  %v3388 = vpop.f32.mrb[0].mxu0
  %3389 = vdwg.mxu0
  %3390 = vmatprep.subr.mxu0 0.0
  %3391 = vmatpush1.msra.mxu0 %v3163
  %3392 = vmatprep.subr.mxu0 0.0
  %3393 = vmatpush1.msra.mxu0 %v3164
  %3394 = vmatprep.subr.mxu0 0.0
  %3395 = vmatpush1.msra.mxu0 %v3165
  %3396 = vmatprep.subr.mxu0 0.0
  %3397 = vmatpush1.msra.mxu0 %v3178
  %3398 = vmatprep.subr.mxu0 0.0
  %3399 = vmatpush1.msra.mxu0 0.0
  %3400 = vmatprep.subr.mxu0 0.0
  %3401 = vmatpush1.msra.mxu0 0.0
  %3402 = vmatprep.subr.mxu0 0.0
  %3403 = vmatpush1.msra.mxu0 0.0
  %3404 = vmatprep.subr.mxu0 0.0
  %3405 = vmatpush1.msra.mxu0 0.0
  %3406 = vmatprep.subr.mxu0 0.0
  %3407 = vmatpush1.msra.mxu0 0.0
  %3408 = vmatprep.subr.mxu0 0.0
  %3409 = vmatpush1.msra.mxu0 0.0
  %3410 = vmatprep.subr.mxu0 0.0
  %3411 = vmatpush1.msra.mxu0 0.0
  %3412 = vmatprep.subr.mxu0 0.0
  %3413 = vmatpush1.msra.mxu0 0.0
  %3414 = vmatprep.subr.mxu0 0.0
  %3415 = vmatpush1.msra.mxu0 0.0
  %3416 = vmatprep.subr.mxu0 0.0
  %3417 = vmatpush1.msra.mxu0 0.0
  %3418 = vmatprep.subr.mxu0 0.0
  %3419 = vmatpush1.msra.mxu0 0.0
  %3420 = vmatprep.subr.mxu0 0.0
  %3421 = vmatpush1.msra.mxu0 0.0
  %3422 = vmatprep.subr.mxu0 0.0
  %3423 = vmatpush1.msra.mxu0 0.0
  %3424 = vmatprep.subr.mxu0 0.0
  %3425 = vmatpush1.msra.mxu0 0.0
  %3426 = vmatprep.subr.mxu0 0.0
  %3427 = vmatpush1.msra.mxu0 0.0
  %3428 = vmatprep.subr.mxu0 0.0
  %3429 = vmatpush1.msra.mxu0 0.0
  %3430 = vmatprep.subr.mxu0 0.0
  %3431 = vmatpush1.msra.mxu0 0.0
  %3432 = vmatprep.subr.mxu0 0.0
  %3433 = vmatpush1.msra.mxu0 0.0
  %3434 = vmatprep.subr.mxu0 0.0
  %3435 = vmatpush1.msra.mxu0 0.0
  %3436 = vmatprep.subr.mxu0 0.0
  %3437 = vmatpush1.msra.mxu0 0.0
  %3438 = vmatprep.subr.mxu0 0.0
  %3439 = vmatpush1.msra.mxu0 0.0
  %3440 = vmatprep.subr.mxu0 0.0
  %3441 = vmatpush1.msra.mxu0 0.0
  %3442 = vmatprep.subr.mxu0 0.0
  %3443 = vmatpush1.msra.mxu0 0.0
  %3444 = vmatprep.subr.mxu0 0.0
  %3445 = vmatpush1.msra.mxu0 0.0
  %3446 = vmatprep.subr.mxu0 0.0
  %3447 = vmatpush1.msra.mxu0 0.0
  %3448 = vmatprep.subr.mxu0 0.0
  %3449 = vmatpush1.msra.mxu0 0.0
  %3450 = vmatprep.subr.mxu0 0.0
  %3451 = vmatpush1.msra.mxu0 0.0
  %3452 = vmatprep.subr.mxu0 0.0
  %3453 = vmatpush1.msra.mxu0 0.0
  %3454 = vmatprep.mubr.f32.mxu0 0.0
  %3455 = vmatmul.mubr.f32.gmra.mrb[0].mxu0 %v3175
  %v3456 = vpop.f32.mrb[0].mxu0
  %v3457 = vadd.f32 %v3387, %v3456
  %v3458 = vpop.f32.mrb[0].mxu0
  %3459 = vdwg.mxu0
  %v3460 = vmax.f32 %v3457, 0.0
  %v3461 = vld [vmem:[%s7] sm:$0xff]
  %v3462 = vld [vmem:[%s7 + $0x8] sm:$0xff]
  %v3463 = vld [vmem:[%s7 + $0x10] sm:$0xff]
  %v3464 = vld [vmem:[%s7 + $0x18] sm:$0xff]
  %v3465 = vld [vmem:[%s7 + $0x20] sm:$0xff]
  %v3466 = vld [vmem:[%s7 + $0x28] sm:$0xff]
  %v3467 = vld [vmem:[%s7 + $0x30] sm:$0xff]
  %v3468 = vld [vmem:[%s7 + $0x38] sm:$0xff]
  %v3469 = vld [vmem:[%s7 + $0x40] sm:$0xff]
  %v3470 = vld [vmem:[%s7 + $0x48] sm:$0xff]
  %v3471 = vld [vmem:[%s7 + $0x50] sm:$0xff]
  %v3472 = vld [vmem:[%s7 + $0x58] sm:$0xff]
  %v3473 = vld [vmem:[%s7 + $0x60] sm:$0xff]
  %v3474 = vld [vmem:[%s7 + $0x68] sm:$0xff]
  %v3475 = vld [vmem:[%s7 + $0x70] sm:$0xff]
  %v3476 = vld [vmem:[%s8] sm:$0x1]
  %v3478 = vlaneseq
  %v3479 = vshrl.u32 %v3478, 7
  %v3480 = vsub.s32 0, %v3479
  %v3481 = vrot.slane %v3476, %v3480
  %vm3483 = vcmask 982016
  %v3485 = vsel %vm3483, %v3460, 0
  %3487 = vmatprep.subr.mxu0 0.0
  %3488 = vmatpush1.msra.mxu0 %v3461
  %3489 = vmatprep.subr.mxu0 0.0
  %3490 = vmatpush1.msra.mxu0 %v3462
  %3491 = vmatprep.subr.mxu0 0.0
  %3492 = vmatpush1.msra.mxu0 %v3463
  %3493 = vmatprep.subr.mxu0 0.0
  %3494 = vmatpush1.msra.mxu0 %v3464
  %3495 = vmatprep.subr.mxu0 0.0
  %3496 = vmatpush1.msra.mxu0 %v3465
  %3497 = vmatprep.subr.mxu0 0.0
  %3498 = vmatpush1.msra.mxu0 %v3466
  %3499 = vmatprep.subr.mxu0 0.0
  %3500 = vmatpush1.msra.mxu0 %v3467
  %3501 = vmatprep.subr.mxu0 0.0
  %3502 = vmatpush1.msra.mxu0 %v3468
  %3503 = vmatprep.subr.mxu0 0.0
  %3504 = vmatpush1.msra.mxu0 %v3469
  %3505 = vmatprep.subr.mxu0 0.0
  %3506 = vmatpush1.msra.mxu0 %v3470
  %3507 = vmatprep.subr.mxu0 0.0
  %3508 = vmatpush1.msra.mxu0 %v3471
  %3509 = vmatprep.subr.mxu0 0.0
  %3510 = vmatpush1.msra.mxu0 %v3472
  %3511 = vmatprep.subr.mxu0 0.0
  %3512 = vmatpush1.msra.mxu0 %v3473
  %3513 = vmatprep.subr.mxu0 0.0
  %3514 = vmatpush1.msra.mxu0 %v3474
  %3515 = vmatprep.subr.mxu0 0.0
  %3516 = vmatpush1.msra.mxu0 %v3475
  %3517 = vmatprep.subr.mxu0 0.0
  %3518 = vmatpush1.msra.mxu0 0.0
  %3519 = vmatprep.subr.mxu0 0.0
  %3520 = vmatpush1.msra.mxu0 0.0
  %3521 = vmatprep.subr.mxu0 0.0
  %3522 = vmatpush1.msra.mxu0 0.0
  %3523 = vmatprep.subr.mxu0 0.0
  %3524 = vmatpush1.msra.mxu0 0.0
  %3525 = vmatprep.subr.mxu0 0.0
  %3526 = vmatpush1.msra.mxu0 0.0
  %3527 = vmatprep.subr.mxu0 0.0
  %3528 = vmatpush1.msra.mxu0 0.0
  %3529 = vmatprep.subr.mxu0 0.0
  %3530 = vmatpush1.msra.mxu0 0.0
  %3531 = vmatprep.subr.mxu0 0.0
  %3532 = vmatpush1.msra.mxu0 0.0
  %3533 = vmatprep.subr.mxu0 0.0
  %3534 = vmatpush1.msra.mxu0 0.0
  %3535 = vmatprep.subr.mxu0 0.0
  %3536 = vmatpush1.msra.mxu0 0.0
  %3537 = vmatprep.subr.mxu0 0.0
  %3538 = vmatpush1.msra.mxu0 0.0
  %3539 = vmatprep.subr.mxu0 0.0
  %3540 = vmatpush1.msra.mxu0 0.0
  %3541 = vmatprep.subr.mxu0 0.0
  %3542 = vmatpush1.msra.mxu0 0.0
  %3543 = vmatprep.subr.mxu0 0.0
  %3544 = vmatpush1.msra.mxu0 0.0
  %3545 = vmatprep.subr.mxu0 0.0
  %3546 = vmatpush1.msra.mxu0 0.0
  %3547 = vmatprep.subr.mxu0 0.0
  %3548 = vmatpush1.msra.mxu0 0.0
  %3549 = vmatprep.subr.mxu0 0.0
  %3550 = vmatpush1.msra.mxu0 0.0
  %3551 = vmatprep.mubr.f32.mxu0 0.0
  %3552 = vmatmul.mubr.f32.gmra.mrb[0].mxu0 %v3485
  %v3553 = vpop.f32.mrb[0].mxu0
  %v3554 = vadd.f32 %v3481, %v3553
  %v3555 = vpop.f32.mrb[0].mxu0
  %3556 = vdwg.mxu0
  %v3557 = vmax.f32 %v3554, 0.0
  %v3558 = vld [vmem:[%s9] sm:$0xff]
  %v3559 = vld [vmem:[%s9 + $0x8] sm:$0xff]
  %v3560 = vld [vmem:[%s9 + $0x10] sm:$0xff]
  %v3561 = vld [vmem:[%s9 + $0x18] sm:$0xff]
  %v3562 = vld [vmem:[%s9 + $0x20] sm:$0xff]
  %v3563 = vld [vmem:[%s9 + $0x28] sm:$0xff]
  %v3564 = vld [vmem:[%s9 + $0x30] sm:$0xff]
  %v3565 = vld [vmem:[%s9 + $0x38] sm:$0xff]
  %v3566 = vld [vmem:[%s9 + $0x40] sm:$0xff]
  %v3567 = vld [vmem:[%s9 + $0x48] sm:$0xff]
  %v3568 = vld [vmem:[%s9 + $0x50] sm:$0xf]
  %v3569 = vld [vmem:[%s10] sm:$0x1]
  %v3571 = vlaneseq
  %v3572 = vshrl.u32 %v3571, 7
  %v3573 = vsub.s32 0, %v3572
  %v3574 = vrot.slane %v3569, %v3573
  %vm3576 = vcmask 687104
  %v3578 = vsel %vm3576, %v3557, 0
  %vm3580 = vcmask 1043456
  %v3582 = vsel %vm3580, %v3568, 0
  %3584 = vmatprep.subr.mxu0 0.0
  %3585 = vmatpush1.msra.mxu0 %v3558
  %3586 = vmatprep.subr.mxu0 0.0
  %3587 = vmatpush1.msra.mxu0 %v3559
  %3588 = vmatprep.subr.mxu0 0.0
  %3589 = vmatpush1.msra.mxu0 %v3560
  %3590 = vmatprep.subr.mxu0 0.0
  %3591 = vmatpush1.msra.mxu0 %v3561
  %3592 = vmatprep.subr.mxu0 0.0
  %3593 = vmatpush1.msra.mxu0 %v3562
  %3594 = vmatprep.subr.mxu0 0.0
  %3595 = vmatpush1.msra.mxu0 %v3563
  %3596 = vmatprep.subr.mxu0 0.0
  %3597 = vmatpush1.msra.mxu0 %v3564
  %3598 = vmatprep.subr.mxu0 0.0
  %3599 = vmatpush1.msra.mxu0 %v3565
  %3600 = vmatprep.subr.mxu0 0.0
  %3601 = vmatpush1.msra.mxu0 %v3566
  %3602 = vmatprep.subr.mxu0 0.0
  %3603 = vmatpush1.msra.mxu0 %v3567
  %3604 = vmatprep.subr.mxu0 0.0
  %3605 = vmatpush1.msra.mxu0 %v3582
  %3606 = vmatprep.subr.mxu0 0.0
  %3607 = vmatpush1.msra.mxu0 0.0
  %3608 = vmatprep.subr.mxu0 0.0
  %3609 = vmatpush1.msra.mxu0 0.0
  %3610 = vmatprep.subr.mxu0 0.0
  %3611 = vmatpush1.msra.mxu0 0.0
  %3612 = vmatprep.subr.mxu0 0.0
  %3613 = vmatpush1.msra.mxu0 0.0
  %3614 = vmatprep.subr.mxu0 0.0
  %3615 = vmatpush1.msra.mxu0 0.0
  %3616 = vmatprep.subr.mxu0 0.0
  %3617 = vmatpush1.msra.mxu0 0.0
  %3618 = vmatprep.subr.mxu0 0.0
  %3619 = vmatpush1.msra.mxu0 0.0
  %3620 = vmatprep.subr.mxu0 0.0
  %3621 = vmatpush1.msra.mxu0 0.0
  %3622 = vmatprep.subr.mxu0 0.0
  %3623 = vmatpush1.msra.mxu0 0.0
  %3624 = vmatprep.subr.mxu0 0.0
  %3625 = vmatpush1.msra.mxu0 0.0
  %3626 = vmatprep.subr.mxu0 0.0
  %3627 = vmatpush1.msra.mxu0 0.0
  %3628 = vmatprep.subr.mxu0 0.0
  %3629 = vmatpush1.msra.mxu0 0.0
  %3630 = vmatprep.subr.mxu0 0.0
  %3631 = vmatpush1.msra.mxu0 0.0
  %3632 = vmatprep.subr.mxu0 0.0
  %3633 = vmatpush1.msra.mxu0 0.0
  %3634 = vmatprep.subr.mxu0 0.0
  %3635 = vmatpush1.msra.mxu0 0.0
  %3636 = vmatprep.subr.mxu0 0.0
  %3637 = vmatpush1.msra.mxu0 0.0
  %3638 = vmatprep.subr.mxu0 0.0
  %3639 = vmatpush1.msra.mxu0 0.0
  %3640 = vmatprep.subr.mxu0 0.0
  %3641 = vmatpush1.msra.mxu0 0.0
  %3642 = vmatprep.subr.mxu0 0.0
  %3643 = vmatpush1.msra.mxu0 0.0
  %3644 = vmatprep.subr.mxu0 0.0
  %3645 = vmatpush1.msra.mxu0 0.0
  %3646 = vmatprep.subr.mxu0 0.0
  %3647 = vmatpush1.msra.mxu0 0.0
  %3648 = vmatprep.mubr.f32.mxu0 0.0
  %3649 = vmatmul.mubr.f32.gmra.mrb[0].mxu0 %v3578
  %v3650 = vpop.f32.mrb[0].mxu0
  %v3651 = vadd.f32 %v3574, %v3650
  %v3652 = vpop.f32.mrb[0].mxu0
  %3653 = vdwg.mxu0
  %3654 = vst [vmem:[%s11] sm:$0xff] %v3651
  // Predicated region
  $region46: #{net_forward.1} parent=0 // pred_check
    _
  $region47: #{net_forward.1} parent=0 // pred_check_branch
    %3656 = sbr.rel (0) target = $region49
  $region48: #{net_forward.1} parent=0 // pred_region
    _
  $region49: #{net_forward.1} parent=0 // pred_fallthru
    _
  // Predicated region
  $region50: #{net_forward.1} parent=0 // pred_check
    _
  $region51: #{net_forward.1} parent=0 // pred_check_branch
    %3658 = sbr.rel (0) target = $region53
  $region52: #{net_forward.1} parent=0 // pred_region
    _
  $region53: #{net_forward.1} parent=0 // pred_fallthru
    _

</llo_original>
